<compile_context>
chip_gen: v7x
topology: tpu7x:2x2x1
jax: 0.10.0
libtpu: 0.0.40
codegen_flags: <defaults>
</compile_context>

<pallas_src>
import functools
import math

import jax
import jax.numpy as jnp
from jax.experimental import pallas as pl
from jax.experimental.pallas import tpu as pltpu

EPS = 1e-6  # LayerNorm eps (added to std; unbiased N-1 variance), as in the source repo


def _layernorm_kernel(x, a, b):
    """a * (x - mean) / (std_unbiased + eps) + b over last axis; f32 stats, EUP recip."""
    d = x.shape[-1]
    mean = jnp.mean(x, axis=-1, keepdims=True)
    var = jnp.sum((x - mean) ** 2, axis=-1, keepdims=True) * (1.0 / (d - 1))
    inv = pl.reciprocal(jnp.sqrt(var) + EPS, approx=True)
    return (x - mean) * inv * a + b


# ---------------------------------------------------------------------------
# Fused encoder stack kernel: grid = (batch, layer).  One batch element per
# outer step; layers iterate on the inner ("arbitrary") axis with the residual
# stream held in VMEM scratch.  Final LayerNorm applied on the last layer step.
# ---------------------------------------------------------------------------
def encoder_stack_kernel(x_ref, mask_ref,
                         wq_ref, bq_ref, wk_ref, bk_ref, wv_ref, bv_ref,
                         wo_ref, bo_ref, w1_ref, b1_ref, w2_ref, b2_ref,
                         a1_ref, g1_ref, a2_ref, g2_ref,
                         fa_ref, fb_ref,
                         out_ref,
                         x_sc, cat_sc, *, num_heads):
    layer = pl.program_id(1)
    n_layers = pl.num_programs(1)

    @pl.when(layer == 0)
    def _():
        # Residual stream enters VMEM once per batch element; carried across layers.
        x_sc[...] = x_ref[0].astype(jnp.float32)

    x = x_sc[...]                                   # (S, D) f32 residual stream
    S, D = x.shape
    dk = D // num_heads
    scale = 1.0 / math.sqrt(dk)

    # Additive mask bias, computed once (hoisted out of the head loop).
    mask_bias = jnp.where(mask_ref[0] == 0, -1e9, 0.0).astype(jnp.float32)  # (1, S)

    # ----- sublayer 1: x + SelfAttn(LayerNorm(x)) -----
    xn = _layernorm_kernel(x, a1_ref[0], g1_ref[0]).astype(jnp.bfloat16)
    q = ((jnp.dot(xn, wq_ref[0], preferred_element_type=jnp.float32) + bq_ref[0])
         * scale).astype(jnp.bfloat16)              # 1/sqrt(dk) folded into q
    k = (jnp.dot(xn, wk_ref[0], preferred_element_type=jnp.float32)
         + bk_ref[0]).astype(jnp.bfloat16)
    v = (jnp.dot(xn, wv_ref[0], preferred_element_type=jnp.float32)
         + bv_ref[0]).astype(jnp.bfloat16)

    qkt_dims = (((1,), (1,)), ((), ()))             # q @ k.T without materializing k.T
    for h in range(num_heads):                      # static loop; one score tile live at a time
        sl = slice(h * dk, (h + 1) * dk)
        s = jax.lax.dot_general(q[:, sl], k[:, sl], qkt_dims,
                                preferred_element_type=jnp.float32)     # (S, S) f32
        s = s + mask_bias
        s = s - jnp.max(s, axis=-1, keepdims=True)
        p = jnp.exp(s)
        p = p * pl.reciprocal(jnp.sum(p, axis=-1, keepdims=True), approx=True)
        oh = jnp.dot(p.astype(jnp.bfloat16), v[:, sl],
                     preferred_element_type=jnp.float32)                # (S, dk)
        cat_sc[:, sl] = oh.astype(jnp.bfloat16)     # concat heads in VMEM scratch

    # Single full-contraction output projection: (S, D) @ (D, D).
    attn = (jnp.dot(cat_sc[...], wo_ref[0], preferred_element_type=jnp.float32)
            + bo_ref[0])
    x1 = x + attn                                   # residual (dropout == identity)

    # ----- sublayer 2: x1 + FFN(LayerNorm(x1)) -----
    xn2 = _layernorm_kernel(x1, a2_ref[0], g2_ref[0]).astype(jnp.bfloat16)
    h1 = jnp.maximum(jnp.dot(xn2, w1_ref[0], preferred_element_type=jnp.float32)
                     + b1_ref[0], 0.0).astype(jnp.bfloat16)
    ff = jnp.dot(h1, w2_ref[0], preferred_element_type=jnp.float32) + b2_ref[0]
    x2 = x1 + ff

    x_sc[...] = x2                                  # carry to next layer step

    # ----- final LayerNorm of the Encode stack, fused into the last layer -----
    @pl.when(layer == n_layers - 1)
    def _():
        out_ref[0] = _layernorm_kernel(x2, fa_ref[...], fb_ref[...]).astype(out_ref.dtype)


def encode_forward(x, mask, stacked, final_a, final_b, num_heads):
    """Pallas equivalent of Encode.forward: N layers then final LayerNorm.

    `stacked[name]` has a leading layer axis of size N (weights bf16, biases /
    LayerNorm params f32).
    """
    B, S, D = x.shape
    n_layers = stacked["wq"].shape[0]
    d_ff = stacked["w1"].shape[-1]

    def per_layer(shape):  # weight block streamed over the layer grid axis
        return pl.BlockSpec((1,) + shape, lambda b, l: (l,) + (0,) * len(shape))

    def per_batch(shape):  # activation block selected by the batch grid axis
        return pl.BlockSpec((1,) + shape, lambda b, l: (b,) + (0,) * len(shape))

    def rep(shape):        # replicated (final-norm params)
        return pl.BlockSpec(shape, lambda b, l: (0,) * len(shape))

    in_specs = [
        per_batch((S, D)),                              # x
        per_batch((1, S)),                              # mask
        per_layer((D, D)), per_layer((1, D)),           # wq, bq
        per_layer((D, D)), per_layer((1, D)),           # wk, bk
        per_layer((D, D)), per_layer((1, D)),           # wv, bv
        per_layer((D, D)), per_layer((1, D)),           # wo, bo
        per_layer((D, d_ff)), per_layer((1, d_ff)),     # w1, b1
        per_layer((d_ff, D)), per_layer((1, D)),        # w2, b2
        per_layer((1, D)), per_layer((1, D)),           # ln1 scale / bias
        per_layer((1, D)), per_layer((1, D)),           # ln2 scale / bias
        rep((1, D)), rep((1, D)),                       # final norm scale / bias
    ]

    kernel = functools.partial(encoder_stack_kernel, num_heads=num_heads)
    return pl.pallas_call(
        kernel,
        out_shape=jax.ShapeDtypeStruct((B, S, D), x.dtype),
        grid=(B, n_layers),
        in_specs=in_specs,
        out_specs=pl.BlockSpec((1, S, D), lambda b, l: (b, 0, 0)),
        scratch_shapes=[pltpu.VMEM((S, D), jnp.float32),    # residual stream carry
                        pltpu.VMEM((S, D), jnp.bfloat16)],  # concatenated head outputs
        compiler_params=pltpu.CompilerParams(
            dimension_semantics=("parallel", "arbitrary"),
            vmem_limit_bytes=64 * 1024 * 1024),
    )(x, mask,
      stacked["wq"], stacked["bq"], stacked["wk"], stacked["bk"],
      stacked["wv"], stacked["bv"], stacked["wo"], stacked["bo"],
      stacked["w1"], stacked["b1"], stacked["w2"], stacked["b2"],
      stacked["ln1_a"], stacked["ln1_b"], stacked["ln2_a"], stacked["ln2_b"],
      final_a, final_b)


# ---------------------------------------------------------------------------
# Pure-JAX reference (f32 math, same bf16-rounded weight values) for sanity check.
# ---------------------------------------------------------------------------
def _layernorm_ref(x, a, b):
    d = x.shape[-1]
    mean = jnp.mean(x, axis=-1, keepdims=True)
    var = jnp.sum((x - mean) ** 2, axis=-1, keepdims=True) / (d - 1)
    return a * (x - mean) / (jnp.sqrt(var) + EPS) + b


def encode_reference(x, mask, layer_params, final_a, final_b, num_heads):
    B, S, D = x.shape
    dk = D // num_heads
    m4 = mask[:, :, None, :]  # (B,1,1,S)
    f32 = lambda t: t.astype(jnp.float32)
    for p in layer_params:
        xn = _layernorm_ref(x, p["ln1_a"], p["ln1_b"])
        q = (xn @ f32(p["wq"]) + p["bq"]).reshape(B, S, num_heads, dk)
        k = (xn @ f32(p["wk"]) + p["bk"]).reshape(B, S, num_heads, dk)
        v = (xn @ f32(p["wv"]) + p["bv"]).reshape(B, S, num_heads, dk)
        s = jnp.einsum("bqhd,bkhd->bhqk", q, k) / math.sqrt(dk)
        s = jnp.where(m4 == 0, -1e9, s)
        pa = jax.nn.softmax(s, axis=-1)
        a = jnp.einsum("bhqk,bkhd->bqhd", pa, v).reshape(B, S, D)
        x = x + (a @ f32(p["wo"]) + p["bo"])
        xn2 = _layernorm_ref(x, p["ln2_a"], p["ln2_b"])
        x = x + (jnp.maximum(xn2 @ f32(p["w1"]) + p["b1"], 0.0) @ f32(p["w2"]) + p["b2"])
    return _layernorm_ref(x, final_a, final_b)


def init_layer_params(key, D, d_ff):
    ks = jax.random.split(key, 6)
    s = 0.1
    f32, bf16 = jnp.float32, jnp.bfloat16
    w = lambda k, shp: (jax.random.normal(k, shp, f32) * s).astype(bf16)
    return dict(
        wq=w(ks[0], (D, D)), bq=jnp.zeros((1, D), f32),
        wk=w(ks[1], (D, D)), bk=jnp.zeros((1, D), f32),
        wv=w(ks[2], (D, D)), bv=jnp.zeros((1, D), f32),
        wo=w(ks[3], (D, D)), bo=jnp.zeros((1, D), f32),
        w1=w(ks[4], (D, d_ff)), b1=jnp.zeros((1, d_ff), f32),
        w2=w(ks[5], (d_ff, D)), b2=jnp.zeros((1, D), f32),
        ln1_a=jnp.ones((1, D), f32), ln1_b=jnp.zeros((1, D), f32),
        ln2_a=jnp.ones((1, D), f32), ln2_b=jnp.zeros((1, D), f32),
    )


if __name__ == "__main__":
    # Small but lane-dense shapes: D is a multiple of 128 so output stores are
    # unmasked; S >= 8 keeps sublane tiles full.
    B, S, D, H, DFF, N = 2, 16, 128, 4, 256, 2

    key = jax.random.PRNGKey(0)
    kx, *layer_keys = jax.random.split(key, N + 1)

    x = jax.random.normal(kx, (B, S, D), jnp.float32)
    mask = jnp.ones((B, 1, S), jnp.float32)
    mask = mask.at[1, 0, S - 3:].set(0.0)  # mask last three keys of batch 1

    layer_params = [init_layer_params(k, D, DFF) for k in layer_keys]
    stacked = {name: jnp.stack([p[name] for p in layer_params])
               for name in layer_params[0]}
    final_a = jnp.ones((1, D), jnp.float32)
    final_b = jnp.zeros((1, D), jnp.float32)

    out = encode_forward(x, mask, stacked, final_a, final_b, H)
    out = jax.block_until_ready(out)

    ref = encode_reference(x, mask, layer_params, final_a, final_b, H)
    assert out.shape == (B, S, D)
    assert jnp.all(jnp.isfinite(out))
    assert jnp.allclose(out, ref, atol=5e-2, rtol=5e-2), "Pallas output mismatch vs reference"

    print("KERNEL_OK")
</pallas_src>

<mosaic_0001>
module attributes {stable_mosaic.version = 11 : i64} {
  func.func @encoder_stack_kernel(%arg0: i32, %arg1: i32, %arg2: memref<1x16x128xf32, #tpu.memory_space<vmem>>, %arg3: memref<1x1x16xf32, #tpu.memory_space<vmem>>, %arg4: memref<1x128x128xbf16, #tpu.memory_space<vmem>>, %arg5: memref<1x1x128xf32, #tpu.memory_space<vmem>>, %arg6: memref<1x128x128xbf16, #tpu.memory_space<vmem>>, %arg7: memref<1x1x128xf32, #tpu.memory_space<vmem>>, %arg8: memref<1x128x128xbf16, #tpu.memory_space<vmem>>, %arg9: memref<1x1x128xf32, #tpu.memory_space<vmem>>, %arg10: memref<1x128x128xbf16, #tpu.memory_space<vmem>>, %arg11: memref<1x1x128xf32, #tpu.memory_space<vmem>>, %arg12: memref<1x128x256xbf16, #tpu.memory_space<vmem>>, %arg13: memref<1x1x256xf32, #tpu.memory_space<vmem>>, %arg14: memref<1x256x128xbf16, #tpu.memory_space<vmem>>, %arg15: memref<1x1x128xf32, #tpu.memory_space<vmem>>, %arg16: memref<1x1x128xf32, #tpu.memory_space<vmem>>, %arg17: memref<1x1x128xf32, #tpu.memory_space<vmem>>, %arg18: memref<1x1x128xf32, #tpu.memory_space<vmem>>, %arg19: memref<1x1x128xf32, #tpu.memory_space<vmem>>, %arg20: memref<1x128xf32, #tpu.memory_space<vmem>>, %arg21: memref<1x128xf32, #tpu.memory_space<vmem>>, %arg22: memref<1x16x128xf32, #tpu.memory_space<vmem>>, %arg23: memref<16x128xf32, #tpu.memory_space<vmem>>, %arg24: memref<16x128xbf16, #tpu.memory_space<vmem>>) attributes {dimension_semantics = [#tpu.dimension_semantics<parallel>, #tpu.dimension_semantics<arbitrary>], iteration_bounds = array<i64: 2, 2>, scalar_prefetch = 0 : i64, scratch_operands = 2 : i64, tpu.core_type = #tpu.core_type<tc>, window_params = [{transform_indices = @transform_0, window_bounds = array<i64: 1, 16, 128>}, {transform_indices = @transform_1, window_bounds = array<i64: 1, 1, 16>}, {transform_indices = @transform_2, window_bounds = array<i64: 1, 128, 128>}, {transform_indices = @transform_3, window_bounds = array<i64: 1, 1, 128>}, {transform_indices = @transform_4, window_bounds = array<i64: 1, 128, 128>}, {transform_indices = @transform_5, window_bounds = array<i64: 1, 1, 128>}, {transform_indices = @transform_6, window_bounds = array<i64: 1, 128, 128>}, {transform_indices = @transform_7, window_bounds = array<i64: 1, 1, 128>}, {transform_indices = @transform_8, window_bounds = array<i64: 1, 128, 128>}, {transform_indices = @transform_9, window_bounds = array<i64: 1, 1, 128>}, {transform_indices = @transform_10, window_bounds = array<i64: 1, 128, 256>}, {transform_indices = @transform_11, window_bounds = array<i64: 1, 1, 256>}, {transform_indices = @transform_12, window_bounds = array<i64: 1, 256, 128>}, {transform_indices = @transform_13, window_bounds = array<i64: 1, 1, 128>}, {transform_indices = @transform_14, window_bounds = array<i64: 1, 1, 128>}, {transform_indices = @transform_15, window_bounds = array<i64: 1, 1, 128>}, {transform_indices = @transform_16, window_bounds = array<i64: 1, 1, 128>}, {transform_indices = @transform_17, window_bounds = array<i64: 1, 1, 128>}, {pipeline_mode = #tpu.pipeline_mode<synchronous>, transform_indices = @transform_18, window_bounds = array<i64: 1, 128>}, {pipeline_mode = #tpu.pipeline_mode<synchronous>, transform_indices = @transform_19, window_bounds = array<i64: 1, 128>}, {transform_indices = @transform_20, window_bounds = array<i64: 1, 16, 128>}]} {
    %c0_i32 = arith.constant 0 : i32
    %0 = arith.cmpi eq, %arg1, %c0_i32 : i32
    %1 = arith.extui %0 : i1 to i32
    %c0_i32_0 = arith.constant 0 : i32
    %2 = arith.cmpi ne, %1, %c0_i32_0 : i32
    scf.if %2 {
      %c0_99 = arith.constant 0 : index
      %c0_100 = arith.constant 0 : index
      %c0_101 = arith.constant 0 : index
      %204 = vector.load %arg2[%c0_99, %c0_100, %c0_101] : memref<1x16x128xf32, #tpu.memory_space<vmem>>, vector<1x16x128xf32>
      %205 = vector.shape_cast %204 : vector<1x16x128xf32> to vector<16x128xf32>
      %c0_102 = arith.constant 0 : index
      %c0_103 = arith.constant 0 : index
      %206 = vector.load %arg23[%c0_102, %c0_103] : memref<16x128xf32, #tpu.memory_space<vmem>>, vector<16x128xf32>
      tpu.vector_store %arg23[%c0_102, %c0_103], %205 {strides = array<i32>} : memref<16x128xf32, #tpu.memory_space<vmem>>, vector<16x128xf32>,
    } else {
    }
    %c0 = arith.constant 0 : index
    %c0_1 = arith.constant 0 : index
    %3 = vector.load %arg23[%c0, %c0_1] : memref<16x128xf32, #tpu.memory_space<vmem>>, vector<16x128xf32>
    %c0_2 = arith.constant 0 : index
    %c0_3 = arith.constant 0 : index
    %c0_4 = arith.constant 0 : index
    %4 = vector.load %arg3[%c0_2, %c0_3, %c0_4] : memref<1x1x16xf32, #tpu.memory_space<vmem>>, vector<1x1x16xf32>
    %5 = vector.shape_cast %4 : vector<1x1x16xf32> to vector<1x16xf32>
    %cst = arith.constant 0.000000e+00 : f32
    %6 = vector.broadcast %cst : f32 to vector<1x16xf32>
    %7 = arith.cmpf oeq, %5, %6 : vector<1x16xf32>
    %cst_5 = arith.constant -1.000000e+09 : f32
    %cst_6 = arith.constant 0.000000e+00 : f32
    %8 = vector.broadcast %cst_5 : f32 to vector<1x16xf32>
    %9 = vector.broadcast %cst_6 : f32 to vector<1x16xf32>
    %10 = arith.select %7, %8, %9 : vector<1x16xi1>, vector<1x16xf32>
    %c0_7 = arith.constant 0 : index
    %c0_8 = arith.constant 0 : index
    %c0_9 = arith.constant 0 : index
    %11 = vector.load %arg16[%c0_7, %c0_8, %c0_9] : memref<1x1x128xf32, #tpu.memory_space<vmem>>, vector<1x1x128xf32>
    %12 = vector.shape_cast %11 : vector<1x1x128xf32> to vector<1x128xf32>
    %c0_10 = arith.constant 0 : index
    %c0_11 = arith.constant 0 : index
    %c0_12 = arith.constant 0 : index
    %13 = vector.load %arg17[%c0_10, %c0_11, %c0_12] : memref<1x1x128xf32, #tpu.memory_space<vmem>>, vector<1x1x128xf32>
    %14 = vector.shape_cast %13 : vector<1x1x128xf32> to vector<1x128xf32>
    %cst_13 = arith.constant dense<0.000000e+00> : vector<16xf32>
    %15 = vector.multi_reduction <add>, %3, %cst_13 [1] : vector<16x128xf32> to vector<16xf32>
    %16 = vector.shape_cast %15 : vector<16xf32> to vector<16x1xf32>
    %cst_14 = arith.constant 1.280000e+02 : f32
    %17 = vector.broadcast %cst_14 : f32 to vector<16x1xf32>
    %18 = arith.divf %16, %17 : vector<16x1xf32>
    %19 = vector.broadcast %18 : vector<16x1xf32> to vector<16x128xf32>
    %20 = arith.subf %3, %19 : vector<16x128xf32>
    %21 = arith.mulf %20, %20 : vector<16x128xf32>
    %cst_15 = arith.constant dense<0.000000e+00> : vector<16xf32>
    %22 = vector.multi_reduction <add>, %21, %cst_15 [1] : vector<16x128xf32> to vector<16xf32>
    %23 = vector.shape_cast %22 : vector<16xf32> to vector<16x1xf32>
    %cst_16 = arith.constant 0.00787401571 : f32
    %24 = vector.broadcast %cst_16 : f32 to vector<16x1xf32>
    %25 = arith.mulf %23, %24 : vector<16x1xf32>
    %26 = math.sqrt %25 : vector<16x1xf32>
    %cst_17 = arith.constant 9.99999997E-7 : f32
    %27 = vector.broadcast %cst_17 : f32 to vector<16x1xf32>
    %28 = arith.addf %26, %27 : vector<16x1xf32>
    %29 = tpu.reciprocal %28 {approx = true} : vector<16x1xf32> -> vector<16x1xf32>
    %30 = vector.broadcast %18 : vector<16x1xf32> to vector<16x128xf32>
    %31 = arith.subf %3, %30 : vector<16x128xf32>
    %32 = vector.broadcast %29 : vector<16x1xf32> to vector<16x128xf32>
    %33 = arith.mulf %31, %32 : vector<16x128xf32>
    %34 = vector.broadcast %12 : vector<1x128xf32> to vector<16x128xf32>
    %35 = arith.mulf %33, %34 : vector<16x128xf32>
    %36 = vector.broadcast %14 : vector<1x128xf32> to vector<16x128xf32>
    %37 = arith.addf %35, %36 : vector<16x128xf32>
    %38 = arith.truncf %37 : vector<16x128xf32> to vector<16x128xbf16>
    %c0_18 = arith.constant 0 : index
    %c0_19 = arith.constant 0 : index
    %c0_20 = arith.constant 0 : index
    %39 = vector.load %arg4[%c0_18, %c0_19, %c0_20] : memref<1x128x128xbf16, #tpu.memory_space<vmem>>, vector<1x128x128xbf16>
    %40 = vector.shape_cast %39 : vector<1x128x128xbf16> to vector<128x128xbf16>
    %cst_21 = arith.constant dense<0.000000e+00> : vector<16x128xf32>
    %41 = tpu.matmul %38, %40, %cst_21 {dimension_numbers = #tpu.dot_dimension_numbers<[1], [0], [0], [1], [0, 0, 1, 1], [], []>} : vector<16x128xbf16>, vector<128x128xbf16>, vector<16x128xf32> -> vector<16x128xf32>
    %c0_22 = arith.constant 0 : index
    %c0_23 = arith.constant 0 : index
    %c0_24 = arith.constant 0 : index
    %42 = vector.load %arg5[%c0_22, %c0_23, %c0_24] : memref<1x1x128xf32, #tpu.memory_space<vmem>>, vector<1x1x128xf32>
    %43 = vector.shape_cast %42 : vector<1x1x128xf32> to vector<1x128xf32>
    %44 = vector.broadcast %43 : vector<1x128xf32> to vector<16x128xf32>
    %45 = arith.addf %41, %44 : vector<16x128xf32>
    %cst_25 = arith.constant 0.176776692 : f32
    %46 = vector.broadcast %cst_25 : f32 to vector<16x128xf32>
    %47 = arith.mulf %45, %46 : vector<16x128xf32>
    %48 = arith.truncf %47 : vector<16x128xf32> to vector<16x128xbf16>
    %c0_26 = arith.constant 0 : index
    %c0_27 = arith.constant 0 : index
    %c0_28 = arith.constant 0 : index
    %49 = vector.load %arg6[%c0_26, %c0_27, %c0_28] : memref<1x128x128xbf16, #tpu.memory_space<vmem>>, vector<1x128x128xbf16>
    %50 = vector.shape_cast %49 : vector<1x128x128xbf16> to vector<128x128xbf16>
    %cst_29 = arith.constant dense<0.000000e+00> : vector<16x128xf32>
    %51 = tpu.matmul %38, %50, %cst_29 {dimension_numbers = #tpu.dot_dimension_numbers<[1], [0], [0], [1], [0, 0, 1, 1], [], []>} : vector<16x128xbf16>, vector<128x128xbf16>, vector<16x128xf32> -> vector<16x128xf32>
    %c0_30 = arith.constant 0 : index
    %c0_31 = arith.constant 0 : index
    %c0_32 = arith.constant 0 : index
    %52 = vector.load %arg7[%c0_30, %c0_31, %c0_32] : memref<1x1x128xf32, #tpu.memory_space<vmem>>, vector<1x1x128xf32>
    %53 = vector.shape_cast %52 : vector<1x1x128xf32> to vector<1x128xf32>
    %54 = vector.broadcast %53 : vector<1x128xf32> to vector<16x128xf32>
    %55 = arith.addf %51, %54 : vector<16x128xf32>
    %56 = arith.truncf %55 : vector<16x128xf32> to vector<16x128xbf16>
    %c0_33 = arith.constant 0 : index
    %c0_34 = arith.constant 0 : index
    %c0_35 = arith.constant 0 : index
    %57 = vector.load %arg8[%c0_33, %c0_34, %c0_35] : memref<1x128x128xbf16, #tpu.memory_space<vmem>>, vector<1x128x128xbf16>
    %58 = vector.shape_cast %57 : vector<1x128x128xbf16> to vector<128x128xbf16>
    %cst_36 = arith.constant dense<0.000000e+00> : vector<16x128xf32>
    %59 = tpu.matmul %38, %58, %cst_36 {dimension_numbers = #tpu.dot_dimension_numbers<[1], [0], [0], [1], [0, 0, 1, 1], [], []>} : vector<16x128xbf16>, vector<128x128xbf16>, vector<16x128xf32> -> vector<16x128xf32>
    %c0_37 = arith.constant 0 : index
    %c0_38 = arith.constant 0 : index
    %c0_39 = arith.constant 0 : index
    %60 = vector.load %arg9[%c0_37, %c0_38, %c0_39] : memref<1x1x128xf32, #tpu.memory_space<vmem>>, vector<1x1x128xf32>
    %61 = vector.shape_cast %60 : vector<1x1x128xf32> to vector<1x128xf32>
    %62 = vector.broadcast %61 : vector<1x128xf32> to vector<16x128xf32>
    %63 = arith.addf %59, %62 : vector<16x128xf32>
    %64 = arith.truncf %63 : vector<16x128xf32> to vector<16x128xbf16>
    %65 = vector.extract_strided_slice %48 {offsets = [0, 0], sizes = [16, 32], strides = [1, 1]} : vector<16x128xbf16> to vector<16x32xbf16>
    %66 = vector.extract_strided_slice %56 {offsets = [0, 0], sizes = [16, 32], strides = [1, 1]} : vector<16x128xbf16> to vector<16x32xbf16>
    %cst_40 = arith.constant dense<0.000000e+00> : vector<16x16xf32>
    %67 = tpu.matmul %65, %66, %cst_40 {dimension_numbers = #tpu.dot_dimension_numbers<[1], [1], [0], [0], [0, 0, 1, 0], [], []>} : vector<16x32xbf16>, vector<16x32xbf16>, vector<16x16xf32> -> vector<16x16xf32>
    %68 = vector.broadcast %10 : vector<1x16xf32> to vector<16x16xf32>
    %69 = arith.addf %67, %68 : vector<16x16xf32>
    %cst_41 = arith.constant dense<0xFF800000> : vector<16xf32>
    %70 = vector.multi_reduction <maximumf>, %69, %cst_41 [1] : vector<16x16xf32> to vector<16xf32>
    %71 = vector.shape_cast %70 : vector<16xf32> to vector<16x1xf32>
    %72 = vector.broadcast %71 : vector<16x1xf32> to vector<16x16xf32>
    %73 = arith.subf %69, %72 : vector<16x16xf32>
    %74 = math.exp %73 : vector<16x16xf32>
    %cst_42 = arith.constant dense<0.000000e+00> : vector<16xf32>
    %75 = vector.multi_reduction <add>, %74, %cst_42 [1] : vector<16x16xf32> to vector<16xf32>
    %76 = vector.shape_cast %75 : vector<16xf32> to vector<16x1xf32>
    %77 = tpu.reciprocal %76 {approx = true} : vector<16x1xf32> -> vector<16x1xf32>
    %78 = vector.broadcast %77 : vector<16x1xf32> to vector<16x16xf32>
    %79 = arith.mulf %74, %78 : vector<16x16xf32>
    %80 = arith.truncf %79 : vector<16x16xf32> to vector<16x16xbf16>
    %81 = vector.extract_strided_slice %64 {offsets = [0, 0], sizes = [16, 32], strides = [1, 1]} : vector<16x128xbf16> to vector<16x32xbf16>
    %cst_43 = arith.constant dense<0.000000e+00> : vector<16x32xf32>
    %82 = tpu.matmul %80, %81, %cst_43 {dimension_numbers = #tpu.dot_dimension_numbers<[1], [0], [0], [1], [0, 0, 1, 1], [], []>} : vector<16x16xbf16>, vector<16x32xbf16>, vector<16x32xf32> -> vector<16x32xf32>
    %83 = arith.truncf %82 : vector<16x32xf32> to vector<16x32xbf16>
    %c0_44 = arith.constant 0 : index
    %c0_45 = arith.constant 0 : index
    %84 = vector.load %arg24[%c0_44, %c0_45] : memref<16x128xbf16, #tpu.memory_space<vmem>>, vector<16x32xbf16>
    tpu.vector_store %arg24[%c0_44, %c0_45], %83 {strides = array<i32>} : memref<16x128xbf16, #tpu.memory_space<vmem>>, vector<16x32xbf16>,
    %85 = vector.extract_strided_slice %48 {offsets = [0, 32], sizes = [16, 32], strides = [1, 1]} : vector<16x128xbf16> to vector<16x32xbf16>
    %86 = vector.extract_strided_slice %56 {offsets = [0, 32], sizes = [16, 32], strides = [1, 1]} : vector<16x128xbf16> to vector<16x32xbf16>
    %cst_46 = arith.constant dense<0.000000e+00> : vector<16x16xf32>
    %87 = tpu.matmul %85, %86, %cst_46 {dimension_numbers = #tpu.dot_dimension_numbers<[1], [1], [0], [0], [0, 0, 1, 0], [], []>} : vector<16x32xbf16>, vector<16x32xbf16>, vector<16x16xf32> -> vector<16x16xf32>
    %88 = vector.broadcast %10 : vector<1x16xf32> to vector<16x16xf32>
    %89 = arith.addf %87, %88 : vector<16x16xf32>
    %cst_47 = arith.constant dense<0xFF800000> : vector<16xf32>
    %90 = vector.multi_reduction <maximumf>, %89, %cst_47 [1] : vector<16x16xf32> to vector<16xf32>
    %91 = vector.shape_cast %90 : vector<16xf32> to vector<16x1xf32>
    %92 = vector.broadcast %91 : vector<16x1xf32> to vector<16x16xf32>
    %93 = arith.subf %89, %92 : vector<16x16xf32>
    %94 = math.exp %93 : vector<16x16xf32>
    %cst_48 = arith.constant dense<0.000000e+00> : vector<16xf32>
    %95 = vector.multi_reduction <add>, %94, %cst_48 [1] : vector<16x16xf32> to vector<16xf32>
    %96 = vector.shape_cast %95 : vector<16xf32> to vector<16x1xf32>
    %97 = tpu.reciprocal %96 {approx = true} : vector<16x1xf32> -> vector<16x1xf32>
    %98 = vector.broadcast %97 : vector<16x1xf32> to vector<16x16xf32>
    %99 = arith.mulf %94, %98 : vector<16x16xf32>
    %100 = arith.truncf %99 : vector<16x16xf32> to vector<16x16xbf16>
    %101 = vector.extract_strided_slice %64 {offsets = [0, 32], sizes = [16, 32], strides = [1, 1]} : vector<16x128xbf16> to vector<16x32xbf16>
    %cst_49 = arith.constant dense<0.000000e+00> : vector<16x32xf32>
    %102 = tpu.matmul %100, %101, %cst_49 {dimension_numbers = #tpu.dot_dimension_numbers<[1], [0], [0], [1], [0, 0, 1, 1], [], []>} : vector<16x16xbf16>, vector<16x32xbf16>, vector<16x32xf32> -> vector<16x32xf32>
    %103 = arith.truncf %102 : vector<16x32xf32> to vector<16x32xbf16>
    %c0_50 = arith.constant 0 : index
    %c32 = arith.constant 32 : index
    %104 = vector.load %arg24[%c0_50, %c32] : memref<16x128xbf16, #tpu.memory_space<vmem>>, vector<16x32xbf16>
    tpu.vector_store %arg24[%c0_50, %c32], %103 {strides = array<i32>} : memref<16x128xbf16, #tpu.memory_space<vmem>>, vector<16x32xbf16>,
    %105 = vector.extract_strided_slice %48 {offsets = [0, 64], sizes = [16, 32], strides = [1, 1]} : vector<16x128xbf16> to vector<16x32xbf16>
    %106 = vector.extract_strided_slice %56 {offsets = [0, 64], sizes = [16, 32], strides = [1, 1]} : vector<16x128xbf16> to vector<16x32xbf16>
    %cst_51 = arith.constant dense<0.000000e+00> : vector<16x16xf32>
    %107 = tpu.matmul %105, %106, %cst_51 {dimension_numbers = #tpu.dot_dimension_numbers<[1], [1], [0], [0], [0, 0, 1, 0], [], []>} : vector<16x32xbf16>, vector<16x32xbf16>, vector<16x16xf32> -> vector<16x16xf32>
    %108 = vector.broadcast %10 : vector<1x16xf32> to vector<16x16xf32>
    %109 = arith.addf %107, %108 : vector<16x16xf32>
    %cst_52 = arith.constant dense<0xFF800000> : vector<16xf32>
    %110 = vector.multi_reduction <maximumf>, %109, %cst_52 [1] : vector<16x16xf32> to vector<16xf32>
    %111 = vector.shape_cast %110 : vector<16xf32> to vector<16x1xf32>
    %112 = vector.broadcast %111 : vector<16x1xf32> to vector<16x16xf32>
    %113 = arith.subf %109, %112 : vector<16x16xf32>
    %114 = math.exp %113 : vector<16x16xf32>
    %cst_53 = arith.constant dense<0.000000e+00> : vector<16xf32>
    %115 = vector.multi_reduction <add>, %114, %cst_53 [1] : vector<16x16xf32> to vector<16xf32>
    %116 = vector.shape_cast %115 : vector<16xf32> to vector<16x1xf32>
    %117 = tpu.reciprocal %116 {approx = true} : vector<16x1xf32> -> vector<16x1xf32>
    %118 = vector.broadcast %117 : vector<16x1xf32> to vector<16x16xf32>
    %119 = arith.mulf %114, %118 : vector<16x16xf32>
    %120 = arith.truncf %119 : vector<16x16xf32> to vector<16x16xbf16>
    %121 = vector.extract_strided_slice %64 {offsets = [0, 64], sizes = [16, 32], strides = [1, 1]} : vector<16x128xbf16> to vector<16x32xbf16>
    %cst_54 = arith.constant dense<0.000000e+00> : vector<16x32xf32>
    %122 = tpu.matmul %120, %121, %cst_54 {dimension_numbers = #tpu.dot_dimension_numbers<[1], [0], [0], [1], [0, 0, 1, 1], [], []>} : vector<16x16xbf16>, vector<16x32xbf16>, vector<16x32xf32> -> vector<16x32xf32>
    %123 = arith.truncf %122 : vector<16x32xf32> to vector<16x32xbf16>
    %c0_55 = arith.constant 0 : index
    %c64 = arith.constant 64 : index
    %124 = vector.load %arg24[%c0_55, %c64] : memref<16x128xbf16, #tpu.memory_space<vmem>>, vector<16x32xbf16>
    tpu.vector_store %arg24[%c0_55, %c64], %123 {strides = array<i32>} : memref<16x128xbf16, #tpu.memory_space<vmem>>, vector<16x32xbf16>,
    %125 = vector.extract_strided_slice %48 {offsets = [0, 96], sizes = [16, 32], strides = [1, 1]} : vector<16x128xbf16> to vector<16x32xbf16>
    %126 = vector.extract_strided_slice %56 {offsets = [0, 96], sizes = [16, 32], strides = [1, 1]} : vector<16x128xbf16> to vector<16x32xbf16>
    %cst_56 = arith.constant dense<0.000000e+00> : vector<16x16xf32>
    %127 = tpu.matmul %125, %126, %cst_56 {dimension_numbers = #tpu.dot_dimension_numbers<[1], [1], [0], [0], [0, 0, 1, 0], [], []>} : vector<16x32xbf16>, vector<16x32xbf16>, vector<16x16xf32> -> vector<16x16xf32>
    %128 = vector.broadcast %10 : vector<1x16xf32> to vector<16x16xf32>
    %129 = arith.addf %127, %128 : vector<16x16xf32>
    %cst_57 = arith.constant dense<0xFF800000> : vector<16xf32>
    %130 = vector.multi_reduction <maximumf>, %129, %cst_57 [1] : vector<16x16xf32> to vector<16xf32>
    %131 = vector.shape_cast %130 : vector<16xf32> to vector<16x1xf32>
    %132 = vector.broadcast %131 : vector<16x1xf32> to vector<16x16xf32>
    %133 = arith.subf %129, %132 : vector<16x16xf32>
    %134 = math.exp %133 : vector<16x16xf32>
    %cst_58 = arith.constant dense<0.000000e+00> : vector<16xf32>
    %135 = vector.multi_reduction <add>, %134, %cst_58 [1] : vector<16x16xf32> to vector<16xf32>
    %136 = vector.shape_cast %135 : vector<16xf32> to vector<16x1xf32>
    %137 = tpu.reciprocal %136 {approx = true} : vector<16x1xf32> -> vector<16x1xf32>
    %138 = vector.broadcast %137 : vector<16x1xf32> to vector<16x16xf32>
    %139 = arith.mulf %134, %138 : vector<16x16xf32>
    %140 = arith.truncf %139 : vector<16x16xf32> to vector<16x16xbf16>
    %141 = vector.extract_strided_slice %64 {offsets = [0, 96], sizes = [16, 32], strides = [1, 1]} : vector<16x128xbf16> to vector<16x32xbf16>
    %cst_59 = arith.constant dense<0.000000e+00> : vector<16x32xf32>
    %142 = tpu.matmul %140, %141, %cst_59 {dimension_numbers = #tpu.dot_dimension_numbers<[1], [0], [0], [1], [0, 0, 1, 1], [], []>} : vector<16x16xbf16>, vector<16x32xbf16>, vector<16x32xf32> -> vector<16x32xf32>
    %143 = arith.truncf %142 : vector<16x32xf32> to vector<16x32xbf16>
    %c0_60 = arith.constant 0 : index
    %c96 = arith.constant 96 : index
    %144 = vector.load %arg24[%c0_60, %c96] : memref<16x128xbf16, #tpu.memory_space<vmem>>, vector<16x32xbf16>
    tpu.vector_store %arg24[%c0_60, %c96], %143 {strides = array<i32>} : memref<16x128xbf16, #tpu.memory_space<vmem>>, vector<16x32xbf16>,
    %c0_61 = arith.constant 0 : index
    %c0_62 = arith.constant 0 : index
    %145 = vector.load %arg24[%c0_61, %c0_62] : memref<16x128xbf16, #tpu.memory_space<vmem>>, vector<16x128xbf16>
    %c0_63 = arith.constant 0 : index
    %c0_64 = arith.constant 0 : index
    %c0_65 = arith.constant 0 : index
    %146 = vector.load %arg10[%c0_63, %c0_64, %c0_65] : memref<1x128x128xbf16, #tpu.memory_space<vmem>>, vector<1x128x128xbf16>
    %147 = vector.shape_cast %146 : vector<1x128x128xbf16> to vector<128x128xbf16>
    %cst_66 = arith.constant dense<0.000000e+00> : vector<16x128xf32>
    %148 = tpu.matmul %145, %147, %cst_66 {dimension_numbers = #tpu.dot_dimension_numbers<[1], [0], [0], [1], [0, 0, 1, 1], [], []>} : vector<16x128xbf16>, vector<128x128xbf16>, vector<16x128xf32> -> vector<16x128xf32>
    %c0_67 = arith.constant 0 : index
    %c0_68 = arith.constant 0 : index
    %c0_69 = arith.constant 0 : index
    %149 = vector.load %arg11[%c0_67, %c0_68, %c0_69] : memref<1x1x128xf32, #tpu.memory_space<vmem>>, vector<1x1x128xf32>
    %150 = vector.shape_cast %149 : vector<1x1x128xf32> to vector<1x128xf32>
    %151 = vector.broadcast %150 : vector<1x128xf32> to vector<16x128xf32>
    %152 = arith.addf %148, %151 : vector<16x128xf32>
    %153 = arith.addf %3, %152 : vector<16x128xf32>
    %c0_70 = arith.constant 0 : index
    %c0_71 = arith.constant 0 : index
    %c0_72 = arith.constant 0 : index
    %154 = vector.load %arg18[%c0_70, %c0_71, %c0_72] : memref<1x1x128xf32, #tpu.memory_space<vmem>>, vector<1x1x128xf32>
    %155 = vector.shape_cast %154 : vector<1x1x128xf32> to vector<1x128xf32>
    %c0_73 = arith.constant 0 : index
    %c0_74 = arith.constant 0 : index
    %c0_75 = arith.constant 0 : index
    %156 = vector.load %arg19[%c0_73, %c0_74, %c0_75] : memref<1x1x128xf32, #tpu.memory_space<vmem>>, vector<1x1x128xf32>
    %157 = vector.shape_cast %156 : vector<1x1x128xf32> to vector<1x128xf32>
    %cst_76 = arith.constant dense<0.000000e+00> : vector<16xf32>
    %158 = vector.multi_reduction <add>, %153, %cst_76 [1] : vector<16x128xf32> to vector<16xf32>
    %159 = vector.shape_cast %158 : vector<16xf32> to vector<16x1xf32>
    %cst_77 = arith.constant 1.280000e+02 : f32
    %160 = vector.broadcast %cst_77 : f32 to vector<16x1xf32>
    %161 = arith.divf %159, %160 : vector<16x1xf32>
    %162 = vector.broadcast %161 : vector<16x1xf32> to vector<16x128xf32>
    %163 = arith.subf %153, %162 : vector<16x128xf32>
    %164 = arith.mulf %163, %163 : vector<16x128xf32>
    %cst_78 = arith.constant dense<0.000000e+00> : vector<16xf32>
    %165 = vector.multi_reduction <add>, %164, %cst_78 [1] : vector<16x128xf32> to vector<16xf32>
    %166 = vector.shape_cast %165 : vector<16xf32> to vector<16x1xf32>
    %cst_79 = arith.constant 0.00787401571 : f32
    %167 = vector.broadcast %cst_79 : f32 to vector<16x1xf32>
    %168 = arith.mulf %166, %167 : vector<16x1xf32>
    %169 = math.sqrt %168 : vector<16x1xf32>
    %cst_80 = arith.constant 9.99999997E-7 : f32
    %170 = vector.broadcast %cst_80 : f32 to vector<16x1xf32>
    %171 = arith.addf %169, %170 : vector<16x1xf32>
    %172 = tpu.reciprocal %171 {approx = true} : vector<16x1xf32> -> vector<16x1xf32>
    %173 = vector.broadcast %161 : vector<16x1xf32> to vector<16x128xf32>
    %174 = arith.subf %153, %173 : vector<16x128xf32>
    %175 = vector.broadcast %172 : vector<16x1xf32> to vector<16x128xf32>
    %176 = arith.mulf %174, %175 : vector<16x128xf32>
    %177 = vector.broadcast %155 : vector<1x128xf32> to vector<16x128xf32>
    %178 = arith.mulf %176, %177 : vector<16x128xf32>
    %179 = vector.broadcast %157 : vector<1x128xf32> to vector<16x128xf32>
    %180 = arith.addf %178, %179 : vector<16x128xf32>
    %181 = arith.truncf %180 : vector<16x128xf32> to vector<16x128xbf16>
    %c0_81 = arith.constant 0 : index
    %c0_82 = arith.constant 0 : index
    %c0_83 = arith.constant 0 : index
    %182 = vector.load %arg12[%c0_81, %c0_82, %c0_83] : memref<1x128x256xbf16, #tpu.memory_space<vmem>>, vector<1x128x256xbf16>
    %183 = vector.shape_cast %182 : vector<1x128x256xbf16> to vector<128x256xbf16>
    %cst_84 = arith.constant dense<0.000000e+00> : vector<16x256xf32>
    %184 = tpu.matmul %181, %183, %cst_84 {dimension_numbers = #tpu.dot_dimension_numbers<[1], [0], [0], [1], [0, 0, 1, 1], [], []>} : vector<16x128xbf16>, vector<128x256xbf16>, vector<16x256xf32> -> vector<16x256xf32>
    %c0_85 = arith.constant 0 : index
    %c0_86 = arith.constant 0 : index
    %c0_87 = arith.constant 0 : index
    %185 = vector.load %arg13[%c0_85, %c0_86, %c0_87] : memref<1x1x256xf32, #tpu.memory_space<vmem>>, vector<1x1x256xf32>
    %186 = vector.shape_cast %185 : vector<1x1x256xf32> to vector<1x256xf32>
    %187 = vector.broadcast %186 : vector<1x256xf32> to vector<16x256xf32>
    %188 = arith.addf %184, %187 : vector<16x256xf32>
    %cst_88 = arith.constant 0.000000e+00 : f32
    %189 = vector.broadcast %cst_88 : f32 to vector<16x256xf32>
    %190 = arith.maximumf %188, %189 : vector<16x256xf32>
    %191 = arith.truncf %190 : vector<16x256xf32> to vector<16x256xbf16>
    %c0_89 = arith.constant 0 : index
    %c0_90 = arith.constant 0 : index
    %c0_91 = arith.constant 0 : index
    %192 = vector.load %arg14[%c0_89, %c0_90, %c0_91] : memref<1x256x128xbf16, #tpu.memory_space<vmem>>, vector<1x256x128xbf16>
    %193 = vector.shape_cast %192 : vector<1x256x128xbf16> to vector<256x128xbf16>
    %cst_92 = arith.constant dense<0.000000e+00> : vector<16x128xf32>
    %194 = tpu.matmul %191, %193, %cst_92 {dimension_numbers = #tpu.dot_dimension_numbers<[1], [0], [0], [1], [0, 0, 1, 1], [], []>} : vector<16x256xbf16>, vector<256x128xbf16>, vector<16x128xf32> -> vector<16x128xf32>
    %c0_93 = arith.constant 0 : index
    %c0_94 = arith.constant 0 : index
    %c0_95 = arith.constant 0 : index
    %195 = vector.load %arg15[%c0_93, %c0_94, %c0_95] : memref<1x1x128xf32, #tpu.memory_space<vmem>>, vector<1x1x128xf32>
    %196 = vector.shape_cast %195 : vector<1x1x128xf32> to vector<1x128xf32>
    %197 = vector.broadcast %196 : vector<1x128xf32> to vector<16x128xf32>
    %198 = arith.addf %194, %197 : vector<16x128xf32>
    %199 = arith.addf %153, %198 : vector<16x128xf32>
    %c0_96 = arith.constant 0 : index
    %c0_97 = arith.constant 0 : index
    %200 = vector.load %arg23[%c0_96, %c0_97] : memref<16x128xf32, #tpu.memory_space<vmem>>, vector<16x128xf32>
    tpu.vector_store %arg23[%c0_96, %c0_97], %199 {strides = array<i32>} : memref<16x128xf32, #tpu.memory_space<vmem>>, vector<16x128xf32>,
    %c1_i32 = arith.constant 1 : i32
    %201 = arith.cmpi eq, %arg1, %c1_i32 : i32
    %202 = arith.extui %201 : i1 to i32
    %c0_i32_98 = arith.constant 0 : i32
    %203 = arith.cmpi ne, %202, %c0_i32_98 : i32
    scf.if %203 {
      %c0_99 = arith.constant 0 : index
      %c0_100 = arith.constant 0 : index
      %204 = vector.load %arg20[%c0_99, %c0_100] : memref<1x128xf32, #tpu.memory_space<vmem>>, vector<1x128xf32>
      %c0_101 = arith.constant 0 : index
      %c0_102 = arith.constant 0 : index
      %205 = vector.load %arg21[%c0_101, %c0_102] : memref<1x128xf32, #tpu.memory_space<vmem>>, vector<1x128xf32>
      %cst_103 = arith.constant dense<0.000000e+00> : vector<16xf32>
      %206 = vector.multi_reduction <add>, %199, %cst_103 [1] : vector<16x128xf32> to vector<16xf32>
      %207 = vector.shape_cast %206 : vector<16xf32> to vector<16x1xf32>
      %cst_104 = arith.constant 1.280000e+02 : f32
      %208 = vector.broadcast %cst_104 : f32 to vector<16x1xf32>
      %209 = arith.divf %207, %208 : vector<16x1xf32>
      %210 = vector.broadcast %209 : vector<16x1xf32> to vector<16x128xf32>
      %211 = arith.subf %199, %210 : vector<16x128xf32>
      %212 = arith.mulf %211, %211 : vector<16x128xf32>
      %cst_105 = arith.constant dense<0.000000e+00> : vector<16xf32>
      %213 = vector.multi_reduction <add>, %212, %cst_105 [1] : vector<16x128xf32> to vector<16xf32>
      %214 = vector.shape_cast %213 : vector<16xf32> to vector<16x1xf32>
      %cst_106 = arith.constant 0.00787401571 : f32
      %215 = vector.broadcast %cst_106 : f32 to vector<16x1xf32>
      %216 = arith.mulf %214, %215 : vector<16x1xf32>
      %217 = math.sqrt %216 : vector<16x1xf32>
      %cst_107 = arith.constant 9.99999997E-7 : f32
      %218 = vector.broadcast %cst_107 : f32 to vector<16x1xf32>
      %219 = arith.addf %217, %218 : vector<16x1xf32>
      %220 = tpu.reciprocal %219 {approx = true} : vector<16x1xf32> -> vector<16x1xf32>
      %221 = vector.broadcast %209 : vector<16x1xf32> to vector<16x128xf32>
      %222 = arith.subf %199, %221 : vector<16x128xf32>
      %223 = vector.broadcast %220 : vector<16x1xf32> to vector<16x128xf32>
      %224 = arith.mulf %222, %223 : vector<16x128xf32>
      %225 = vector.broadcast %204 : vector<1x128xf32> to vector<16x128xf32>
      %226 = arith.mulf %224, %225 : vector<16x128xf32>
      %227 = vector.broadcast %205 : vector<1x128xf32> to vector<16x128xf32>
      %228 = arith.addf %226, %227 : vector<16x128xf32>
      %c0_108 = arith.constant 0 : index
      %c0_109 = arith.constant 0 : index
      %c0_110 = arith.constant 0 : index
      %229 = vector.load %arg22[%c0_108, %c0_109, %c0_110] : memref<1x16x128xf32, #tpu.memory_space<vmem>>, vector<1x16x128xf32>
      %230 = vector.shape_cast %229 : vector<1x16x128xf32> to vector<16x128xf32>
      %231 = vector.shape_cast %228 : vector<16x128xf32> to vector<1x16x128xf32>
      tpu.vector_store %arg22[%c0_108, %c0_109, %c0_110], %231 {strides = array<i32>} : memref<1x16x128xf32, #tpu.memory_space<vmem>>, vector<1x16x128xf32>,
    } else {
    }
    return
  }
  func.func @transform_0(%arg0: i32, %arg1: i32) -> (i32, i32, i32) {
    %c0_i32 = arith.constant 0 : i32
    %c0_i32_0 = arith.constant 0 : i32
    %c0_i32_1 = arith.constant 0 : i32
    return %arg0, %c0_i32, %c0_i32_0 : i32, i32, i32
  }
  func.func @transform_1(%arg0: i32, %arg1: i32) -> (i32, i32, i32) {
    %c0_i32 = arith.constant 0 : i32
    %c0_i32_0 = arith.constant 0 : i32
    %c0_i32_1 = arith.constant 0 : i32
    return %arg0, %c0_i32, %c0_i32_0 : i32, i32, i32
  }
  func.func @transform_2(%arg0: i32, %arg1: i32) -> (i32, i32, i32) {
    %c0_i32 = arith.constant 0 : i32
    %c0_i32_0 = arith.constant 0 : i32
    %c0_i32_1 = arith.constant 0 : i32
    return %arg1, %c0_i32, %c0_i32_0 : i32, i32, i32
  }
  func.func @transform_3(%arg0: i32, %arg1: i32) -> (i32, i32, i32) {
    %c0_i32 = arith.constant 0 : i32
    %c0_i32_0 = arith.constant 0 : i32
    %c0_i32_1 = arith.constant 0 : i32
    return %arg1, %c0_i32, %c0_i32_0 : i32, i32, i32
  }
  func.func @transform_4(%arg0: i32, %arg1: i32) -> (i32, i32, i32) {
    %c0_i32 = arith.constant 0 : i32
    %c0_i32_0 = arith.constant 0 : i32
    %c0_i32_1 = arith.constant 0 : i32
    return %arg1, %c0_i32, %c0_i32_0 : i32, i32, i32
  }
  func.func @transform_5(%arg0: i32, %arg1: i32) -> (i32, i32, i32) {
    %c0_i32 = arith.constant 0 : i32
    %c0_i32_0 = arith.constant 0 : i32
    %c0_i32_1 = arith.constant 0 : i32
    return %arg1, %c0_i32, %c0_i32_0 : i32, i32, i32
  }
  func.func @transform_6(%arg0: i32, %arg1: i32) -> (i32, i32, i32) {
    %c0_i32 = arith.constant 0 : i32
    %c0_i32_0 = arith.constant 0 : i32
    %c0_i32_1 = arith.constant 0 : i32
    return %arg1, %c0_i32, %c0_i32_0 : i32, i32, i32
  }
  func.func @transform_7(%arg0: i32, %arg1: i32) -> (i32, i32, i32) {
    %c0_i32 = arith.constant 0 : i32
    %c0_i32_0 = arith.constant 0 : i32
    %c0_i32_1 = arith.constant 0 : i32
    return %arg1, %c0_i32, %c0_i32_0 : i32, i32, i32
  }
  func.func @transform_8(%arg0: i32, %arg1: i32) -> (i32, i32, i32) {
    %c0_i32 = arith.constant 0 : i32
    %c0_i32_0 = arith.constant 0 : i32
    %c0_i32_1 = arith.constant 0 : i32
    return %arg1, %c0_i32, %c0_i32_0 : i32, i32, i32
  }
  func.func @transform_9(%arg0: i32, %arg1: i32) -> (i32, i32, i32) {
    %c0_i32 = arith.constant 0 : i32
    %c0_i32_0 = arith.constant 0 : i32
    %c0_i32_1 = arith.constant 0 : i32
    return %arg1, %c0_i32, %c0_i32_0 : i32, i32, i32
  }
  func.func @transform_10(%arg0: i32, %arg1: i32) -> (i32, i32, i32) {
    %c0_i32 = arith.constant 0 : i32
    %c0_i32_0 = arith.constant 0 : i32
    %c0_i32_1 = arith.constant 0 : i32
    return %arg1, %c0_i32, %c0_i32_0 : i32, i32, i32
  }
  func.func @transform_11(%arg0: i32, %arg1: i32) -> (i32, i32, i32) {
    %c0_i32 = arith.constant 0 : i32
    %c0_i32_0 = arith.constant 0 : i32
    %c0_i32_1 = arith.constant 0 : i32
    return %arg1, %c0_i32, %c0_i32_0 : i32, i32, i32
  }
  func.func @transform_12(%arg0: i32, %arg1: i32) -> (i32, i32, i32) {
    %c0_i32 = arith.constant 0 : i32
    %c0_i32_0 = arith.constant 0 : i32
    %c0_i32_1 = arith.constant 0 : i32
    return %arg1, %c0_i32, %c0_i32_0 : i32, i32, i32
  }
  func.func @transform_13(%arg0: i32, %arg1: i32) -> (i32, i32, i32) {
    %c0_i32 = arith.constant 0 : i32
    %c0_i32_0 = arith.constant 0 : i32
    %c0_i32_1 = arith.constant 0 : i32
    return %arg1, %c0_i32, %c0_i32_0 : i32, i32, i32
  }
  func.func @transform_14(%arg0: i32, %arg1: i32) -> (i32, i32, i32) {
    %c0_i32 = arith.constant 0 : i32
    %c0_i32_0 = arith.constant 0 : i32
    %c0_i32_1 = arith.constant 0 : i32
    return %arg1, %c0_i32, %c0_i32_0 : i32, i32, i32
  }
  func.func @transform_15(%arg0: i32, %arg1: i32) -> (i32, i32, i32) {
    %c0_i32 = arith.constant 0 : i32
    %c0_i32_0 = arith.constant 0 : i32
    %c0_i32_1 = arith.constant 0 : i32
    return %arg1, %c0_i32, %c0_i32_0 : i32, i32, i32
  }
  func.func @transform_16(%arg0: i32, %arg1: i32) -> (i32, i32, i32) {
    %c0_i32 = arith.constant 0 : i32
    %c0_i32_0 = arith.constant 0 : i32
    %c0_i32_1 = arith.constant 0 : i32
    return %arg1, %c0_i32, %c0_i32_0 : i32, i32, i32
  }
  func.func @transform_17(%arg0: i32, %arg1: i32) -> (i32, i32, i32) {
    %c0_i32 = arith.constant 0 : i32
    %c0_i32_0 = arith.constant 0 : i32
    %c0_i32_1 = arith.constant 0 : i32
    return %arg1, %c0_i32, %c0_i32_0 : i32, i32, i32
  }
  func.func @transform_18(%arg0: i32, %arg1: i32) -> (i32, i32) {
    %c0_i32 = arith.constant 0 : i32
    %c0_i32_0 = arith.constant 0 : i32
    %c0_i32_1 = arith.constant 0 : i32
    return %c0_i32, %c0_i32_0 : i32, i32
  }
  func.func @transform_19(%arg0: i32, %arg1: i32) -> (i32, i32) {
    %c0_i32 = arith.constant 0 : i32
    %c0_i32_0 = arith.constant 0 : i32
    %c0_i32_1 = arith.constant 0 : i32
    return %c0_i32, %c0_i32_0 : i32, i32
  }
  func.func @transform_20(%arg0: i32, %arg1: i32) -> (i32, i32, i32) {
    %c0_i32 = arith.constant 0 : i32
    %c0_i32_0 = arith.constant 0 : i32
    %c0_i32_1 = arith.constant 0 : i32
    return %arg0, %c0_i32, %c0_i32_0 : i32, i32, i32
  }
}

</mosaic_0001>

<llo_original>
// kernel: tpu_custom_call.1
$region0: #{tpu_custom_call.1}
  #allocation0 [shape = 'u32[]', space=smem, size = 0x4, offset = 0x4, fixed_abs, tag = 'smem constant byte address 0x4 - core index']
  #allocation1 [shape = 'u32[144,128]{1,0:T(1,128)}', space=vmem, size = 0x12000, scoped, tag = 'internal scratch']
  #allocation2 [shape = 'f32[16,128]{1,0:T(8,128)}', space=vmem, size = 0x2000, scoped, tag = 'scratch operand']
  #allocation3 [shape = 'bf16[16,128]{1,0:T(16,128)(2,1)}', space=vmem, size = 0x1000, scoped, tag = 'scratch operand']
  %s0 = inlined_call_operand.hbm [shape: f32[2,16,128], index: 0, kind: input, shape index: {}]
  %s1 = inlined_call_operand.hbm [shape: f32[2,1,16], index: 1, kind: input, shape index: {}]
  %s2 = inlined_call_operand.hbm [shape: bf16[2,128,128], index: 2, kind: input, shape index: {}]
  %s3 = inlined_call_operand.hbm [shape: f32[2,1,128], index: 3, kind: input, shape index: {}]
  %s4 = inlined_call_operand.hbm [shape: bf16[2,128,128], index: 4, kind: input, shape index: {}]
  %s5 = inlined_call_operand.hbm [shape: f32[2,1,128], index: 5, kind: input, shape index: {}]
  %s6 = inlined_call_operand.hbm [shape: bf16[2,128,128], index: 6, kind: input, shape index: {}]
  %s7 = inlined_call_operand.hbm [shape: f32[2,1,128], index: 7, kind: input, shape index: {}]
  %s8 = inlined_call_operand.hbm [shape: bf16[2,128,128], index: 8, kind: input, shape index: {}]
  %s9 = inlined_call_operand.hbm [shape: f32[2,1,128], index: 9, kind: input, shape index: {}]
  %s10 = inlined_call_operand.hbm [shape: bf16[2,128,256], index: 10, kind: input, shape index: {}]
  %s11 = inlined_call_operand.hbm [shape: f32[2,1,256], index: 11, kind: input, shape index: {}]
  %s12 = inlined_call_operand.hbm [shape: bf16[2,256,128], index: 12, kind: input, shape index: {}]
  %s13 = inlined_call_operand.hbm [shape: f32[2,1,128], index: 13, kind: input, shape index: {}]
  %s14 = inlined_call_operand.hbm [shape: f32[2,1,128], index: 14, kind: input, shape index: {}]
  %s15 = inlined_call_operand.hbm [shape: f32[2,1,128], index: 15, kind: input, shape index: {}]
  %s16 = inlined_call_operand.hbm [shape: f32[2,1,128], index: 16, kind: input, shape index: {}]
  %s17 = inlined_call_operand.hbm [shape: f32[2,1,128], index: 17, kind: input, shape index: {}]
  %s18 = inlined_call_operand.hbm [shape: f32[1,128], index: 18, kind: input, shape index: {}]
  %s19 = inlined_call_operand.hbm [shape: f32[1,128], index: 19, kind: input, shape index: {}]
  %s20 = inlined_call_operand.hbm [shape: f32[2,16,128], index: 20, kind: output, shape index: {}]
  %s21 = sld [smem:[#allocation0]]
  $region201: #{tpu_custom_call.1} parent=0
    _
  %s23 = ssub.s32 1, %s21
  %s24 = scalar_select 0, %s23, %s21
  $region1: #{tpu_custom_call.1} parent=0
    #allocation4 [shape = 'u8[16384]{0}', space=vmem, size = 0x4000, scoped, tag = 'input window, operand 0']
    #allocation5 [shape = 's32[2]{0}', space=sflag, size = 0x8, scoped, tag = 'scoped memory for tpu_custom_call.1']
    #allocation6 [shape = 's32[2]{0}', space=sflag, size = 0x8, scoped, tag = 'scoped memory for tpu_custom_call.1']
    #allocation7 [shape = 'u8[1024]{0}', space=vmem, size = 0x400, scoped, tag = 'input window, operand 1']
    #allocation8 [shape = 's32[2]{0}', space=sflag, size = 0x8, scoped, tag = 'scoped memory for tpu_custom_call.1']
    #allocation9 [shape = 'u8[65536]{0}', space=vmem, size = 0x10000, scoped, tag = 'input window, operand 2']
    #allocation10 [shape = 'u8[1024]{0}', space=vmem, size = 0x400, scoped, tag = 'input window, operand 3']
    #allocation11 [shape = 's32[2]{0}', space=sflag, size = 0x8, scoped, tag = 'scoped memory for tpu_custom_call.1']
    #allocation12 [shape = 'u8[65536]{0}', space=vmem, size = 0x10000, scoped, tag = 'input window, operand 4']
    #allocation13 [shape = 'u8[1024]{0}', space=vmem, size = 0x400, scoped, tag = 'input window, operand 5']
    #allocation14 [shape = 's32[2]{0}', space=sflag, size = 0x8, scoped, tag = 'scoped memory for tpu_custom_call.1']
    #allocation15 [shape = 'u8[65536]{0}', space=vmem, size = 0x10000, scoped, tag = 'input window, operand 6']
    #allocation16 [shape = 'u8[1024]{0}', space=vmem, size = 0x400, scoped, tag = 'input window, operand 7']
    #allocation17 [shape = 's32[2]{0}', space=sflag, size = 0x8, scoped, tag = 'scoped memory for tpu_custom_call.1']
    #allocation18 [shape = 'u8[65536]{0}', space=vmem, size = 0x10000, scoped, tag = 'input window, operand 8']
    #allocation19 [shape = 'u8[1024]{0}', space=vmem, size = 0x400, scoped, tag = 'input window, operand 9']
    #allocation20 [shape = 's32[2]{0}', space=sflag, size = 0x8, scoped, tag = 'scoped memory for tpu_custom_call.1']
    #allocation21 [shape = 'u8[131072]{0}', space=vmem, size = 0x20000, scoped, tag = 'input window, operand 10']
    #allocation22 [shape = 'u8[2048]{0}', space=vmem, size = 0x800, scoped, tag = 'input window, operand 11']
    #allocation23 [shape = 's32[2]{0}', space=sflag, size = 0x8, scoped, tag = 'scoped memory for tpu_custom_call.1']
    #allocation24 [shape = 'u8[131072]{0}', space=vmem, size = 0x20000, scoped, tag = 'input window, operand 12']
    #allocation25 [shape = 'u8[1024]{0}', space=vmem, size = 0x400, scoped, tag = 'input window, operand 13']
    #allocation26 [shape = 's32[2]{0}', space=sflag, size = 0x8, scoped, tag = 'scoped memory for tpu_custom_call.1']
    #allocation27 [shape = 'u8[1024]{0}', space=vmem, size = 0x400, scoped, tag = 'input window, operand 14']
    #allocation28 [shape = 'u8[1024]{0}', space=vmem, size = 0x400, scoped, tag = 'input window, operand 15']
    #allocation29 [shape = 's32[2]{0}', space=sflag, size = 0x8, scoped, tag = 'scoped memory for tpu_custom_call.1']
    #allocation30 [shape = 'u8[1024]{0}', space=vmem, size = 0x400, scoped, tag = 'input window, operand 16']
    #allocation31 [shape = 'u8[1024]{0}', space=vmem, size = 0x400, scoped, tag = 'input window, operand 17']
    #allocation32 [shape = 's32[2]{0}', space=sflag, size = 0x8, scoped, tag = 'scoped memory for tpu_custom_call.1']
    #allocation33 [shape = 'u8[512]{0}', space=vmem, size = 0x400, scoped, tag = 'input window, operand 18, single buffered']
    #allocation34 [shape = 'u8[512]{0}', space=vmem, size = 0x400, scoped, tag = 'input window, operand 19, single buffered']
    #allocation35 [shape = 's32[1]{0}', space=sflag, size = 0x4, scoped, tag = 'scoped memory for tpu_custom_call.1']
    #allocation36 [shape = 'u8[16384]{0}', space=vmem, size = 0x4000, scoped, tag = 'output window, operand 0']
    %25 = vsyncpa [#allocation5], 0
    %s26 = scalar_lea.sflag [#allocation5], 1
    %27 = vsyncpa %s26, 0
    %28 = vsyncpa [#allocation8], 0
    %s29 = scalar_lea.sflag [#allocation8], 1
    %30 = vsyncpa %s29, 0
    %31 = vsyncpa [#allocation11], 0
    %s32 = scalar_lea.sflag [#allocation11], 1
    %33 = vsyncpa %s32, 0
    %34 = vsyncpa [#allocation14], 0
    %s35 = scalar_lea.sflag [#allocation14], 1
    %36 = vsyncpa %s35, 0
    %37 = vsyncpa [#allocation17], 0
    %s38 = scalar_lea.sflag [#allocation17], 1
    %39 = vsyncpa %s38, 0
    %40 = vsyncpa [#allocation20], 0
    %s41 = scalar_lea.sflag [#allocation20], 1
    %42 = vsyncpa %s41, 0
    %43 = vsyncpa [#allocation23], 0
    %s44 = scalar_lea.sflag [#allocation23], 1
    %45 = vsyncpa %s44, 0
    %46 = vsyncpa [#allocation26], 0
    %s47 = scalar_lea.sflag [#allocation26], 1
    %48 = vsyncpa %s47, 0
    %49 = vsyncpa [#allocation29], 0
    %s50 = scalar_lea.sflag [#allocation29], 1
    %51 = vsyncpa %s50, 0
    %52 = vsyncpa [#allocation32], 0
    %s53 = scalar_lea.sflag [#allocation32], 1
    %54 = vsyncpa %s53, 0
    %55 = vsyncpa [#allocation35], 0
    %56 = vsyncpa [#allocation6], 0
    %s57 = scalar_lea.sflag [#allocation6], 1
    %58 = vsyncpa %s57, 0
    loop: start=0, step=1, limit=6
    $region2: #{tpu_custom_call.1} parent=1 // loop_pre_header
      _
    $region3: #{tpu_custom_call.1} parent=1 // loop_header
      %s60 = sphi 0, %s64
      %p61 = scmp.ge.s32.totalorder %s60, 6
      %s67 = sphi 0, %s79
      %s68 = sphi 0, %s75
      %s69 = sphi 0, %s67
      %s70 = sphi 0, %s68
      %s71 = sphi 0, %s69
      %s72 = sphi 0, %s70
      %s82 = sphi 0, %s84
      %s85 = sphi 0, %s82
      %s86 = sphi 0, %s85
      %s102 = sphi 0, %s86
      %s108 = sphi 0, %s110
      %s111 = sphi 0, %s108
      %s112 = sphi 0, %s111
      %s128 = sphi 0, %s112
      %s134 = sphi 0, %s136
      %s137 = sphi 0, %s134
      %s138 = sphi 0, %s137
      %s154 = sphi 0, %s138
      %s160 = sphi 0, %s162
      %s163 = sphi 0, %s160
      %s164 = sphi 0, %s163
      %s180 = sphi 0, %s164
      %s186 = sphi 0, %s188
      %s189 = sphi 0, %s186
      %s190 = sphi 0, %s189
      %s206 = sphi 0, %s190
      %s212 = sphi 0, %s214
      %s215 = sphi 0, %s212
      %s216 = sphi 0, %s215
      %s232 = sphi 0, %s216
      %s238 = sphi 0, %s240
      %s241 = sphi 0, %s238
      %s242 = sphi 0, %s241
      %s258 = sphi 0, %s242
      %s264 = sphi 0, %s266
      %s267 = sphi 0, %s264
      %s268 = sphi 0, %s267
      %s284 = sphi 0, %s268
      %s290 = sphi 0, %s292
      %s293 = sphi 0, %s290
      %s294 = sphi 0, %s293
      %s310 = sphi 0, %s294
      %s316 = sphi 0, %s318
      %s319 = sphi 0, %s316
      %s320 = sphi 0, %s319
      %s336 = sphi 0, %s320
      %s342 = sphi 0, %s344
      %s345 = sphi 0, %s342
      %s346 = sphi 0, %s345
      %s362 = sphi 0, %s346
      %s368 = sphi 0, %s370
      %s371 = sphi 0, %s368
      %s372 = sphi 0, %s371
      %s388 = sphi 0, %s372
      %s394 = sphi 0, %s396
      %s397 = sphi 0, %s394
      %s398 = sphi 0, %s397
      %s414 = sphi 0, %s398
      %s420 = sphi 0, %s422
      %s423 = sphi 0, %s420
      %s424 = sphi 0, %s423
      %s440 = sphi 0, %s424
      %s446 = sphi 0, %s448
      %s449 = sphi 0, %s446
      %s450 = sphi 0, %s449
      %s466 = sphi 0, %s450
      %s472 = sphi 0, %s474
      %s475 = sphi 0, %s472
      %s476 = sphi 0, %s475
      %s492 = sphi 0, %s476
      %s498 = sphi 0, %s500
      %s501 = sphi 0, %s498
      %s502 = sphi 0, %s501
      %s518 = sphi 0, %s502
      %s524 = sphi 0, %s526
      %s527 = sphi 0, %s524
      %s528 = sphi 0, %s527
      %s544 = sphi 0, %s528
      %s548 = sphi 0, %s548
      %s550 = sphi 0, %s548
      %s551 = sphi 0, %s550
      %s565 = sphi 0, %s551
      %s569 = sphi 0, %s569
      %s571 = sphi 0, %s569
      %s572 = sphi 0, %s571
      %s586 = sphi 0, %s572
      %s592 = sphi 0, %s594
      %s595 = sphi 0, %s592
      %s596 = sphi 0, %s595
      %s612 = sphi 0, %s596
    $region4: #{tpu_custom_call.1} parent=1 // loop_header_branch
      %63 = sbr.rel (%p61) target = $region8
    $region5: #{tpu_custom_call.1} parent=1 // loop_body
      %s65 = ssub.s32 %s60, 1
      %s66 = ssub.s32 %s60, 2
      %s73 = sadd.s32 1, %s68
      %p74 = scmp.ge.s32.totalorder %s73, 2
      %s75 = scalar_select %p74, 0, %s73
      %s76 = sadd.s32 1, %s67
      %s77 = scalar_select %p74, %s76, %s67
      %p78 = scmp.ge.s32.totalorder %s77, 2
      %s79 = scalar_select %p78, 0, %s77
      %s80 = ssub.s32 %s67, %s79
      %p81 = scmp.eq.s32.totalorder %s80, 0
      %s83 = sadd.s32 %s82, 1
      %s84 = scalar_select %p81, %s82, %s83
      %p87 = pneg %p81
      %p88 = scmp.eq.s32.totalorder %s60, 3
      %p89 = por %p87, %p88
      %p90 = scmp.ne.s32.totalorder %s82, %s85
      %p91 = scmp.eq.s32.totalorder %s60, 0
      %p92 = por %p90, %p91
      %p93 = scmp.ne.s32.totalorder %s82, %s85
      %p94 = scmp.eq.s32.totalorder %s65, 3
      %p95 = por %p93, %p94
      %p96 = scmp.ne.s32.totalorder %s85, %s86
      %p97 = scmp.eq.s32.totalorder %s65, 0
      %p98 = por %p96, %p97
      %p99 = scmp.ne.s32.totalorder %s85, %s86
      %p100 = scmp.eq.s32.totalorder %s66, 3
      %p101 = por %p99, %p100
      %p103 = scmp.ne.s32.totalorder %s86, %s102
      %p104 = scmp.eq.s32.totalorder %s66, 0
      %p105 = por %p103, %p104
      %s106 = ssub.s32 %s67, %s79
      %p107 = scmp.eq.s32.totalorder %s106, 0
      %s109 = sadd.s32 %s108, 1
      %s110 = scalar_select %p107, %s108, %s109
      %p113 = pneg %p107
      %p114 = scmp.eq.s32.totalorder %s60, 3
      %p115 = por %p113, %p114
      %p116 = scmp.ne.s32.totalorder %s108, %s111
      %p117 = scmp.eq.s32.totalorder %s60, 0
      %p118 = por %p116, %p117
      %p119 = scmp.ne.s32.totalorder %s108, %s111
      %p120 = scmp.eq.s32.totalorder %s65, 3
      %p121 = por %p119, %p120
      %p122 = scmp.ne.s32.totalorder %s111, %s112
      %p123 = scmp.eq.s32.totalorder %s65, 0
      %p124 = por %p122, %p123
      %p125 = scmp.ne.s32.totalorder %s111, %s112
      %p126 = scmp.eq.s32.totalorder %s66, 3
      %p127 = por %p125, %p126
      %p129 = scmp.ne.s32.totalorder %s112, %s128
      %p130 = scmp.eq.s32.totalorder %s66, 0
      %p131 = por %p129, %p130
      %s132 = ssub.s32 %s68, %s75
      %p133 = scmp.eq.s32.totalorder %s132, 0
      %s135 = sadd.s32 %s134, 1
      %s136 = scalar_select %p133, %s134, %s135
      %p139 = pneg %p133
      %p140 = scmp.eq.s32.totalorder %s60, 3
      %p141 = por %p139, %p140
      %p142 = scmp.ne.s32.totalorder %s134, %s137
      %p143 = scmp.eq.s32.totalorder %s60, 0
      %p144 = por %p142, %p143
      %p145 = scmp.ne.s32.totalorder %s134, %s137
      %p146 = scmp.eq.s32.totalorder %s65, 3
      %p147 = por %p145, %p146
      %p148 = scmp.ne.s32.totalorder %s137, %s138
      %p149 = scmp.eq.s32.totalorder %s65, 0
      %p150 = por %p148, %p149
      %p151 = scmp.ne.s32.totalorder %s137, %s138
      %p152 = scmp.eq.s32.totalorder %s66, 3
      %p153 = por %p151, %p152
      %p155 = scmp.ne.s32.totalorder %s138, %s154
      %p156 = scmp.eq.s32.totalorder %s66, 0
      %p157 = por %p155, %p156
      %s158 = ssub.s32 %s68, %s75
      %p159 = scmp.eq.s32.totalorder %s158, 0
      %s161 = sadd.s32 %s160, 1
      %s162 = scalar_select %p159, %s160, %s161
      %p165 = pneg %p159
      %p166 = scmp.eq.s32.totalorder %s60, 3
      %p167 = por %p165, %p166
      %p168 = scmp.ne.s32.totalorder %s160, %s163
      %p169 = scmp.eq.s32.totalorder %s60, 0
      %p170 = por %p168, %p169
      %p171 = scmp.ne.s32.totalorder %s160, %s163
      %p172 = scmp.eq.s32.totalorder %s65, 3
      %p173 = por %p171, %p172
      %p174 = scmp.ne.s32.totalorder %s163, %s164
      %p175 = scmp.eq.s32.totalorder %s65, 0
      %p176 = por %p174, %p175
      %p177 = scmp.ne.s32.totalorder %s163, %s164
      %p178 = scmp.eq.s32.totalorder %s66, 3
      %p179 = por %p177, %p178
      %p181 = scmp.ne.s32.totalorder %s164, %s180
      %p182 = scmp.eq.s32.totalorder %s66, 0
      %p183 = por %p181, %p182
      %s184 = ssub.s32 %s68, %s75
      %p185 = scmp.eq.s32.totalorder %s184, 0
      %s187 = sadd.s32 %s186, 1
      %s188 = scalar_select %p185, %s186, %s187
      %p191 = pneg %p185
      %p192 = scmp.eq.s32.totalorder %s60, 3
      %p193 = por %p191, %p192
      %p194 = scmp.ne.s32.totalorder %s186, %s189
      %p195 = scmp.eq.s32.totalorder %s60, 0
      %p196 = por %p194, %p195
      %p197 = scmp.ne.s32.totalorder %s186, %s189
      %p198 = scmp.eq.s32.totalorder %s65, 3
      %p199 = por %p197, %p198
      %p200 = scmp.ne.s32.totalorder %s189, %s190
      %p201 = scmp.eq.s32.totalorder %s65, 0
      %p202 = por %p200, %p201
      %p203 = scmp.ne.s32.totalorder %s189, %s190
      %p204 = scmp.eq.s32.totalorder %s66, 3
      %p205 = por %p203, %p204
      %p207 = scmp.ne.s32.totalorder %s190, %s206
      %p208 = scmp.eq.s32.totalorder %s66, 0
      %p209 = por %p207, %p208
      %s210 = ssub.s32 %s68, %s75
      %p211 = scmp.eq.s32.totalorder %s210, 0
      %s213 = sadd.s32 %s212, 1
      %s214 = scalar_select %p211, %s212, %s213
      %p217 = pneg %p211
      %p218 = scmp.eq.s32.totalorder %s60, 3
      %p219 = por %p217, %p218
      %p220 = scmp.ne.s32.totalorder %s212, %s215
      %p221 = scmp.eq.s32.totalorder %s60, 0
      %p222 = por %p220, %p221
      %p223 = scmp.ne.s32.totalorder %s212, %s215
      %p224 = scmp.eq.s32.totalorder %s65, 3
      %p225 = por %p223, %p224
      %p226 = scmp.ne.s32.totalorder %s215, %s216
      %p227 = scmp.eq.s32.totalorder %s65, 0
      %p228 = por %p226, %p227
      %p229 = scmp.ne.s32.totalorder %s215, %s216
      %p230 = scmp.eq.s32.totalorder %s66, 3
      %p231 = por %p229, %p230
      %p233 = scmp.ne.s32.totalorder %s216, %s232
      %p234 = scmp.eq.s32.totalorder %s66, 0
      %p235 = por %p233, %p234
      %s236 = ssub.s32 %s68, %s75
      %p237 = scmp.eq.s32.totalorder %s236, 0
      %s239 = sadd.s32 %s238, 1
      %s240 = scalar_select %p237, %s238, %s239
      %p243 = pneg %p237
      %p244 = scmp.eq.s32.totalorder %s60, 3
      %p245 = por %p243, %p244
      %p246 = scmp.ne.s32.totalorder %s238, %s241
      %p247 = scmp.eq.s32.totalorder %s60, 0
      %p248 = por %p246, %p247
      %p249 = scmp.ne.s32.totalorder %s238, %s241
      %p250 = scmp.eq.s32.totalorder %s65, 3
      %p251 = por %p249, %p250
      %p252 = scmp.ne.s32.totalorder %s241, %s242
      %p253 = scmp.eq.s32.totalorder %s65, 0
      %p254 = por %p252, %p253
      %p255 = scmp.ne.s32.totalorder %s241, %s242
      %p256 = scmp.eq.s32.totalorder %s66, 3
      %p257 = por %p255, %p256
      %p259 = scmp.ne.s32.totalorder %s242, %s258
      %p260 = scmp.eq.s32.totalorder %s66, 0
      %p261 = por %p259, %p260
      %s262 = ssub.s32 %s68, %s75
      %p263 = scmp.eq.s32.totalorder %s262, 0
      %s265 = sadd.s32 %s264, 1
      %s266 = scalar_select %p263, %s264, %s265
      %p269 = pneg %p263
      %p270 = scmp.eq.s32.totalorder %s60, 3
      %p271 = por %p269, %p270
      %p272 = scmp.ne.s32.totalorder %s264, %s267
      %p273 = scmp.eq.s32.totalorder %s60, 0
      %p274 = por %p272, %p273
      %p275 = scmp.ne.s32.totalorder %s264, %s267
      %p276 = scmp.eq.s32.totalorder %s65, 3
      %p277 = por %p275, %p276
      %p278 = scmp.ne.s32.totalorder %s267, %s268
      %p279 = scmp.eq.s32.totalorder %s65, 0
      %p280 = por %p278, %p279
      %p281 = scmp.ne.s32.totalorder %s267, %s268
      %p282 = scmp.eq.s32.totalorder %s66, 3
      %p283 = por %p281, %p282
      %p285 = scmp.ne.s32.totalorder %s268, %s284
      %p286 = scmp.eq.s32.totalorder %s66, 0
      %p287 = por %p285, %p286
      %s288 = ssub.s32 %s68, %s75
      %p289 = scmp.eq.s32.totalorder %s288, 0
      %s291 = sadd.s32 %s290, 1
      %s292 = scalar_select %p289, %s290, %s291
      %p295 = pneg %p289
      %p296 = scmp.eq.s32.totalorder %s60, 3
      %p297 = por %p295, %p296
      %p298 = scmp.ne.s32.totalorder %s290, %s293
      %p299 = scmp.eq.s32.totalorder %s60, 0
      %p300 = por %p298, %p299
      %p301 = scmp.ne.s32.totalorder %s290, %s293
      %p302 = scmp.eq.s32.totalorder %s65, 3
      %p303 = por %p301, %p302
      %p304 = scmp.ne.s32.totalorder %s293, %s294
      %p305 = scmp.eq.s32.totalorder %s65, 0
      %p306 = por %p304, %p305
      %p307 = scmp.ne.s32.totalorder %s293, %s294
      %p308 = scmp.eq.s32.totalorder %s66, 3
      %p309 = por %p307, %p308
      %p311 = scmp.ne.s32.totalorder %s294, %s310
      %p312 = scmp.eq.s32.totalorder %s66, 0
      %p313 = por %p311, %p312
      %s314 = ssub.s32 %s68, %s75
      %p315 = scmp.eq.s32.totalorder %s314, 0
      %s317 = sadd.s32 %s316, 1
      %s318 = scalar_select %p315, %s316, %s317
      %p321 = pneg %p315
      %p322 = scmp.eq.s32.totalorder %s60, 3
      %p323 = por %p321, %p322
      %p324 = scmp.ne.s32.totalorder %s316, %s319
      %p325 = scmp.eq.s32.totalorder %s60, 0
      %p326 = por %p324, %p325
      %p327 = scmp.ne.s32.totalorder %s316, %s319
      %p328 = scmp.eq.s32.totalorder %s65, 3
      %p329 = por %p327, %p328
      %p330 = scmp.ne.s32.totalorder %s319, %s320
      %p331 = scmp.eq.s32.totalorder %s65, 0
      %p332 = por %p330, %p331
      %p333 = scmp.ne.s32.totalorder %s319, %s320
      %p334 = scmp.eq.s32.totalorder %s66, 3
      %p335 = por %p333, %p334
      %p337 = scmp.ne.s32.totalorder %s320, %s336
      %p338 = scmp.eq.s32.totalorder %s66, 0
      %p339 = por %p337, %p338
      %s340 = ssub.s32 %s68, %s75
      %p341 = scmp.eq.s32.totalorder %s340, 0
      %s343 = sadd.s32 %s342, 1
      %s344 = scalar_select %p341, %s342, %s343
      %p347 = pneg %p341
      %p348 = scmp.eq.s32.totalorder %s60, 3
      %p349 = por %p347, %p348
      %p350 = scmp.ne.s32.totalorder %s342, %s345
      %p351 = scmp.eq.s32.totalorder %s60, 0
      %p352 = por %p350, %p351
      %p353 = scmp.ne.s32.totalorder %s342, %s345
      %p354 = scmp.eq.s32.totalorder %s65, 3
      %p355 = por %p353, %p354
      %p356 = scmp.ne.s32.totalorder %s345, %s346
      %p357 = scmp.eq.s32.totalorder %s65, 0
      %p358 = por %p356, %p357
      %p359 = scmp.ne.s32.totalorder %s345, %s346
      %p360 = scmp.eq.s32.totalorder %s66, 3
      %p361 = por %p359, %p360
      %p363 = scmp.ne.s32.totalorder %s346, %s362
      %p364 = scmp.eq.s32.totalorder %s66, 0
      %p365 = por %p363, %p364
      %s366 = ssub.s32 %s68, %s75
      %p367 = scmp.eq.s32.totalorder %s366, 0
      %s369 = sadd.s32 %s368, 1
      %s370 = scalar_select %p367, %s368, %s369
      %p373 = pneg %p367
      %p374 = scmp.eq.s32.totalorder %s60, 3
      %p375 = por %p373, %p374
      %p376 = scmp.ne.s32.totalorder %s368, %s371
      %p377 = scmp.eq.s32.totalorder %s60, 0
      %p378 = por %p376, %p377
      %p379 = scmp.ne.s32.totalorder %s368, %s371
      %p380 = scmp.eq.s32.totalorder %s65, 3
      %p381 = por %p379, %p380
      %p382 = scmp.ne.s32.totalorder %s371, %s372
      %p383 = scmp.eq.s32.totalorder %s65, 0
      %p384 = por %p382, %p383
      %p385 = scmp.ne.s32.totalorder %s371, %s372
      %p386 = scmp.eq.s32.totalorder %s66, 3
      %p387 = por %p385, %p386
      %p389 = scmp.ne.s32.totalorder %s372, %s388
      %p390 = scmp.eq.s32.totalorder %s66, 0
      %p391 = por %p389, %p390
      %s392 = ssub.s32 %s68, %s75
      %p393 = scmp.eq.s32.totalorder %s392, 0
      %s395 = sadd.s32 %s394, 1
      %s396 = scalar_select %p393, %s394, %s395
      %p399 = pneg %p393
      %p400 = scmp.eq.s32.totalorder %s60, 3
      %p401 = por %p399, %p400
      %p402 = scmp.ne.s32.totalorder %s394, %s397
      %p403 = scmp.eq.s32.totalorder %s60, 0
      %p404 = por %p402, %p403
      %p405 = scmp.ne.s32.totalorder %s394, %s397
      %p406 = scmp.eq.s32.totalorder %s65, 3
      %p407 = por %p405, %p406
      %p408 = scmp.ne.s32.totalorder %s397, %s398
      %p409 = scmp.eq.s32.totalorder %s65, 0
      %p410 = por %p408, %p409
      %p411 = scmp.ne.s32.totalorder %s397, %s398
      %p412 = scmp.eq.s32.totalorder %s66, 3
      %p413 = por %p411, %p412
      %p415 = scmp.ne.s32.totalorder %s398, %s414
      %p416 = scmp.eq.s32.totalorder %s66, 0
      %p417 = por %p415, %p416
      %s418 = ssub.s32 %s68, %s75
      %p419 = scmp.eq.s32.totalorder %s418, 0
      %s421 = sadd.s32 %s420, 1
      %s422 = scalar_select %p419, %s420, %s421
      %p425 = pneg %p419
      %p426 = scmp.eq.s32.totalorder %s60, 3
      %p427 = por %p425, %p426
      %p428 = scmp.ne.s32.totalorder %s420, %s423
      %p429 = scmp.eq.s32.totalorder %s60, 0
      %p430 = por %p428, %p429
      %p431 = scmp.ne.s32.totalorder %s420, %s423
      %p432 = scmp.eq.s32.totalorder %s65, 3
      %p433 = por %p431, %p432
      %p434 = scmp.ne.s32.totalorder %s423, %s424
      %p435 = scmp.eq.s32.totalorder %s65, 0
      %p436 = por %p434, %p435
      %p437 = scmp.ne.s32.totalorder %s423, %s424
      %p438 = scmp.eq.s32.totalorder %s66, 3
      %p439 = por %p437, %p438
      %p441 = scmp.ne.s32.totalorder %s424, %s440
      %p442 = scmp.eq.s32.totalorder %s66, 0
      %p443 = por %p441, %p442
      %s444 = ssub.s32 %s68, %s75
      %p445 = scmp.eq.s32.totalorder %s444, 0
      %s447 = sadd.s32 %s446, 1
      %s448 = scalar_select %p445, %s446, %s447
      %p451 = pneg %p445
      %p452 = scmp.eq.s32.totalorder %s60, 3
      %p453 = por %p451, %p452
      %p454 = scmp.ne.s32.totalorder %s446, %s449
      %p455 = scmp.eq.s32.totalorder %s60, 0
      %p456 = por %p454, %p455
      %p457 = scmp.ne.s32.totalorder %s446, %s449
      %p458 = scmp.eq.s32.totalorder %s65, 3
      %p459 = por %p457, %p458
      %p460 = scmp.ne.s32.totalorder %s449, %s450
      %p461 = scmp.eq.s32.totalorder %s65, 0
      %p462 = por %p460, %p461
      %p463 = scmp.ne.s32.totalorder %s449, %s450
      %p464 = scmp.eq.s32.totalorder %s66, 3
      %p465 = por %p463, %p464
      %p467 = scmp.ne.s32.totalorder %s450, %s466
      %p468 = scmp.eq.s32.totalorder %s66, 0
      %p469 = por %p467, %p468
      %s470 = ssub.s32 %s68, %s75
      %p471 = scmp.eq.s32.totalorder %s470, 0
      %s473 = sadd.s32 %s472, 1
      %s474 = scalar_select %p471, %s472, %s473
      %p477 = pneg %p471
      %p478 = scmp.eq.s32.totalorder %s60, 3
      %p479 = por %p477, %p478
      %p480 = scmp.ne.s32.totalorder %s472, %s475
      %p481 = scmp.eq.s32.totalorder %s60, 0
      %p482 = por %p480, %p481
      %p483 = scmp.ne.s32.totalorder %s472, %s475
      %p484 = scmp.eq.s32.totalorder %s65, 3
      %p485 = por %p483, %p484
      %p486 = scmp.ne.s32.totalorder %s475, %s476
      %p487 = scmp.eq.s32.totalorder %s65, 0
      %p488 = por %p486, %p487
      %p489 = scmp.ne.s32.totalorder %s475, %s476
      %p490 = scmp.eq.s32.totalorder %s66, 3
      %p491 = por %p489, %p490
      %p493 = scmp.ne.s32.totalorder %s476, %s492
      %p494 = scmp.eq.s32.totalorder %s66, 0
      %p495 = por %p493, %p494
      %s496 = ssub.s32 %s68, %s75
      %p497 = scmp.eq.s32.totalorder %s496, 0
      %s499 = sadd.s32 %s498, 1
      %s500 = scalar_select %p497, %s498, %s499
      %p503 = pneg %p497
      %p504 = scmp.eq.s32.totalorder %s60, 3
      %p505 = por %p503, %p504
      %p506 = scmp.ne.s32.totalorder %s498, %s501
      %p507 = scmp.eq.s32.totalorder %s60, 0
      %p508 = por %p506, %p507
      %p509 = scmp.ne.s32.totalorder %s498, %s501
      %p510 = scmp.eq.s32.totalorder %s65, 3
      %p511 = por %p509, %p510
      %p512 = scmp.ne.s32.totalorder %s501, %s502
      %p513 = scmp.eq.s32.totalorder %s65, 0
      %p514 = por %p512, %p513
      %p515 = scmp.ne.s32.totalorder %s501, %s502
      %p516 = scmp.eq.s32.totalorder %s66, 3
      %p517 = por %p515, %p516
      %p519 = scmp.ne.s32.totalorder %s502, %s518
      %p520 = scmp.eq.s32.totalorder %s66, 0
      %p521 = por %p519, %p520
      %s522 = ssub.s32 %s68, %s75
      %p523 = scmp.eq.s32.totalorder %s522, 0
      %s525 = sadd.s32 %s524, 1
      %s526 = scalar_select %p523, %s524, %s525
      %p529 = pneg %p523
      %p530 = scmp.eq.s32.totalorder %s60, 3
      %p531 = por %p529, %p530
      %p532 = scmp.ne.s32.totalorder %s524, %s527
      %p533 = scmp.eq.s32.totalorder %s60, 0
      %p534 = por %p532, %p533
      %p535 = scmp.ne.s32.totalorder %s524, %s527
      %p536 = scmp.eq.s32.totalorder %s65, 3
      %p537 = por %p535, %p536
      %p538 = scmp.ne.s32.totalorder %s527, %s528
      %p539 = scmp.eq.s32.totalorder %s65, 0
      %p540 = por %p538, %p539
      %p541 = scmp.ne.s32.totalorder %s527, %s528
      %p542 = scmp.eq.s32.totalorder %s66, 3
      %p543 = por %p541, %p542
      %p545 = scmp.ne.s32.totalorder %s528, %s544
      %p546 = scmp.eq.s32.totalorder %s66, 0
      %p547 = por %p545, %p546
      %s549 = sadd.s32 %s548, 1
      %p552 = scmp.eq.s32.totalorder %s60, 3
      %p553 = scmp.ne.s32.totalorder %s548, %s550
      %p554 = scmp.eq.s32.totalorder %s60, 0
      %p555 = por %p553, %p554
      %p556 = scmp.ne.s32.totalorder %s548, %s550
      %p557 = scmp.eq.s32.totalorder %s65, 3
      %p558 = por %p556, %p557
      %p559 = scmp.ne.s32.totalorder %s550, %s551
      %p560 = scmp.eq.s32.totalorder %s65, 0
      %p561 = por %p559, %p560
      %p562 = scmp.ne.s32.totalorder %s550, %s551
      %p563 = scmp.eq.s32.totalorder %s66, 3
      %p564 = por %p562, %p563
      %p566 = scmp.ne.s32.totalorder %s551, %s565
      %p567 = scmp.eq.s32.totalorder %s66, 0
      %p568 = por %p566, %p567
      %s570 = sadd.s32 %s569, 1
      %p573 = scmp.eq.s32.totalorder %s60, 3
      %p574 = scmp.ne.s32.totalorder %s569, %s571
      %p575 = scmp.eq.s32.totalorder %s60, 0
      %p576 = por %p574, %p575
      %p577 = scmp.ne.s32.totalorder %s569, %s571
      %p578 = scmp.eq.s32.totalorder %s65, 3
      %p579 = por %p577, %p578
      %p580 = scmp.ne.s32.totalorder %s571, %s572
      %p581 = scmp.eq.s32.totalorder %s65, 0
      %p582 = por %p580, %p581
      %p583 = scmp.ne.s32.totalorder %s571, %s572
      %p584 = scmp.eq.s32.totalorder %s66, 3
      %p585 = por %p583, %p584
      %p587 = scmp.ne.s32.totalorder %s572, %s586
      %p588 = scmp.eq.s32.totalorder %s66, 0
      %p589 = por %p587, %p588
      %s590 = ssub.s32 %s67, %s79
      %p591 = scmp.eq.s32.totalorder %s590, 0
      %s593 = sadd.s32 %s592, 1
      %s594 = scalar_select %p591, %s592, %s593
      %p597 = pneg %p591
      %p598 = scmp.eq.s32.totalorder %s60, 3
      %p599 = por %p597, %p598
      %p600 = scmp.ne.s32.totalorder %s592, %s595
      %p601 = scmp.eq.s32.totalorder %s60, 0
      %p602 = por %p600, %p601
      %p603 = scmp.ne.s32.totalorder %s592, %s595
      %p604 = scmp.eq.s32.totalorder %s65, 3
      %p605 = por %p603, %p604
      %p606 = scmp.ne.s32.totalorder %s595, %s596
      %p607 = scmp.eq.s32.totalorder %s65, 0
      %p608 = por %p606, %p607
      %p609 = scmp.ne.s32.totalorder %s595, %s596
      %p610 = scmp.eq.s32.totalorder %s66, 3
      %p611 = por %p609, %p610
      %p613 = scmp.ne.s32.totalorder %s596, %s612
      %p614 = scmp.eq.s32.totalorder %s66, 0
      %p615 = por %p613, %p614
      %p616 = scmp.le.s32.totalorder 1, %s60
      %p617 = scmp.lt.s32.totalorder %s60, 5
      %p618 = pnand %p616, %p617
      %p619 = pneg %p618
      // Predicated region
      $region9: #{tpu_custom_call.1} parent=5 // pred_check
        _
      $region10: #{tpu_custom_call.1} parent=5 // pred_check_branch
        %621 = sbr.rel (%p618) target = $region12
      $region11: #{tpu_custom_call.1} parent=5 // pred_region
        %s622 = ssub.s32 %s60, 1
        // Predicated region
        $region13: #{tpu_custom_call.1} parent=11 // pred_check
          %p623 = pneg %p561
        $region14: #{tpu_custom_call.1} parent=11 // pred_check_branch
          %625 = sbr.rel (%p623) target = $region16
        $region15: #{tpu_custom_call.1} parent=11 // pred_region
          %s627 = ssub.s32 16, 16
          %628 = vsyncadd [#allocation32], %s627
          %s630 = sshll.u32 [#allocation33], 4
          %s631 = int_to_ptr.vmem [resolvable:$true] %s630
          %633 = dma.hbm_to_vmem [thread:$0]  %s18, 16, %s631, [#allocation32]
        $region16: #{tpu_custom_call.1} parent=11 // pred_fallthru
          _
        // Predicated region
        $region17: #{tpu_custom_call.1} parent=11 // pred_check
          %p634 = pneg %p582
        $region18: #{tpu_custom_call.1} parent=11 // pred_check_branch
          %636 = sbr.rel (%p634) target = $region20
        $region19: #{tpu_custom_call.1} parent=11 // pred_region
          %s638 = ssub.s32 16, 16
          %639 = vsyncadd [#allocation35], %s638
          %s641 = sshll.u32 [#allocation34], 4
          %s642 = int_to_ptr.vmem [resolvable:$true] %s641
          %644 = dma.hbm_to_vmem [thread:$0]  %s19, 16, %s642, [#allocation35]
        $region20: #{tpu_custom_call.1} parent=11 // pred_fallthru
          _
      $region12: #{tpu_custom_call.1} parent=5 // pred_fallthru
        _
      %p645 = scmp.lt.s32.totalorder %s60, 4
      // Predicated region
      $region21: #{tpu_custom_call.1} parent=5 // pred_check
        %p646 = pneg %p645
      $region22: #{tpu_custom_call.1} parent=5 // pred_check_branch
        %648 = sbr.rel (%p646) target = $region24
      $region23: #{tpu_custom_call.1} parent=5 // pred_region
        // Predicated region
        $region25: #{tpu_custom_call.1} parent=23 // pred_check
          %p649 = pneg %p92
        $region26: #{tpu_custom_call.1} parent=23 // pred_check_branch
          %651 = sbr.rel (%p649) target = $region28
        $region27: #{tpu_custom_call.1} parent=23 // pred_region
          %s652 = sand.u32 %s82, 1
          %s653 = scalar_lea.sflag [#allocation5], %s652
          %s654 = sand.u32 %s82, 1
          %s655 = smul.addr %s654, 16
          %s656 = scalar_lea.vmem [#allocation4], %s655
          %s658 = ssub.s32 256, 256
          %659 = vsyncadd %s653, %s658
          %s660 = smul.addr %s67, 2
          %s661 = smul.addr %s660, 128
          %s662 = scalar_lea.hbm %s0, %s661
          %s663 = sshll.u32 %s656, 4
          %s664 = int_to_ptr.vmem [resolvable:$true] %s663
          %669 = dma.hbm_to_vmem [thread:$0]  %s662, 256, %s664, %s653, 128, 128, 8
        $region28: #{tpu_custom_call.1} parent=23 // pred_fallthru
          _
        // Predicated region
        $region29: #{tpu_custom_call.1} parent=23 // pred_check
          %p670 = pneg %p118
        $region30: #{tpu_custom_call.1} parent=23 // pred_check_branch
          %672 = sbr.rel (%p670) target = $region32
        $region31: #{tpu_custom_call.1} parent=23 // pred_region
          %s673 = sand.u32 %s60, 1
          %s674 = scalar_lea.sflag [#allocation8], %s673
          %s675 = sand.u32 %s108, 1
          %s676 = scalar_lea.vmem [#allocation7], %s675
          %s678 = ssub.s32 16, 16
          %679 = vsyncadd %s674, %s678
          %s680 = smul.addr %s67, 16
          %s681 = scalar_lea.hbm %s1, %s680
          %s683 = sshll.u32 %s676, 4
          %s684 = int_to_ptr.vmem [resolvable:$true] %s683
          %686 = dma.hbm_to_vmem [thread:$0]  %s681, 16, %s684, %s674
        $region32: #{tpu_custom_call.1} parent=23 // pred_fallthru
          _
        // Predicated region
        $region33: #{tpu_custom_call.1} parent=23 // pred_check
          %p687 = pneg %p144
        $region34: #{tpu_custom_call.1} parent=23 // pred_check_branch
          %689 = sbr.rel (%p687) target = $region36
        $region35: #{tpu_custom_call.1} parent=23 // pred_region
          %s690 = sand.u32 %s60, 1
          %s691 = scalar_lea.sflag [#allocation8], %s690
          %s692 = sand.u32 %s134, 1
          %s693 = smul.addr %s692, 64
          %s694 = scalar_lea.vmem [#allocation9], %s693
          %s696 = ssub.s32 1024, 1024
          %697 = vsyncadd %s691, %s696
          %s698 = smul.addr %s68, 16
          %s699 = smul.addr %s698, 64
          %s700 = scalar_lea.hbm %s2, %s699
          %s701 = sshll.u32 %s694, 4
          %s702 = int_to_ptr.vmem [resolvable:$true] %s701
          %707 = dma.hbm_to_vmem [thread:$0]  %s700, 1024, %s702, %s691, 64, 64, 4
        $region36: #{tpu_custom_call.1} parent=23 // pred_fallthru
          _
        // Predicated region
        $region37: #{tpu_custom_call.1} parent=23 // pred_check
          %p708 = pneg %p170
        $region38: #{tpu_custom_call.1} parent=23 // pred_check_branch
          %710 = sbr.rel (%p708) target = $region40
        $region39: #{tpu_custom_call.1} parent=23 // pred_region
          %s711 = sand.u32 %s60, 1
          %s712 = scalar_lea.sflag [#allocation11], %s711
          %s713 = sand.u32 %s160, 1
          %s714 = scalar_lea.vmem [#allocation10], %s713
          %s716 = ssub.s32 16, 16
          %717 = vsyncadd %s712, %s716
          %s718 = smul.addr %s68, 16
          %s719 = scalar_lea.hbm %s3, %s718
          %s721 = sshll.u32 %s714, 4
          %s722 = int_to_ptr.vmem [resolvable:$true] %s721
          %724 = dma.hbm_to_vmem [thread:$0]  %s719, 16, %s722, %s712
        $region40: #{tpu_custom_call.1} parent=23 // pred_fallthru
          _
        // Predicated region
        $region41: #{tpu_custom_call.1} parent=23 // pred_check
          %p725 = pneg %p196
        $region42: #{tpu_custom_call.1} parent=23 // pred_check_branch
          %727 = sbr.rel (%p725) target = $region44
        $region43: #{tpu_custom_call.1} parent=23 // pred_region
          %s728 = sand.u32 %s60, 1
          %s729 = scalar_lea.sflag [#allocation11], %s728
          %s730 = sand.u32 %s186, 1
          %s731 = smul.addr %s730, 64
          %s732 = scalar_lea.vmem [#allocation12], %s731
          %s734 = ssub.s32 1024, 1024
          %735 = vsyncadd %s729, %s734
          %s736 = smul.addr %s68, 16
          %s737 = smul.addr %s736, 64
          %s738 = scalar_lea.hbm %s4, %s737
          %s739 = sshll.u32 %s732, 4
          %s740 = int_to_ptr.vmem [resolvable:$true] %s739
          %745 = dma.hbm_to_vmem [thread:$0]  %s738, 1024, %s740, %s729, 64, 64, 4
        $region44: #{tpu_custom_call.1} parent=23 // pred_fallthru
          _
        // Predicated region
        $region45: #{tpu_custom_call.1} parent=23 // pred_check
          %p746 = pneg %p222
        $region46: #{tpu_custom_call.1} parent=23 // pred_check_branch
          %748 = sbr.rel (%p746) target = $region48
        $region47: #{tpu_custom_call.1} parent=23 // pred_region
          %s749 = sand.u32 %s60, 1
          %s750 = scalar_lea.sflag [#allocation14], %s749
          %s751 = sand.u32 %s212, 1
          %s752 = scalar_lea.vmem [#allocation13], %s751
          %s754 = ssub.s32 16, 16
          %755 = vsyncadd %s750, %s754
          %s756 = smul.addr %s68, 16
          %s757 = scalar_lea.hbm %s5, %s756
          %s759 = sshll.u32 %s752, 4
          %s760 = int_to_ptr.vmem [resolvable:$true] %s759
          %762 = dma.hbm_to_vmem [thread:$0]  %s757, 16, %s760, %s750
        $region48: #{tpu_custom_call.1} parent=23 // pred_fallthru
          _
        // Predicated region
        $region49: #{tpu_custom_call.1} parent=23 // pred_check
          %p763 = pneg %p248
        $region50: #{tpu_custom_call.1} parent=23 // pred_check_branch
          %765 = sbr.rel (%p763) target = $region52
        $region51: #{tpu_custom_call.1} parent=23 // pred_region
          %s766 = sand.u32 %s60, 1
          %s767 = scalar_lea.sflag [#allocation14], %s766
          %s768 = sand.u32 %s238, 1
          %s769 = smul.addr %s768, 64
          %s770 = scalar_lea.vmem [#allocation15], %s769
          %s772 = ssub.s32 1024, 1024
          %773 = vsyncadd %s767, %s772
          %s774 = smul.addr %s68, 16
          %s775 = smul.addr %s774, 64
          %s776 = scalar_lea.hbm %s6, %s775
          %s777 = sshll.u32 %s770, 4
          %s778 = int_to_ptr.vmem [resolvable:$true] %s777
          %783 = dma.hbm_to_vmem [thread:$0]  %s776, 1024, %s778, %s767, 64, 64, 4
        $region52: #{tpu_custom_call.1} parent=23 // pred_fallthru
          _
        // Predicated region
        $region53: #{tpu_custom_call.1} parent=23 // pred_check
          %p784 = pneg %p274
        $region54: #{tpu_custom_call.1} parent=23 // pred_check_branch
          %786 = sbr.rel (%p784) target = $region56
        $region55: #{tpu_custom_call.1} parent=23 // pred_region
          %s787 = sand.u32 %s60, 1
          %s788 = scalar_lea.sflag [#allocation17], %s787
          %s789 = sand.u32 %s264, 1
          %s790 = scalar_lea.vmem [#allocation16], %s789
          %s792 = ssub.s32 16, 16
          %793 = vsyncadd %s788, %s792
          %s794 = smul.addr %s68, 16
          %s795 = scalar_lea.hbm %s7, %s794
          %s797 = sshll.u32 %s790, 4
          %s798 = int_to_ptr.vmem [resolvable:$true] %s797
          %800 = dma.hbm_to_vmem [thread:$0]  %s795, 16, %s798, %s788
        $region56: #{tpu_custom_call.1} parent=23 // pred_fallthru
          _
        // Predicated region
        $region57: #{tpu_custom_call.1} parent=23 // pred_check
          %p801 = pneg %p300
        $region58: #{tpu_custom_call.1} parent=23 // pred_check_branch
          %803 = sbr.rel (%p801) target = $region60
        $region59: #{tpu_custom_call.1} parent=23 // pred_region
          %s804 = sand.u32 %s60, 1
          %s805 = scalar_lea.sflag [#allocation17], %s804
          %s806 = sand.u32 %s290, 1
          %s807 = smul.addr %s806, 64
          %s808 = scalar_lea.vmem [#allocation18], %s807
          %s810 = ssub.s32 1024, 1024
          %811 = vsyncadd %s805, %s810
          %s812 = smul.addr %s68, 16
          %s813 = smul.addr %s812, 64
          %s814 = scalar_lea.hbm %s8, %s813
          %s815 = sshll.u32 %s808, 4
          %s816 = int_to_ptr.vmem [resolvable:$true] %s815
          %821 = dma.hbm_to_vmem [thread:$0]  %s814, 1024, %s816, %s805, 64, 64, 4
        $region60: #{tpu_custom_call.1} parent=23 // pred_fallthru
          _
        // Predicated region
        $region61: #{tpu_custom_call.1} parent=23 // pred_check
          %p822 = pneg %p326
        $region62: #{tpu_custom_call.1} parent=23 // pred_check_branch
          %824 = sbr.rel (%p822) target = $region64
        $region63: #{tpu_custom_call.1} parent=23 // pred_region
          %s825 = sand.u32 %s60, 1
          %s826 = scalar_lea.sflag [#allocation20], %s825
          %s827 = sand.u32 %s316, 1
          %s828 = scalar_lea.vmem [#allocation19], %s827
          %s830 = ssub.s32 16, 16
          %831 = vsyncadd %s826, %s830
          %s832 = smul.addr %s68, 16
          %s833 = scalar_lea.hbm %s9, %s832
          %s835 = sshll.u32 %s828, 4
          %s836 = int_to_ptr.vmem [resolvable:$true] %s835
          %838 = dma.hbm_to_vmem [thread:$0]  %s833, 16, %s836, %s826
        $region64: #{tpu_custom_call.1} parent=23 // pred_fallthru
          _
        // Predicated region
        $region65: #{tpu_custom_call.1} parent=23 // pred_check
          %p839 = pneg %p352
        $region66: #{tpu_custom_call.1} parent=23 // pred_check_branch
          %841 = sbr.rel (%p839) target = $region68
        $region67: #{tpu_custom_call.1} parent=23 // pred_region
          %s842 = sand.u32 %s60, 1
          %s843 = scalar_lea.sflag [#allocation20], %s842
          %s844 = sand.u32 %s342, 1
          %s845 = smul.addr %s844, 128
          %s846 = scalar_lea.vmem [#allocation21], %s845
          %s848 = ssub.s32 2048, 2048
          %849 = vsyncadd %s843, %s848
          %s850 = smul.addr %s68, 32
          %s851 = smul.addr %s850, 64
          %s852 = scalar_lea.hbm %s10, %s851
          %s853 = sshll.u32 %s846, 4
          %s854 = int_to_ptr.vmem [resolvable:$true] %s853
          %859 = dma.hbm_to_vmem [thread:$0]  %s852, 2048, %s854, %s843, 128, 128, 8
        $region68: #{tpu_custom_call.1} parent=23 // pred_fallthru
          _
        // Predicated region
        $region69: #{tpu_custom_call.1} parent=23 // pred_check
          %p860 = pneg %p378
        $region70: #{tpu_custom_call.1} parent=23 // pred_check_branch
          %862 = sbr.rel (%p860) target = $region72
        $region71: #{tpu_custom_call.1} parent=23 // pred_region
          %s863 = sand.u32 %s60, 1
          %s864 = scalar_lea.sflag [#allocation23], %s863
          %s865 = sand.u32 %s368, 1
          %s866 = smul.addr %s865, 2
          %s867 = scalar_lea.vmem [#allocation22], %s866
          %s869 = ssub.s32 32, 32
          %870 = vsyncadd %s864, %s869
          %s871 = smul.addr %s68, 2
          %s872 = smul.addr %s871, 16
          %s873 = scalar_lea.hbm %s11, %s872
          %s875 = sshll.u32 %s867, 4
          %s876 = int_to_ptr.vmem [resolvable:$true] %s875
          %878 = dma.hbm_to_vmem [thread:$0]  %s873, 32, %s876, %s864
        $region72: #{tpu_custom_call.1} parent=23 // pred_fallthru
          _
        // Predicated region
        $region73: #{tpu_custom_call.1} parent=23 // pred_check
          %p879 = pneg %p404
        $region74: #{tpu_custom_call.1} parent=23 // pred_check_branch
          %881 = sbr.rel (%p879) target = $region76
        $region75: #{tpu_custom_call.1} parent=23 // pred_region
          %s882 = sand.u32 %s60, 1
          %s883 = scalar_lea.sflag [#allocation23], %s882
          %s884 = sand.u32 %s394, 1
          %s885 = smul.addr %s884, 128
          %s886 = scalar_lea.vmem [#allocation24], %s885
          %s888 = ssub.s32 2048, 2048
          %889 = vsyncadd %s883, %s888
          %s890 = smul.addr %s68, 32
          %s891 = smul.addr %s890, 64
          %s892 = scalar_lea.hbm %s12, %s891
          %s893 = sshll.u32 %s886, 4
          %s894 = int_to_ptr.vmem [resolvable:$true] %s893
          %899 = dma.hbm_to_vmem [thread:$0]  %s892, 2048, %s894, %s883, 64, 64, 4
        $region76: #{tpu_custom_call.1} parent=23 // pred_fallthru
          _
        // Predicated region
        $region77: #{tpu_custom_call.1} parent=23 // pred_check
          %p900 = pneg %p430
        $region78: #{tpu_custom_call.1} parent=23 // pred_check_branch
          %902 = sbr.rel (%p900) target = $region80
        $region79: #{tpu_custom_call.1} parent=23 // pred_region
          %s903 = sand.u32 %s60, 1
          %s904 = scalar_lea.sflag [#allocation26], %s903
          %s905 = sand.u32 %s420, 1
          %s906 = scalar_lea.vmem [#allocation25], %s905
          %s908 = ssub.s32 16, 16
          %909 = vsyncadd %s904, %s908
          %s910 = smul.addr %s68, 16
          %s911 = scalar_lea.hbm %s13, %s910
          %s913 = sshll.u32 %s906, 4
          %s914 = int_to_ptr.vmem [resolvable:$true] %s913
          %916 = dma.hbm_to_vmem [thread:$0]  %s911, 16, %s914, %s904
        $region80: #{tpu_custom_call.1} parent=23 // pred_fallthru
          _
        // Predicated region
        $region81: #{tpu_custom_call.1} parent=23 // pred_check
          %p917 = pneg %p456
        $region82: #{tpu_custom_call.1} parent=23 // pred_check_branch
          %919 = sbr.rel (%p917) target = $region84
        $region83: #{tpu_custom_call.1} parent=23 // pred_region
          %s920 = sand.u32 %s60, 1
          %s921 = scalar_lea.sflag [#allocation26], %s920
          %s922 = sand.u32 %s446, 1
          %s923 = scalar_lea.vmem [#allocation27], %s922
          %s925 = ssub.s32 16, 16
          %926 = vsyncadd %s921, %s925
          %s927 = smul.addr %s68, 16
          %s928 = scalar_lea.hbm %s14, %s927
          %s930 = sshll.u32 %s923, 4
          %s931 = int_to_ptr.vmem [resolvable:$true] %s930
          %933 = dma.hbm_to_vmem [thread:$0]  %s928, 16, %s931, %s921
        $region84: #{tpu_custom_call.1} parent=23 // pred_fallthru
          _
        // Predicated region
        $region85: #{tpu_custom_call.1} parent=23 // pred_check
          %p934 = pneg %p482
        $region86: #{tpu_custom_call.1} parent=23 // pred_check_branch
          %936 = sbr.rel (%p934) target = $region88
        $region87: #{tpu_custom_call.1} parent=23 // pred_region
          %s937 = sand.u32 %s60, 1
          %s938 = scalar_lea.sflag [#allocation29], %s937
          %s939 = sand.u32 %s472, 1
          %s940 = scalar_lea.vmem [#allocation28], %s939
          %s942 = ssub.s32 16, 16
          %943 = vsyncadd %s938, %s942
          %s944 = smul.addr %s68, 16
          %s945 = scalar_lea.hbm %s15, %s944
          %s947 = sshll.u32 %s940, 4
          %s948 = int_to_ptr.vmem [resolvable:$true] %s947
          %950 = dma.hbm_to_vmem [thread:$0]  %s945, 16, %s948, %s938
        $region88: #{tpu_custom_call.1} parent=23 // pred_fallthru
          _
        // Predicated region
        $region89: #{tpu_custom_call.1} parent=23 // pred_check
          %p951 = pneg %p508
        $region90: #{tpu_custom_call.1} parent=23 // pred_check_branch
          %953 = sbr.rel (%p951) target = $region92
        $region91: #{tpu_custom_call.1} parent=23 // pred_region
          %s954 = sand.u32 %s60, 1
          %s955 = scalar_lea.sflag [#allocation29], %s954
          %s956 = sand.u32 %s498, 1
          %s957 = scalar_lea.vmem [#allocation30], %s956
          %s959 = ssub.s32 16, 16
          %960 = vsyncadd %s955, %s959
          %s961 = smul.addr %s68, 16
          %s962 = scalar_lea.hbm %s16, %s961
          %s964 = sshll.u32 %s957, 4
          %s965 = int_to_ptr.vmem [resolvable:$true] %s964
          %967 = dma.hbm_to_vmem [thread:$0]  %s962, 16, %s965, %s955
        $region92: #{tpu_custom_call.1} parent=23 // pred_fallthru
          _
        // Predicated region
        $region93: #{tpu_custom_call.1} parent=23 // pred_check
          %p968 = pneg %p534
        $region94: #{tpu_custom_call.1} parent=23 // pred_check_branch
          %970 = sbr.rel (%p968) target = $region96
        $region95: #{tpu_custom_call.1} parent=23 // pred_region
          %s971 = sand.u32 %s60, 1
          %s972 = scalar_lea.sflag [#allocation32], %s971
          %s973 = sand.u32 %s524, 1
          %s974 = scalar_lea.vmem [#allocation31], %s973
          %s976 = ssub.s32 16, 16
          %977 = vsyncadd %s972, %s976
          %s978 = smul.addr %s68, 16
          %s979 = scalar_lea.hbm %s17, %s978
          %s981 = sshll.u32 %s974, 4
          %s982 = int_to_ptr.vmem [resolvable:$true] %s981
          %984 = dma.hbm_to_vmem [thread:$0]  %s979, 16, %s982, %s972
        $region96: #{tpu_custom_call.1} parent=23 // pred_fallthru
          _
      $region24: #{tpu_custom_call.1} parent=5 // pred_fallthru
        _
      %p985 = scmp.le.s32.totalorder 1, %s60
      %p986 = scmp.lt.s32.totalorder %s60, 5
      %p987 = pnand %p985, %p986
      %p988 = pneg %p987
      // Predicated region
      $region97: #{tpu_custom_call.1} parent=5 // pred_check
        _
      $region98: #{tpu_custom_call.1} parent=5 // pred_check_branch
        %990 = sbr.rel (%p987) target = $region100
      $region99: #{tpu_custom_call.1} parent=5 // pred_region
        %s991 = ssub.s32 %s60, 1
        %s992 = sand.u32 %s85, 1
        %s993 = scalar_lea.sflag [#allocation5], %s992
        %s994 = sand.u32 %s85, 1
        %s995 = smul.addr %s994, 16
        %s996 = scalar_lea.vmem [#allocation4], %s995
        // Predicated region
        $region101: #{tpu_custom_call.1} parent=99 // pred_check
          %p997 = pneg %p98
        $region102: #{tpu_custom_call.1} parent=99 // pred_check_branch
          %999 = sbr.rel (%p997) target = $region104
        $region103: #{tpu_custom_call.1} parent=99 // pred_region
          %1000 = dma.done %s993, 256
        $region104: #{tpu_custom_call.1} parent=99 // pred_fallthru
          _
        %s1001 = sand.u32 %s65, 1
        %s1002 = scalar_lea.sflag [#allocation8], %s1001
        %s1003 = sand.u32 %s111, 1
        %s1004 = scalar_lea.vmem [#allocation7], %s1003
        // Predicated region
        $region105: #{tpu_custom_call.1} parent=99 // pred_check
          %p1005 = pneg %p124
        $region106: #{tpu_custom_call.1} parent=99 // pred_check_branch
          %1007 = sbr.rel (%p1005) target = $region108
        $region107: #{tpu_custom_call.1} parent=99 // pred_region
          %1008 = dma.done %s1002, 16
        $region108: #{tpu_custom_call.1} parent=99 // pred_fallthru
          _
        %s1009 = sand.u32 %s65, 1
        %s1010 = scalar_lea.sflag [#allocation8], %s1009
        %s1011 = sand.u32 %s137, 1
        %s1012 = smul.addr %s1011, 64
        %s1013 = scalar_lea.vmem [#allocation9], %s1012
        // Predicated region
        $region109: #{tpu_custom_call.1} parent=99 // pred_check
          %p1014 = pneg %p150
        $region110: #{tpu_custom_call.1} parent=99 // pred_check_branch
          %1016 = sbr.rel (%p1014) target = $region112
        $region111: #{tpu_custom_call.1} parent=99 // pred_region
          %1017 = dma.done %s1010, 1024
        $region112: #{tpu_custom_call.1} parent=99 // pred_fallthru
          _
        %s1018 = sand.u32 %s65, 1
        %s1019 = scalar_lea.sflag [#allocation11], %s1018
        %s1020 = sand.u32 %s163, 1
        %s1021 = scalar_lea.vmem [#allocation10], %s1020
        // Predicated region
        $region113: #{tpu_custom_call.1} parent=99 // pred_check
          %p1022 = pneg %p176
        $region114: #{tpu_custom_call.1} parent=99 // pred_check_branch
          %1024 = sbr.rel (%p1022) target = $region116
        $region115: #{tpu_custom_call.1} parent=99 // pred_region
          %1025 = dma.done %s1019, 16
        $region116: #{tpu_custom_call.1} parent=99 // pred_fallthru
          _
        %s1026 = sand.u32 %s65, 1
        %s1027 = scalar_lea.sflag [#allocation11], %s1026
        %s1028 = sand.u32 %s189, 1
        %s1029 = smul.addr %s1028, 64
        %s1030 = scalar_lea.vmem [#allocation12], %s1029
        // Predicated region
        $region117: #{tpu_custom_call.1} parent=99 // pred_check
          %p1031 = pneg %p202
        $region118: #{tpu_custom_call.1} parent=99 // pred_check_branch
          %1033 = sbr.rel (%p1031) target = $region120
        $region119: #{tpu_custom_call.1} parent=99 // pred_region
          %1034 = dma.done %s1027, 1024
        $region120: #{tpu_custom_call.1} parent=99 // pred_fallthru
          _
        %s1035 = sand.u32 %s65, 1
        %s1036 = scalar_lea.sflag [#allocation14], %s1035
        %s1037 = sand.u32 %s215, 1
        %s1038 = scalar_lea.vmem [#allocation13], %s1037
        // Predicated region
        $region121: #{tpu_custom_call.1} parent=99 // pred_check
          %p1039 = pneg %p228
        $region122: #{tpu_custom_call.1} parent=99 // pred_check_branch
          %1041 = sbr.rel (%p1039) target = $region124
        $region123: #{tpu_custom_call.1} parent=99 // pred_region
          %1042 = dma.done %s1036, 16
        $region124: #{tpu_custom_call.1} parent=99 // pred_fallthru
          _
        %s1043 = sand.u32 %s65, 1
        %s1044 = scalar_lea.sflag [#allocation14], %s1043
        %s1045 = sand.u32 %s241, 1
        %s1046 = smul.addr %s1045, 64
        %s1047 = scalar_lea.vmem [#allocation15], %s1046
        // Predicated region
        $region125: #{tpu_custom_call.1} parent=99 // pred_check
          %p1048 = pneg %p254
        $region126: #{tpu_custom_call.1} parent=99 // pred_check_branch
          %1050 = sbr.rel (%p1048) target = $region128
        $region127: #{tpu_custom_call.1} parent=99 // pred_region
          %1051 = dma.done %s1044, 1024
        $region128: #{tpu_custom_call.1} parent=99 // pred_fallthru
          _
        %s1052 = sand.u32 %s65, 1
        %s1053 = scalar_lea.sflag [#allocation17], %s1052
        %s1054 = sand.u32 %s267, 1
        %s1055 = scalar_lea.vmem [#allocation16], %s1054
        // Predicated region
        $region129: #{tpu_custom_call.1} parent=99 // pred_check
          %p1056 = pneg %p280
        $region130: #{tpu_custom_call.1} parent=99 // pred_check_branch
          %1058 = sbr.rel (%p1056) target = $region132
        $region131: #{tpu_custom_call.1} parent=99 // pred_region
          %1059 = dma.done %s1053, 16
        $region132: #{tpu_custom_call.1} parent=99 // pred_fallthru
          _
        %s1060 = sand.u32 %s65, 1
        %s1061 = scalar_lea.sflag [#allocation17], %s1060
        %s1062 = sand.u32 %s293, 1
        %s1063 = smul.addr %s1062, 64
        %s1064 = scalar_lea.vmem [#allocation18], %s1063
        // Predicated region
        $region133: #{tpu_custom_call.1} parent=99 // pred_check
          %p1065 = pneg %p306
        $region134: #{tpu_custom_call.1} parent=99 // pred_check_branch
          %1067 = sbr.rel (%p1065) target = $region136
        $region135: #{tpu_custom_call.1} parent=99 // pred_region
          %1068 = dma.done %s1061, 1024
        $region136: #{tpu_custom_call.1} parent=99 // pred_fallthru
          _
        %s1069 = sand.u32 %s65, 1
        %s1070 = scalar_lea.sflag [#allocation20], %s1069
        %s1071 = sand.u32 %s319, 1
        %s1072 = scalar_lea.vmem [#allocation19], %s1071
        // Predicated region
        $region137: #{tpu_custom_call.1} parent=99 // pred_check
          %p1073 = pneg %p332
        $region138: #{tpu_custom_call.1} parent=99 // pred_check_branch
          %1075 = sbr.rel (%p1073) target = $region140
        $region139: #{tpu_custom_call.1} parent=99 // pred_region
          %1076 = dma.done %s1070, 16
        $region140: #{tpu_custom_call.1} parent=99 // pred_fallthru
          _
        %s1077 = sand.u32 %s65, 1
        %s1078 = scalar_lea.sflag [#allocation20], %s1077
        %s1079 = sand.u32 %s345, 1
        %s1080 = smul.addr %s1079, 128
        %s1081 = scalar_lea.vmem [#allocation21], %s1080
        // Predicated region
        $region141: #{tpu_custom_call.1} parent=99 // pred_check
          %p1082 = pneg %p358
        $region142: #{tpu_custom_call.1} parent=99 // pred_check_branch
          %1084 = sbr.rel (%p1082) target = $region144
        $region143: #{tpu_custom_call.1} parent=99 // pred_region
          %1085 = dma.done %s1078, 2048
        $region144: #{tpu_custom_call.1} parent=99 // pred_fallthru
          _
        %s1086 = sand.u32 %s65, 1
        %s1087 = scalar_lea.sflag [#allocation23], %s1086
        %s1088 = sand.u32 %s371, 1
        %s1089 = smul.addr %s1088, 2
        %s1090 = scalar_lea.vmem [#allocation22], %s1089
        // Predicated region
        $region145: #{tpu_custom_call.1} parent=99 // pred_check
          %p1091 = pneg %p384
        $region146: #{tpu_custom_call.1} parent=99 // pred_check_branch
          %1093 = sbr.rel (%p1091) target = $region148
        $region147: #{tpu_custom_call.1} parent=99 // pred_region
          %1094 = dma.done %s1087, 32
        $region148: #{tpu_custom_call.1} parent=99 // pred_fallthru
          _
        %s1095 = sand.u32 %s65, 1
        %s1096 = scalar_lea.sflag [#allocation23], %s1095
        %s1097 = sand.u32 %s397, 1
        %s1098 = smul.addr %s1097, 128
        %s1099 = scalar_lea.vmem [#allocation24], %s1098
        // Predicated region
        $region149: #{tpu_custom_call.1} parent=99 // pred_check
          %p1100 = pneg %p410
        $region150: #{tpu_custom_call.1} parent=99 // pred_check_branch
          %1102 = sbr.rel (%p1100) target = $region152
        $region151: #{tpu_custom_call.1} parent=99 // pred_region
          %1103 = dma.done %s1096, 2048
        $region152: #{tpu_custom_call.1} parent=99 // pred_fallthru
          _
        %s1104 = sand.u32 %s65, 1
        %s1105 = scalar_lea.sflag [#allocation26], %s1104
        %s1106 = sand.u32 %s423, 1
        %s1107 = scalar_lea.vmem [#allocation25], %s1106
        // Predicated region
        $region153: #{tpu_custom_call.1} parent=99 // pred_check
          %p1108 = pneg %p436
        $region154: #{tpu_custom_call.1} parent=99 // pred_check_branch
          %1110 = sbr.rel (%p1108) target = $region156
        $region155: #{tpu_custom_call.1} parent=99 // pred_region
          %1111 = dma.done %s1105, 16
        $region156: #{tpu_custom_call.1} parent=99 // pred_fallthru
          _
        %s1112 = sand.u32 %s65, 1
        %s1113 = scalar_lea.sflag [#allocation26], %s1112
        %s1114 = sand.u32 %s449, 1
        %s1115 = scalar_lea.vmem [#allocation27], %s1114
        // Predicated region
        $region157: #{tpu_custom_call.1} parent=99 // pred_check
          %p1116 = pneg %p462
        $region158: #{tpu_custom_call.1} parent=99 // pred_check_branch
          %1118 = sbr.rel (%p1116) target = $region160
        $region159: #{tpu_custom_call.1} parent=99 // pred_region
          %1119 = dma.done %s1113, 16
        $region160: #{tpu_custom_call.1} parent=99 // pred_fallthru
          _
        %s1120 = sand.u32 %s65, 1
        %s1121 = scalar_lea.sflag [#allocation29], %s1120
        %s1122 = sand.u32 %s475, 1
        %s1123 = scalar_lea.vmem [#allocation28], %s1122
        // Predicated region
        $region161: #{tpu_custom_call.1} parent=99 // pred_check
          %p1124 = pneg %p488
        $region162: #{tpu_custom_call.1} parent=99 // pred_check_branch
          %1126 = sbr.rel (%p1124) target = $region164
        $region163: #{tpu_custom_call.1} parent=99 // pred_region
          %1127 = dma.done %s1121, 16
        $region164: #{tpu_custom_call.1} parent=99 // pred_fallthru
          _
        %s1128 = sand.u32 %s65, 1
        %s1129 = scalar_lea.sflag [#allocation29], %s1128
        %s1130 = sand.u32 %s501, 1
        %s1131 = scalar_lea.vmem [#allocation30], %s1130
        // Predicated region
        $region165: #{tpu_custom_call.1} parent=99 // pred_check
          %p1132 = pneg %p514
        $region166: #{tpu_custom_call.1} parent=99 // pred_check_branch
          %1134 = sbr.rel (%p1132) target = $region168
        $region167: #{tpu_custom_call.1} parent=99 // pred_region
          %1135 = dma.done %s1129, 16
        $region168: #{tpu_custom_call.1} parent=99 // pred_fallthru
          _
        %s1136 = sand.u32 %s65, 1
        %s1137 = scalar_lea.sflag [#allocation32], %s1136
        %s1138 = sand.u32 %s527, 1
        %s1139 = scalar_lea.vmem [#allocation31], %s1138
        // Predicated region
        $region169: #{tpu_custom_call.1} parent=99 // pred_check
          %p1140 = pneg %p540
        $region170: #{tpu_custom_call.1} parent=99 // pred_check_branch
          %1142 = sbr.rel (%p1140) target = $region172
        $region171: #{tpu_custom_call.1} parent=99 // pred_region
          %1143 = dma.done %s1137, 16
        $region172: #{tpu_custom_call.1} parent=99 // pred_fallthru
          _
        // Predicated region
        $region173: #{tpu_custom_call.1} parent=99 // pred_check
          %p1144 = pneg %p561
        $region174: #{tpu_custom_call.1} parent=99 // pred_check_branch
          %1146 = sbr.rel (%p1144) target = $region176
        $region175: #{tpu_custom_call.1} parent=99 // pred_region
          %1147 = dma.done [#allocation32], 16
        $region176: #{tpu_custom_call.1} parent=99 // pred_fallthru
          _
        // Predicated region
        $region177: #{tpu_custom_call.1} parent=99 // pred_check
          %p1148 = pneg %p582
        $region178: #{tpu_custom_call.1} parent=99 // pred_check_branch
          %1150 = sbr.rel (%p1148) target = $region180
        $region179: #{tpu_custom_call.1} parent=99 // pred_region
          %1151 = dma.done [#allocation35], 16
        $region180: #{tpu_custom_call.1} parent=99 // pred_fallthru
          _
        %s1152 = sand.u32 %s85, 1
        %s1153 = scalar_lea.sflag [#allocation5], %s1152
        %s1154 = sand.u32 %s85, 1
        %s1155 = smul.addr %s1154, 16
        %s1156 = scalar_lea.vmem [#allocation4], %s1155
        %p1157 = pneg %p98
        %p1158 = pneg %p95
        %s1159 = sand.u32 %s65, 1
        %s1160 = scalar_lea.sflag [#allocation8], %s1159
        %s1161 = sand.u32 %s111, 1
        %s1162 = scalar_lea.vmem [#allocation7], %s1161
        %p1163 = pneg %p124
        %p1164 = pneg %p121
        %s1165 = sand.u32 %s65, 1
        %s1166 = scalar_lea.sflag [#allocation8], %s1165
        %s1167 = sand.u32 %s137, 1
        %s1168 = smul.addr %s1167, 64
        %s1169 = scalar_lea.vmem [#allocation9], %s1168
        %p1170 = pneg %p150
        %p1171 = pneg %p147
        %s1172 = sand.u32 %s65, 1
        %s1173 = scalar_lea.sflag [#allocation11], %s1172
        %s1174 = sand.u32 %s163, 1
        %s1175 = scalar_lea.vmem [#allocation10], %s1174
        %p1176 = pneg %p176
        %p1177 = pneg %p173
        %s1178 = sand.u32 %s65, 1
        %s1179 = scalar_lea.sflag [#allocation11], %s1178
        %s1180 = sand.u32 %s189, 1
        %s1181 = smul.addr %s1180, 64
        %s1182 = scalar_lea.vmem [#allocation12], %s1181
        %p1183 = pneg %p202
        %p1184 = pneg %p199
        %s1185 = sand.u32 %s65, 1
        %s1186 = scalar_lea.sflag [#allocation14], %s1185
        %s1187 = sand.u32 %s215, 1
        %s1188 = scalar_lea.vmem [#allocation13], %s1187
        %p1189 = pneg %p228
        %p1190 = pneg %p225
        %s1191 = sand.u32 %s65, 1
        %s1192 = scalar_lea.sflag [#allocation14], %s1191
        %s1193 = sand.u32 %s241, 1
        %s1194 = smul.addr %s1193, 64
        %s1195 = scalar_lea.vmem [#allocation15], %s1194
        %p1196 = pneg %p254
        %p1197 = pneg %p251
        %s1198 = sand.u32 %s65, 1
        %s1199 = scalar_lea.sflag [#allocation17], %s1198
        %s1200 = sand.u32 %s267, 1
        %s1201 = scalar_lea.vmem [#allocation16], %s1200
        %p1202 = pneg %p280
        %p1203 = pneg %p277
        %s1204 = sand.u32 %s65, 1
        %s1205 = scalar_lea.sflag [#allocation17], %s1204
        %s1206 = sand.u32 %s293, 1
        %s1207 = smul.addr %s1206, 64
        %s1208 = scalar_lea.vmem [#allocation18], %s1207
        %p1209 = pneg %p306
        %p1210 = pneg %p303
        %s1211 = sand.u32 %s65, 1
        %s1212 = scalar_lea.sflag [#allocation20], %s1211
        %s1213 = sand.u32 %s319, 1
        %s1214 = scalar_lea.vmem [#allocation19], %s1213
        %p1215 = pneg %p332
        %p1216 = pneg %p329
        %s1217 = sand.u32 %s65, 1
        %s1218 = scalar_lea.sflag [#allocation20], %s1217
        %s1219 = sand.u32 %s345, 1
        %s1220 = smul.addr %s1219, 128
        %s1221 = scalar_lea.vmem [#allocation21], %s1220
        %p1222 = pneg %p358
        %p1223 = pneg %p355
        %s1224 = sand.u32 %s65, 1
        %s1225 = scalar_lea.sflag [#allocation23], %s1224
        %s1226 = sand.u32 %s371, 1
        %s1227 = smul.addr %s1226, 2
        %s1228 = scalar_lea.vmem [#allocation22], %s1227
        %p1229 = pneg %p384
        %p1230 = pneg %p381
        %s1231 = sand.u32 %s65, 1
        %s1232 = scalar_lea.sflag [#allocation23], %s1231
        %s1233 = sand.u32 %s397, 1
        %s1234 = smul.addr %s1233, 128
        %s1235 = scalar_lea.vmem [#allocation24], %s1234
        %p1236 = pneg %p410
        %p1237 = pneg %p407
        %s1238 = sand.u32 %s65, 1
        %s1239 = scalar_lea.sflag [#allocation26], %s1238
        %s1240 = sand.u32 %s423, 1
        %s1241 = scalar_lea.vmem [#allocation25], %s1240
        %p1242 = pneg %p436
        %p1243 = pneg %p433
        %s1244 = sand.u32 %s65, 1
        %s1245 = scalar_lea.sflag [#allocation26], %s1244
        %s1246 = sand.u32 %s449, 1
        %s1247 = scalar_lea.vmem [#allocation27], %s1246
        %p1248 = pneg %p462
        %p1249 = pneg %p459
        %s1250 = sand.u32 %s65, 1
        %s1251 = scalar_lea.sflag [#allocation29], %s1250
        %s1252 = sand.u32 %s475, 1
        %s1253 = scalar_lea.vmem [#allocation28], %s1252
        %p1254 = pneg %p488
        %p1255 = pneg %p485
        %s1256 = sand.u32 %s65, 1
        %s1257 = scalar_lea.sflag [#allocation29], %s1256
        %s1258 = sand.u32 %s501, 1
        %s1259 = scalar_lea.vmem [#allocation30], %s1258
        %p1260 = pneg %p514
        %p1261 = pneg %p511
        %s1262 = sand.u32 %s65, 1
        %s1263 = scalar_lea.sflag [#allocation32], %s1262
        %s1264 = sand.u32 %s527, 1
        %s1265 = scalar_lea.vmem [#allocation31], %s1264
        %p1266 = pneg %p540
        %p1267 = pneg %p537
        %p1268 = pneg %p561
        %p1269 = pneg %p558
        %p1270 = pneg %p582
        %p1271 = pneg %p579
        %p1272 = pneg %p608
        %p1273 = pneg %p605
        %s1274 = sand.u32 %s595, 1
        %s1275 = scalar_lea.sflag [#allocation6], %s1274
        %s1276 = sand.u32 %s595, 1
        %s1277 = smul.addr %s1276, 16
        %s1278 = scalar_lea.vmem [#allocation36], %s1277
        %p1280 = scmp.eq.s32.totalorder %s70, 0
        // Predicated region
        $region181: #{tpu_custom_call.1} parent=99 // pred_check
          %p1281 = pneg %p1280
        $region182: #{tpu_custom_call.1} parent=99 // pred_check_branch
          %1283 = sbr.rel (%p1281) target = $region184
        $region183: #{tpu_custom_call.1} parent=99 // pred_region
          %v1284 = vld [vmem:[%s996] sm:$0xff]
          %v1285 = vld [vmem:[%s996 + $0x8] sm:$0xff]
          %1286 = vst [vmem:[#allocation2] sm:$0xff] %v1284
          %1287 = vst [vmem:[#allocation2 + $0x8] sm:$0xff] %v1285
        $region184: #{tpu_custom_call.1} parent=99 // pred_fallthru
          _
        %v1288 = vld [vmem:[#allocation2] sm:$0xff]
        %v1289 = vld [vmem:[#allocation2 + $0x8] sm:$0xff]
        %v1290 = vld [vmem:[%s1004] sm:$0x1]
        %vm1291 = vcmp.eq.f32.partialorder %v1290, 0.0
        %v1292 = vsel %vm1291, -1e+09, 0.0
        %v1293 = vld [vmem:[%s1115] sm:$0x1]
        %v1294 = vld [vmem:[%s1123] sm:$0x1]
        %1295 = vadd.xlane.f32.xlu0 %v1288
        %v1296 = vpop.xlane.xlu0 %1295
        %1297 = vadd.xlane.f32.xlu0 %v1289
        %v1298 = vpop.xlane.xlu0 %1297
        %v1299 = vrcp.pop 128.0
        %v1300 = vmul.f32 %v1296, %v1299
        %v1301 = vmul.f32 %v1298, %v1299
        %v1302 = vsub.f32 %v1288, %v1300
        %v1303 = vsub.f32 %v1289, %v1301
        %v1304 = vmul.f32 %v1302, %v1302
        %v1305 = vmul.f32 %v1303, %v1303
        %1306 = vadd.xlane.f32.xlu0 %v1304
        %v1307 = vpop.xlane.xlu0 %1306
        %1308 = vadd.xlane.f32.xlu0 %v1305
        %v1309 = vpop.xlane.xlu0 %1308
        %v1310 = vmul.f32 %v1307, 0.007874016
        %v1311 = vmul.f32 %v1309, 0.007874016
        %v1312 = vrsqrt.pop %v1310
        %v1313 = vmul.f32 %v1310, %v1312
        %vm1314 = vcmp.eq.f32.partialorder %v1310, inf
        %v1315 = vsel %vm1314, %v1310, %v1313
        %vm1316 = vcmp.eq.f32.partialorder %v1310, 0.0
        %v1317 = vand.u32 %v1310, 2147483648
        %v1318 = vsel %vm1316, %v1317, %v1315
        %v1319 = vrsqrt.pop %v1311
        %v1320 = vmul.f32 %v1311, %v1319
        %vm1321 = vcmp.eq.f32.partialorder %v1311, inf
        %v1322 = vsel %vm1321, %v1311, %v1320
        %vm1323 = vcmp.eq.f32.partialorder %v1311, 0.0
        %v1324 = vand.u32 %v1311, 2147483648
        %v1325 = vsel %vm1323, %v1324, %v1322
        %v1326 = vadd.f32 %v1318, 1e-06
        %v1327 = vadd.f32 %v1325, 1e-06
        %v1328 = vrcp.pop %v1326
        %v1329 = vrcp.pop %v1327
        %v1330 = vmul.f32 %v1302, %v1328
        %v1331 = vmul.f32 %v1303, %v1329
        %v1333 = vlaneseq
        %v1334 = vshrl.u32 %v1333, 7
        %v1335 = vsub.s32 0, %v1334
        %v1336 = vrot.slane %v1293, %v1335
        %v1338 = vmul.f32 %v1330, %v1336
        %v1339 = vmul.f32 %v1331, %v1336
        %v1341 = vlaneseq
        %v1342 = vshrl.u32 %v1341, 7
        %v1343 = vsub.s32 0, %v1342
        %v1344 = vrot.slane %v1294, %v1343
        %v1346 = vadd.f32 %v1338, %v1344
        %v1347 = vadd.f32 %v1339, %v1344
        %v1348 = vpack.c.bf16 %v1347, %v1346
        %v1349 = vld [vmem:[%s1013] sm:$0xf]
        %v1350 = vld [vmem:[%s1013 + $0x4] sm:$0xf]
        %v1351 = vld [vmem:[%s1013 + $0x8] sm:$0xf]
        %v1352 = vld [vmem:[%s1013 + $0xc] sm:$0xf]
        %v1353 = vld [vmem:[%s1013 + $0x10] sm:$0xf]
        %v1354 = vld [vmem:[%s1013 + $0x14] sm:$0xf]
        %v1355 = vld [vmem:[%s1013 + $0x18] sm:$0xf]
        %v1356 = vld [vmem:[%s1013 + $0x1c] sm:$0xf]
        %v1357 = vld [vmem:[%s1013 + $0x20] sm:$0xf]
        %v1358 = vld [vmem:[%s1013 + $0x24] sm:$0xf]
        %v1359 = vld [vmem:[%s1013 + $0x28] sm:$0xf]
        %v1360 = vld [vmem:[%s1013 + $0x2c] sm:$0xf]
        %v1361 = vld [vmem:[%s1013 + $0x30] sm:$0xf]
        %v1362 = vld [vmem:[%s1013 + $0x34] sm:$0xf]
        %v1363 = vld [vmem:[%s1013 + $0x38] sm:$0xf]
        %v1364 = vld [vmem:[%s1013 + $0x3c] sm:$0xf]
        %v1365 = vld [vmem:[%s1021] sm:$0x1]
        %v1367 = vlaneseq
        %v1368 = vshrl.u32 %v1367, 7
        %v1369 = vsub.s32 0, %v1368
        %v1370 = vrot.slane %v1365, %v1369
        %v1388 = vunpack.c.l.b16 %v1349
        %v1389 = vunpack.c.l.b16 %v1350
        %v1390 = vunpack.c.l.b16 %v1351
        %v1391 = vunpack.c.l.b16 %v1352
        %v1392 = vunpack.c.l.b16 %v1353
        %v1393 = vunpack.c.l.b16 %v1354
        %v1394 = vunpack.c.l.b16 %v1355
        %v1395 = vunpack.c.l.b16 %v1356
        %v1396 = vunpack.c.l.b16 %v1357
        %v1397 = vunpack.c.l.b16 %v1358
        %v1398 = vunpack.c.l.b16 %v1359
        %v1399 = vunpack.c.l.b16 %v1360
        %v1400 = vunpack.c.l.b16 %v1361
        %v1401 = vunpack.c.l.b16 %v1362
        %v1402 = vunpack.c.l.b16 %v1363
        %v1403 = vunpack.c.l.b16 %v1364
        %v1404 = vpack.c.b16 %v1389, %v1388
        %v1405 = vpack.c.b16 %v1391, %v1390
        %v1406 = vpack.c.b16 %v1393, %v1392
        %v1407 = vpack.c.b16 %v1395, %v1394
        %v1408 = vpack.c.b16 %v1397, %v1396
        %v1409 = vpack.c.b16 %v1399, %v1398
        %v1410 = vpack.c.b16 %v1401, %v1400
        %v1411 = vpack.c.b16 %v1403, %v1402
        %1420 = vmatprep.subr.bf16.mxu0 0
        %1421 = vmatpush1.bf16.msra.mxu0 %v1404
        %1422 = vmatprep.subr.bf16.mxu0 0
        %1423 = vmatpush1.bf16.msra.mxu0 %v1405
        %1424 = vmatprep.subr.bf16.mxu0 0
        %1425 = vmatpush1.bf16.msra.mxu0 %v1406
        %1426 = vmatprep.subr.bf16.mxu0 0
        %1427 = vmatpush1.bf16.msra.mxu0 %v1407
        %1428 = vmatprep.subr.bf16.mxu0 0
        %1429 = vmatpush1.bf16.msra.mxu0 %v1408
        %1430 = vmatprep.subr.bf16.mxu0 0
        %1431 = vmatpush1.bf16.msra.mxu0 %v1409
        %1432 = vmatprep.subr.bf16.mxu0 0
        %1433 = vmatpush1.bf16.msra.mxu0 %v1410
        %1434 = vmatprep.subr.bf16.mxu0 0
        %1435 = vmatpush1.bf16.msra.mxu0 %v1411
        %1436 = vmatprep.subr.bf16.mxu0 0
        %1437 = vmatpush1.bf16.msra.mxu0 0
        %1438 = vmatprep.subr.bf16.mxu0 0
        %1439 = vmatpush1.bf16.msra.mxu0 0
        %1440 = vmatprep.subr.bf16.mxu0 0
        %1441 = vmatpush1.bf16.msra.mxu0 0
        %1442 = vmatprep.subr.bf16.mxu0 0
        %1443 = vmatpush1.bf16.msra.mxu0 0
        %1444 = vmatprep.subr.bf16.mxu0 0
        %1445 = vmatpush1.bf16.msra.mxu0 0
        %1446 = vmatprep.subr.bf16.mxu0 0
        %1447 = vmatpush1.bf16.msra.mxu0 0
        %1448 = vmatprep.subr.bf16.mxu0 0
        %1449 = vmatpush1.bf16.msra.mxu0 0
        %1450 = vmatprep.subr.bf16.mxu0 0
        %1451 = vmatpush1.bf16.msra.mxu0 0
        %1452 = vmatprep.mubr.bf16.mxu0 0
        %1453 = vmatmul.mubr.bf16.gmra.mrb[0].mxu0 %v1348
        %v1454 = vpop.f32.mrb[0].mxu0
        %v1455 = vadd.f32 %v1370, %v1454
        %v1456 = vpop.f32.mrb[0].mxu0
        %v1457 = vpop.f32.mrb[0].mxu0
        %v1458 = vadd.f32 %v1370, %v1457
        %v1459 = vpop.f32.mrb[0].mxu0
        %1460 = vdwg.mxu0
        %v1461 = vmul.f32 %v1455, 0.17677669
        %v1462 = vmul.f32 %v1458, 0.17677669
        %v1463 = vpack.c.bf16 %v1462, %v1461
        %v1464 = vld [vmem:[%s1030] sm:$0xf]
        %v1465 = vld [vmem:[%s1030 + $0x4] sm:$0xf]
        %v1466 = vld [vmem:[%s1030 + $0x8] sm:$0xf]
        %v1467 = vld [vmem:[%s1030 + $0xc] sm:$0xf]
        %v1468 = vld [vmem:[%s1030 + $0x10] sm:$0xf]
        %v1469 = vld [vmem:[%s1030 + $0x14] sm:$0xf]
        %v1470 = vld [vmem:[%s1030 + $0x18] sm:$0xf]
        %v1471 = vld [vmem:[%s1030 + $0x1c] sm:$0xf]
        %v1472 = vld [vmem:[%s1030 + $0x20] sm:$0xf]
        %v1473 = vld [vmem:[%s1030 + $0x24] sm:$0xf]
        %v1474 = vld [vmem:[%s1030 + $0x28] sm:$0xf]
        %v1475 = vld [vmem:[%s1030 + $0x2c] sm:$0xf]
        %v1476 = vld [vmem:[%s1030 + $0x30] sm:$0xf]
        %v1477 = vld [vmem:[%s1030 + $0x34] sm:$0xf]
        %v1478 = vld [vmem:[%s1030 + $0x38] sm:$0xf]
        %v1479 = vld [vmem:[%s1030 + $0x3c] sm:$0xf]
        %v1480 = vld [vmem:[%s1038] sm:$0x1]
        %v1482 = vlaneseq
        %v1483 = vshrl.u32 %v1482, 7
        %v1484 = vsub.s32 0, %v1483
        %v1485 = vrot.slane %v1480, %v1484
        %v1503 = vunpack.c.l.b16 %v1464
        %v1504 = vunpack.c.l.b16 %v1465
        %v1505 = vunpack.c.l.b16 %v1466
        %v1506 = vunpack.c.l.b16 %v1467
        %v1507 = vunpack.c.l.b16 %v1468
        %v1508 = vunpack.c.l.b16 %v1469
        %v1509 = vunpack.c.l.b16 %v1470
        %v1510 = vunpack.c.l.b16 %v1471
        %v1511 = vunpack.c.l.b16 %v1472
        %v1512 = vunpack.c.l.b16 %v1473
        %v1513 = vunpack.c.l.b16 %v1474
        %v1514 = vunpack.c.l.b16 %v1475
        %v1515 = vunpack.c.l.b16 %v1476
        %v1516 = vunpack.c.l.b16 %v1477
        %v1517 = vunpack.c.l.b16 %v1478
        %v1518 = vunpack.c.l.b16 %v1479
        %v1519 = vpack.c.b16 %v1504, %v1503
        %v1520 = vpack.c.b16 %v1506, %v1505
        %v1521 = vpack.c.b16 %v1508, %v1507
        %v1522 = vpack.c.b16 %v1510, %v1509
        %v1523 = vpack.c.b16 %v1512, %v1511
        %v1524 = vpack.c.b16 %v1514, %v1513
        %v1525 = vpack.c.b16 %v1516, %v1515
        %v1526 = vpack.c.b16 %v1518, %v1517
        %1535 = vmatprep.subr.bf16.mxu0 0
        %1536 = vmatpush1.bf16.msra.mxu0 %v1519
        %1537 = vmatprep.subr.bf16.mxu0 0
        %1538 = vmatpush1.bf16.msra.mxu0 %v1520
        %1539 = vmatprep.subr.bf16.mxu0 0
        %1540 = vmatpush1.bf16.msra.mxu0 %v1521
        %1541 = vmatprep.subr.bf16.mxu0 0
        %1542 = vmatpush1.bf16.msra.mxu0 %v1522
        %1543 = vmatprep.subr.bf16.mxu0 0
        %1544 = vmatpush1.bf16.msra.mxu0 %v1523
        %1545 = vmatprep.subr.bf16.mxu0 0
        %1546 = vmatpush1.bf16.msra.mxu0 %v1524
        %1547 = vmatprep.subr.bf16.mxu0 0
        %1548 = vmatpush1.bf16.msra.mxu0 %v1525
        %1549 = vmatprep.subr.bf16.mxu0 0
        %1550 = vmatpush1.bf16.msra.mxu0 %v1526
        %1551 = vmatprep.subr.bf16.mxu0 0
        %1552 = vmatpush1.bf16.msra.mxu0 0
        %1553 = vmatprep.subr.bf16.mxu0 0
        %1554 = vmatpush1.bf16.msra.mxu0 0
        %1555 = vmatprep.subr.bf16.mxu0 0
        %1556 = vmatpush1.bf16.msra.mxu0 0
        %1557 = vmatprep.subr.bf16.mxu0 0
        %1558 = vmatpush1.bf16.msra.mxu0 0
        %1559 = vmatprep.subr.bf16.mxu0 0
        %1560 = vmatpush1.bf16.msra.mxu0 0
        %1561 = vmatprep.subr.bf16.mxu0 0
        %1562 = vmatpush1.bf16.msra.mxu0 0
        %1563 = vmatprep.subr.bf16.mxu0 0
        %1564 = vmatpush1.bf16.msra.mxu0 0
        %1565 = vmatprep.subr.bf16.mxu0 0
        %1566 = vmatpush1.bf16.msra.mxu0 0
        %1567 = vmatprep.mubr.bf16.mxu0 0
        %1568 = vmatmul.mubr.bf16.gmra.mrb[0].mxu0 %v1348
        %v1569 = vpop.f32.mrb[0].mxu0
        %v1570 = vadd.f32 %v1485, %v1569
        %v1571 = vpop.f32.mrb[0].mxu0
        %v1572 = vpop.f32.mrb[0].mxu0
        %v1573 = vadd.f32 %v1485, %v1572
        %v1574 = vpop.f32.mrb[0].mxu0
        %1575 = vdwg.mxu0
        %v1576 = vpack.c.bf16 %v1573, %v1570
        %v1577 = vld [vmem:[%s1047] sm:$0xf]
        %v1578 = vld [vmem:[%s1047 + $0x4] sm:$0xf]
        %v1579 = vld [vmem:[%s1047 + $0x8] sm:$0xf]
        %v1580 = vld [vmem:[%s1047 + $0xc] sm:$0xf]
        %v1581 = vld [vmem:[%s1047 + $0x10] sm:$0xf]
        %v1582 = vld [vmem:[%s1047 + $0x14] sm:$0xf]
        %v1583 = vld [vmem:[%s1047 + $0x18] sm:$0xf]
        %v1584 = vld [vmem:[%s1047 + $0x1c] sm:$0xf]
        %v1585 = vld [vmem:[%s1047 + $0x20] sm:$0xf]
        %v1586 = vld [vmem:[%s1047 + $0x24] sm:$0xf]
        %v1587 = vld [vmem:[%s1047 + $0x28] sm:$0xf]
        %v1588 = vld [vmem:[%s1047 + $0x2c] sm:$0xf]
        %v1589 = vld [vmem:[%s1047 + $0x30] sm:$0xf]
        %v1590 = vld [vmem:[%s1047 + $0x34] sm:$0xf]
        %v1591 = vld [vmem:[%s1047 + $0x38] sm:$0xf]
        %v1592 = vld [vmem:[%s1047 + $0x3c] sm:$0xf]
        %v1593 = vld [vmem:[%s1055] sm:$0x1]
        %v1595 = vlaneseq
        %v1596 = vshrl.u32 %v1595, 7
        %v1597 = vsub.s32 0, %v1596
        %v1598 = vrot.slane %v1593, %v1597
        %v1616 = vunpack.c.l.b16 %v1577
        %v1617 = vunpack.c.l.b16 %v1578
        %v1618 = vunpack.c.l.b16 %v1579
        %v1619 = vunpack.c.l.b16 %v1580
        %v1620 = vunpack.c.l.b16 %v1581
        %v1621 = vunpack.c.l.b16 %v1582
        %v1622 = vunpack.c.l.b16 %v1583
        %v1623 = vunpack.c.l.b16 %v1584
        %v1624 = vunpack.c.l.b16 %v1585
        %v1625 = vunpack.c.l.b16 %v1586
        %v1626 = vunpack.c.l.b16 %v1587
        %v1627 = vunpack.c.l.b16 %v1588
        %v1628 = vunpack.c.l.b16 %v1589
        %v1629 = vunpack.c.l.b16 %v1590
        %v1630 = vunpack.c.l.b16 %v1591
        %v1631 = vunpack.c.l.b16 %v1592
        %v1632 = vpack.c.b16 %v1617, %v1616
        %v1633 = vpack.c.b16 %v1619, %v1618
        %v1634 = vpack.c.b16 %v1621, %v1620
        %v1635 = vpack.c.b16 %v1623, %v1622
        %v1636 = vpack.c.b16 %v1625, %v1624
        %v1637 = vpack.c.b16 %v1627, %v1626
        %v1638 = vpack.c.b16 %v1629, %v1628
        %v1639 = vpack.c.b16 %v1631, %v1630
        %1648 = vmatprep.subr.bf16.mxu0 0
        %1649 = vmatpush1.bf16.msra.mxu0 %v1632
        %1650 = vmatprep.subr.bf16.mxu0 0
        %1651 = vmatpush1.bf16.msra.mxu0 %v1633
        %1652 = vmatprep.subr.bf16.mxu0 0
        %1653 = vmatpush1.bf16.msra.mxu0 %v1634
        %1654 = vmatprep.subr.bf16.mxu0 0
        %1655 = vmatpush1.bf16.msra.mxu0 %v1635
        %1656 = vmatprep.subr.bf16.mxu0 0
        %1657 = vmatpush1.bf16.msra.mxu0 %v1636
        %1658 = vmatprep.subr.bf16.mxu0 0
        %1659 = vmatpush1.bf16.msra.mxu0 %v1637
        %1660 = vmatprep.subr.bf16.mxu0 0
        %1661 = vmatpush1.bf16.msra.mxu0 %v1638
        %1662 = vmatprep.subr.bf16.mxu0 0
        %1663 = vmatpush1.bf16.msra.mxu0 %v1639
        %1664 = vmatprep.subr.bf16.mxu0 0
        %1665 = vmatpush1.bf16.msra.mxu0 0
        %1666 = vmatprep.subr.bf16.mxu0 0
        %1667 = vmatpush1.bf16.msra.mxu0 0
        %1668 = vmatprep.subr.bf16.mxu0 0
        %1669 = vmatpush1.bf16.msra.mxu0 0
        %1670 = vmatprep.subr.bf16.mxu0 0
        %1671 = vmatpush1.bf16.msra.mxu0 0
        %1672 = vmatprep.subr.bf16.mxu0 0
        %1673 = vmatpush1.bf16.msra.mxu0 0
        %1674 = vmatprep.subr.bf16.mxu0 0
        %1675 = vmatpush1.bf16.msra.mxu0 0
        %1676 = vmatprep.subr.bf16.mxu0 0
        %1677 = vmatpush1.bf16.msra.mxu0 0
        %1678 = vmatprep.subr.bf16.mxu0 0
        %1679 = vmatpush1.bf16.msra.mxu0 0
        %1680 = vmatprep.mubr.bf16.mxu0 0
        %1681 = vmatmul.mubr.bf16.gmra.mrb[0].mxu0 %v1348
        %v1682 = vpop.f32.mrb[0].mxu0
        %v1683 = vadd.f32 %v1598, %v1682
        %v1684 = vpop.f32.mrb[0].mxu0
        %v1685 = vpop.f32.mrb[0].mxu0
        %v1686 = vadd.f32 %v1598, %v1685
        %v1687 = vpop.f32.mrb[0].mxu0
        %1688 = vdwg.mxu0
        %v1689 = vpack.c.bf16 %v1686, %v1683
        %v1691 = vlaneseq
        %v1692 = vshrl.u32 %v1691, 7
        %v1693 = vsub.s32 0, %v1692
        %v1694 = vrot.slane %v1292, %v1693
        %vm1696 = vcmask 261120
        %v1698 = vsel %vm1696, %v1463, 0
        %v1701 = vsel %vm1696, %v1576, 0
        %1703 = vmatprep.subr.bf16.mxu0 0
        %1704 = vmatpush1.bf16.xpose.msra.mxu0 %v1701
        %1705 = vmatprep.subr.bf16.mxu0 0
        %1706 = vmatpush1.bf16.xpose.msra.mxu0 0
        %1707 = vmatprep.subr.bf16.mxu0 0
        %1708 = vmatpush1.bf16.xpose.msra.mxu0 0
        %1709 = vmatprep.subr.bf16.mxu0 0
        %1710 = vmatpush1.bf16.xpose.msra.mxu0 0
        %1711 = vmatprep.subr.bf16.mxu0 0
        %1712 = vmatpush1.bf16.xpose.msra.mxu0 0
        %1713 = vmatprep.subr.bf16.mxu0 0
        %1714 = vmatpush1.bf16.xpose.msra.mxu0 0
        %1715 = vmatprep.subr.bf16.mxu0 0
        %1716 = vmatpush1.bf16.xpose.msra.mxu0 0
        %1717 = vmatprep.subr.bf16.mxu0 0
        %1718 = vmatpush1.bf16.xpose.msra.mxu0 0
        %1719 = vmatprep.subr.bf16.mxu0 0
        %1720 = vmatpush1.bf16.xpose.msra.mxu0 0
        %1721 = vmatprep.subr.bf16.mxu0 0
        %1722 = vmatpush1.bf16.xpose.msra.mxu0 0
        %1723 = vmatprep.subr.bf16.mxu0 0
        %1724 = vmatpush1.bf16.xpose.msra.mxu0 0
        %1725 = vmatprep.subr.bf16.mxu0 0
        %1726 = vmatpush1.bf16.xpose.msra.mxu0 0
        %1727 = vmatprep.subr.bf16.mxu0 0
        %1728 = vmatpush1.bf16.xpose.msra.mxu0 0
        %1729 = vmatprep.subr.bf16.mxu0 0
        %1730 = vmatpush1.bf16.xpose.msra.mxu0 0
        %1731 = vmatprep.subr.bf16.mxu0 0
        %1732 = vmatpush1.bf16.xpose.msra.mxu0 0
        %1733 = vmatprep.subr.bf16.mxu0 0
        %1734 = vmatpush1.bf16.xpose.msra.mxu0 0
        %1735 = vmatprep.mubr.bf16.mxu0 0
        %1736 = vmatmul.mubr.bf16.gmra.mrb[0].mxu0 %v1698
        %v1737 = vpop.f32.mrb[0].mxu0
        %v1738 = vadd.f32 %v1694, %v1737
        %v1739 = vpop.f32.mrb[0].mxu0
        %v1740 = vpop.f32.mrb[0].mxu0
        %v1741 = vadd.f32 %v1694, %v1740
        %v1742 = vpop.f32.mrb[0].mxu0
        %1743 = vdwg.mxu0
        %vm1744 = vcmask 130048
        %v1745 = vsel %vm1744, %v1738, -inf
        %1746 = vmax.xlane.f32.xlu0 %v1745
        %v1747 = vpop.xlane.xlu0 %1746
        %v1748 = vsel %vm1744, %v1741, -inf
        %1749 = vmax.xlane.f32.xlu0 %v1748
        %v1750 = vpop.xlane.xlu0 %1749
        %v1751 = vsub.f32 %v1738, %v1747
        %v1752 = vsub.f32 %v1741, %v1750
        %v1753 = vmul.f32 %v1751, 1.442695
        %v1754 = vpow.pop %v1753
        %v1755 = vmul.f32 %v1752, 1.442695
        %v1756 = vpow.pop %v1755
        %v1757 = vsel %vm1744, %v1754, 0.0
        %1758 = vadd.xlane.f32.xlu0 %v1757
        %v1759 = vpop.xlane.xlu0 %1758
        %v1760 = vsel %vm1744, %v1756, 0.0
        %1761 = vadd.xlane.f32.xlu0 %v1760
        %v1762 = vpop.xlane.xlu0 %1761
        %v1763 = vrcp.pop %v1759
        %v1764 = vrcp.pop %v1762
        %v1765 = vmul.f32 %v1754, %v1763
        %v1766 = vmul.f32 %v1756, %v1764
        %v1767 = vpack.c.bf16 %v1766, %v1765
        %v1769 = vsel %vm1744, %v1767, 0
        %1771 = vmatprep.subr.bf16.mxu0 0
        %1772 = vmatpush1.bf16.msra.mxu0 %v1689
        %1773 = vmatprep.subr.bf16.mxu0 0
        %1774 = vmatpush1.bf16.msra.mxu0 0
        %1775 = vmatprep.subr.bf16.mxu0 0
        %1776 = vmatpush1.bf16.msra.mxu0 0
        %1777 = vmatprep.subr.bf16.mxu0 0
        %1778 = vmatpush1.bf16.msra.mxu0 0
        %1779 = vmatprep.subr.bf16.mxu0 0
        %1780 = vmatpush1.bf16.msra.mxu0 0
        %1781 = vmatprep.subr.bf16.mxu0 0
        %1782 = vmatpush1.bf16.msra.mxu0 0
        %1783 = vmatprep.subr.bf16.mxu0 0
        %1784 = vmatpush1.bf16.msra.mxu0 0
        %1785 = vmatprep.subr.bf16.mxu0 0
        %1786 = vmatpush1.bf16.msra.mxu0 0
        %1787 = vmatprep.subr.bf16.mxu0 0
        %1788 = vmatpush1.bf16.msra.mxu0 0
        %1789 = vmatprep.subr.bf16.mxu0 0
        %1790 = vmatpush1.bf16.msra.mxu0 0
        %1791 = vmatprep.subr.bf16.mxu0 0
        %1792 = vmatpush1.bf16.msra.mxu0 0
        %1793 = vmatprep.subr.bf16.mxu0 0
        %1794 = vmatpush1.bf16.msra.mxu0 0
        %1795 = vmatprep.subr.bf16.mxu0 0
        %1796 = vmatpush1.bf16.msra.mxu0 0
        %1797 = vmatprep.subr.bf16.mxu0 0
        %1798 = vmatpush1.bf16.msra.mxu0 0
        %1799 = vmatprep.subr.bf16.mxu0 0
        %1800 = vmatpush1.bf16.msra.mxu0 0
        %1801 = vmatprep.subr.bf16.mxu0 0
        %1802 = vmatpush1.bf16.msra.mxu0 0
        %1803 = vmatprep.mubr.bf16.mxu0 0
        %1804 = vmatmul.mubr.bf16.gmra.mrb[0].mxu0 %v1769
        %v1805 = vpop.f32.mrb[0].mxu0
        %v1806 = vadd.f32 0.0, %v1805
        %v1807 = vpop.f32.mrb[0].mxu0
        %v1808 = vpop.f32.mrb[0].mxu0
        %v1809 = vadd.f32 0.0, %v1808
        %v1810 = vpop.f32.mrb[0].mxu0
        %1811 = vdwg.mxu0
        %v1812 = vpack.c.bf16 %v1809, %v1806
        %1813 = vst.msk [vmem:[#allocation3] sm:$0xff] %vm1696, %v1812
        %1815 = vrot.lane.b32.xlu0 %v1463, 96
        %v1816 = vpop.permute.xlu0 %1815
        %1818 = vrot.lane.b32.xlu0 %v1576, 96
        %v1819 = vpop.permute.xlu0 %1818
        %v1821 = vsel %vm1696, %v1816, 0
        %v1824 = vsel %vm1696, %v1819, 0
        %1826 = vmatprep.subr.bf16.mxu0 0
        %1827 = vmatpush1.bf16.xpose.msra.mxu0 %v1824
        %1828 = vmatprep.subr.bf16.mxu0 0
        %1829 = vmatpush1.bf16.xpose.msra.mxu0 0
        %1830 = vmatprep.subr.bf16.mxu0 0
        %1831 = vmatpush1.bf16.xpose.msra.mxu0 0
        %1832 = vmatprep.subr.bf16.mxu0 0
        %1833 = vmatpush1.bf16.xpose.msra.mxu0 0
        %1834 = vmatprep.subr.bf16.mxu0 0
        %1835 = vmatpush1.bf16.xpose.msra.mxu0 0
        %1836 = vmatprep.subr.bf16.mxu0 0
        %1837 = vmatpush1.bf16.xpose.msra.mxu0 0
        %1838 = vmatprep.subr.bf16.mxu0 0
        %1839 = vmatpush1.bf16.xpose.msra.mxu0 0
        %1840 = vmatprep.subr.bf16.mxu0 0
        %1841 = vmatpush1.bf16.xpose.msra.mxu0 0
        %1842 = vmatprep.subr.bf16.mxu0 0
        %1843 = vmatpush1.bf16.xpose.msra.mxu0 0
        %1844 = vmatprep.subr.bf16.mxu0 0
        %1845 = vmatpush1.bf16.xpose.msra.mxu0 0
        %1846 = vmatprep.subr.bf16.mxu0 0
        %1847 = vmatpush1.bf16.xpose.msra.mxu0 0
        %1848 = vmatprep.subr.bf16.mxu0 0
        %1849 = vmatpush1.bf16.xpose.msra.mxu0 0
        %1850 = vmatprep.subr.bf16.mxu0 0
        %1851 = vmatpush1.bf16.xpose.msra.mxu0 0
        %1852 = vmatprep.subr.bf16.mxu0 0
        %1853 = vmatpush1.bf16.xpose.msra.mxu0 0
        %1854 = vmatprep.subr.bf16.mxu0 0
        %1855 = vmatpush1.bf16.xpose.msra.mxu0 0
        %1856 = vmatprep.subr.bf16.mxu0 0
        %1857 = vmatpush1.bf16.xpose.msra.mxu0 0
        %1858 = vmatprep.mubr.bf16.mxu0 0
        %1859 = vmatmul.mubr.bf16.gmra.mrb[0].mxu0 %v1821
        %v1860 = vpop.f32.mrb[0].mxu0
        %v1861 = vadd.f32 %v1694, %v1860
        %v1862 = vpop.f32.mrb[0].mxu0
        %v1863 = vpop.f32.mrb[0].mxu0
        %v1864 = vadd.f32 %v1694, %v1863
        %v1865 = vpop.f32.mrb[0].mxu0
        %1866 = vdwg.mxu0
        %v1867 = vsel %vm1744, %v1861, -inf
        %1868 = vmax.xlane.f32.xlu0 %v1867
        %v1869 = vpop.xlane.xlu0 %1868
        %v1870 = vsel %vm1744, %v1864, -inf
        %1871 = vmax.xlane.f32.xlu0 %v1870
        %v1872 = vpop.xlane.xlu0 %1871
        %v1873 = vsub.f32 %v1861, %v1869
        %v1874 = vsub.f32 %v1864, %v1872
        %v1875 = vmul.f32 %v1873, 1.442695
        %v1876 = vpow.pop %v1875
        %v1877 = vmul.f32 %v1874, 1.442695
        %v1878 = vpow.pop %v1877
        %v1879 = vsel %vm1744, %v1876, 0.0
        %1880 = vadd.xlane.f32.xlu0 %v1879
        %v1881 = vpop.xlane.xlu0 %1880
        %v1882 = vsel %vm1744, %v1878, 0.0
        %1883 = vadd.xlane.f32.xlu0 %v1882
        %v1884 = vpop.xlane.xlu0 %1883
        %v1885 = vrcp.pop %v1881
        %v1886 = vrcp.pop %v1884
        %v1887 = vmul.f32 %v1876, %v1885
        %v1888 = vmul.f32 %v1878, %v1886
        %v1889 = vpack.c.bf16 %v1888, %v1887
        %1891 = vrot.lane.b32.xlu0 %v1689, 96
        %v1892 = vpop.permute.xlu0 %1891
        %v1895 = vsel %vm1744, %v1889, 0
        %1897 = vmatprep.subr.bf16.mxu0 0
        %1898 = vmatpush1.bf16.msra.mxu0 %v1892
        %1899 = vmatprep.subr.bf16.mxu0 0
        %1900 = vmatpush1.bf16.msra.mxu0 0
        %1901 = vmatprep.subr.bf16.mxu0 0
        %1902 = vmatpush1.bf16.msra.mxu0 0
        %1903 = vmatprep.subr.bf16.mxu0 0
        %1904 = vmatpush1.bf16.msra.mxu0 0
        %1905 = vmatprep.subr.bf16.mxu0 0
        %1906 = vmatpush1.bf16.msra.mxu0 0
        %1907 = vmatprep.subr.bf16.mxu0 0
        %1908 = vmatpush1.bf16.msra.mxu0 0
        %1909 = vmatprep.subr.bf16.mxu0 0
        %1910 = vmatpush1.bf16.msra.mxu0 0
        %1911 = vmatprep.subr.bf16.mxu0 0
        %1912 = vmatpush1.bf16.msra.mxu0 0
        %1913 = vmatprep.subr.bf16.mxu0 0
        %1914 = vmatpush1.bf16.msra.mxu0 0
        %1915 = vmatprep.subr.bf16.mxu0 0
        %1916 = vmatpush1.bf16.msra.mxu0 0
        %1917 = vmatprep.subr.bf16.mxu0 0
        %1918 = vmatpush1.bf16.msra.mxu0 0
        %1919 = vmatprep.subr.bf16.mxu0 0
        %1920 = vmatpush1.bf16.msra.mxu0 0
        %1921 = vmatprep.subr.bf16.mxu0 0
        %1922 = vmatpush1.bf16.msra.mxu0 0
        %1923 = vmatprep.subr.bf16.mxu0 0
        %1924 = vmatpush1.bf16.msra.mxu0 0
        %1925 = vmatprep.subr.bf16.mxu0 0
        %1926 = vmatpush1.bf16.msra.mxu0 0
        %1927 = vmatprep.subr.bf16.mxu0 0
        %1928 = vmatpush1.bf16.msra.mxu0 0
        %1929 = vmatprep.mubr.bf16.mxu0 0
        %1930 = vmatmul.mubr.bf16.gmra.mrb[0].mxu0 %v1895
        %v1931 = vpop.f32.mrb[0].mxu0
        %v1932 = vadd.f32 0.0, %v1931
        %v1933 = vpop.f32.mrb[0].mxu0
        %v1934 = vpop.f32.mrb[0].mxu0
        %v1935 = vadd.f32 0.0, %v1934
        %v1936 = vpop.f32.mrb[0].mxu0
        %1937 = vdwg.mxu0
        %v1938 = vpack.c.bf16 %v1935, %v1932
        %1940 = vrot.lane.b32.xlu0 %v1938, 32
        %v1941 = vpop.permute.xlu0 %1940
        %vm1943 = vcmask 523520
        %1944 = vst.msk [vmem:[#allocation3] sm:$0xff] %vm1943, %v1941
        %1945 = vrot.lane.b32.xlu0 %v1463, 64
        %v1946 = vpop.permute.xlu0 %1945
        %1947 = vrot.lane.b32.xlu0 %v1576, 64
        %v1948 = vpop.permute.xlu0 %1947
        %v1950 = vsel %vm1696, %v1946, 0
        %v1953 = vsel %vm1696, %v1948, 0
        %1955 = vmatprep.subr.bf16.mxu0 0
        %1956 = vmatpush1.bf16.xpose.msra.mxu0 %v1953
        %1957 = vmatprep.subr.bf16.mxu0 0
        %1958 = vmatpush1.bf16.xpose.msra.mxu0 0
        %1959 = vmatprep.subr.bf16.mxu0 0
        %1960 = vmatpush1.bf16.xpose.msra.mxu0 0
        %1961 = vmatprep.subr.bf16.mxu0 0
        %1962 = vmatpush1.bf16.xpose.msra.mxu0 0
        %1963 = vmatprep.subr.bf16.mxu0 0
        %1964 = vmatpush1.bf16.xpose.msra.mxu0 0
        %1965 = vmatprep.subr.bf16.mxu0 0
        %1966 = vmatpush1.bf16.xpose.msra.mxu0 0
        %1967 = vmatprep.subr.bf16.mxu0 0
        %1968 = vmatpush1.bf16.xpose.msra.mxu0 0
        %1969 = vmatprep.subr.bf16.mxu0 0
        %1970 = vmatpush1.bf16.xpose.msra.mxu0 0
        %1971 = vmatprep.subr.bf16.mxu0 0
        %1972 = vmatpush1.bf16.xpose.msra.mxu0 0
        %1973 = vmatprep.subr.bf16.mxu0 0
        %1974 = vmatpush1.bf16.xpose.msra.mxu0 0
        %1975 = vmatprep.subr.bf16.mxu0 0
        %1976 = vmatpush1.bf16.xpose.msra.mxu0 0
        %1977 = vmatprep.subr.bf16.mxu0 0
        %1978 = vmatpush1.bf16.xpose.msra.mxu0 0
        %1979 = vmatprep.subr.bf16.mxu0 0
        %1980 = vmatpush1.bf16.xpose.msra.mxu0 0
        %1981 = vmatprep.subr.bf16.mxu0 0
        %1982 = vmatpush1.bf16.xpose.msra.mxu0 0
        %1983 = vmatprep.subr.bf16.mxu0 0
        %1984 = vmatpush1.bf16.xpose.msra.mxu0 0
        %1985 = vmatprep.subr.bf16.mxu0 0
        %1986 = vmatpush1.bf16.xpose.msra.mxu0 0
        %1987 = vmatprep.mubr.bf16.mxu0 0
        %1988 = vmatmul.mubr.bf16.gmra.mrb[0].mxu0 %v1950
        %v1989 = vpop.f32.mrb[0].mxu0
        %v1990 = vadd.f32 %v1694, %v1989
        %v1991 = vpop.f32.mrb[0].mxu0
        %v1992 = vpop.f32.mrb[0].mxu0
        %v1993 = vadd.f32 %v1694, %v1992
        %v1994 = vpop.f32.mrb[0].mxu0
        %1995 = vdwg.mxu0
        %v1996 = vsel %vm1744, %v1990, -inf
        %1997 = vmax.xlane.f32.xlu0 %v1996
        %v1998 = vpop.xlane.xlu0 %1997
        %v1999 = vsel %vm1744, %v1993, -inf
        %2000 = vmax.xlane.f32.xlu0 %v1999
        %v2001 = vpop.xlane.xlu0 %2000
        %v2002 = vsub.f32 %v1990, %v1998
        %v2003 = vsub.f32 %v1993, %v2001
        %v2004 = vmul.f32 %v2002, 1.442695
        %v2005 = vpow.pop %v2004
        %v2006 = vmul.f32 %v2003, 1.442695
        %v2007 = vpow.pop %v2006
        %v2008 = vsel %vm1744, %v2005, 0.0
        %2009 = vadd.xlane.f32.xlu0 %v2008
        %v2010 = vpop.xlane.xlu0 %2009
        %v2011 = vsel %vm1744, %v2007, 0.0
        %2012 = vadd.xlane.f32.xlu0 %v2011
        %v2013 = vpop.xlane.xlu0 %2012
        %v2014 = vrcp.pop %v2010
        %v2015 = vrcp.pop %v2013
        %v2016 = vmul.f32 %v2005, %v2014
        %v2017 = vmul.f32 %v2007, %v2015
        %v2018 = vpack.c.bf16 %v2017, %v2016
        %2019 = vrot.lane.b32.xlu0 %v1689, 64
        %v2020 = vpop.permute.xlu0 %2019
        %v2023 = vsel %vm1744, %v2018, 0
        %2025 = vmatprep.subr.bf16.mxu0 0
        %2026 = vmatpush1.bf16.msra.mxu0 %v2020
        %2027 = vmatprep.subr.bf16.mxu0 0
        %2028 = vmatpush1.bf16.msra.mxu0 0
        %2029 = vmatprep.subr.bf16.mxu0 0
        %2030 = vmatpush1.bf16.msra.mxu0 0
        %2031 = vmatprep.subr.bf16.mxu0 0
        %2032 = vmatpush1.bf16.msra.mxu0 0
        %2033 = vmatprep.subr.bf16.mxu0 0
        %2034 = vmatpush1.bf16.msra.mxu0 0
        %2035 = vmatprep.subr.bf16.mxu0 0
        %2036 = vmatpush1.bf16.msra.mxu0 0
        %2037 = vmatprep.subr.bf16.mxu0 0
        %2038 = vmatpush1.bf16.msra.mxu0 0
        %2039 = vmatprep.subr.bf16.mxu0 0
        %2040 = vmatpush1.bf16.msra.mxu0 0
        %2041 = vmatprep.subr.bf16.mxu0 0
        %2042 = vmatpush1.bf16.msra.mxu0 0
        %2043 = vmatprep.subr.bf16.mxu0 0
        %2044 = vmatpush1.bf16.msra.mxu0 0
        %2045 = vmatprep.subr.bf16.mxu0 0
        %2046 = vmatpush1.bf16.msra.mxu0 0
        %2047 = vmatprep.subr.bf16.mxu0 0
        %2048 = vmatpush1.bf16.msra.mxu0 0
        %2049 = vmatprep.subr.bf16.mxu0 0
        %2050 = vmatpush1.bf16.msra.mxu0 0
        %2051 = vmatprep.subr.bf16.mxu0 0
        %2052 = vmatpush1.bf16.msra.mxu0 0
        %2053 = vmatprep.subr.bf16.mxu0 0
        %2054 = vmatpush1.bf16.msra.mxu0 0
        %2055 = vmatprep.subr.bf16.mxu0 0
        %2056 = vmatpush1.bf16.msra.mxu0 0
        %2057 = vmatprep.mubr.bf16.mxu0 0
        %2058 = vmatmul.mubr.bf16.gmra.mrb[0].mxu0 %v2023
        %v2059 = vpop.f32.mrb[0].mxu0
        %v2060 = vadd.f32 0.0, %v2059
        %v2061 = vpop.f32.mrb[0].mxu0
        %v2062 = vpop.f32.mrb[0].mxu0
        %v2063 = vadd.f32 0.0, %v2062
        %v2064 = vpop.f32.mrb[0].mxu0
        %2065 = vdwg.mxu0
        %v2066 = vpack.c.bf16 %v2063, %v2060
        %2068 = vrot.lane.b32.xlu0 %v2066, 64
        %v2069 = vpop.permute.xlu0 %2068
        %vm2071 = vcmask 785920
        %2072 = vst.msk [vmem:[#allocation3] sm:$0xff] %vm2071, %v2069
        %2073 = vrot.lane.b32.xlu0 %v1463, 32
        %v2074 = vpop.permute.xlu0 %2073
        %2075 = vrot.lane.b32.xlu0 %v1576, 32
        %v2076 = vpop.permute.xlu0 %2075
        %v2078 = vsel %vm1696, %v2074, 0
        %v2081 = vsel %vm1696, %v2076, 0
        %2083 = vmatprep.subr.bf16.mxu0 0
        %2084 = vmatpush1.bf16.xpose.msra.mxu0 %v2081
        %2085 = vmatprep.subr.bf16.mxu0 0
        %2086 = vmatpush1.bf16.xpose.msra.mxu0 0
        %2087 = vmatprep.subr.bf16.mxu0 0
        %2088 = vmatpush1.bf16.xpose.msra.mxu0 0
        %2089 = vmatprep.subr.bf16.mxu0 0
        %2090 = vmatpush1.bf16.xpose.msra.mxu0 0
        %2091 = vmatprep.subr.bf16.mxu0 0
        %2092 = vmatpush1.bf16.xpose.msra.mxu0 0
        %2093 = vmatprep.subr.bf16.mxu0 0
        %2094 = vmatpush1.bf16.xpose.msra.mxu0 0
        %2095 = vmatprep.subr.bf16.mxu0 0
        %2096 = vmatpush1.bf16.xpose.msra.mxu0 0
        %2097 = vmatprep.subr.bf16.mxu0 0
        %2098 = vmatpush1.bf16.xpose.msra.mxu0 0
        %2099 = vmatprep.subr.bf16.mxu0 0
        %2100 = vmatpush1.bf16.xpose.msra.mxu0 0
        %2101 = vmatprep.subr.bf16.mxu0 0
        %2102 = vmatpush1.bf16.xpose.msra.mxu0 0
        %2103 = vmatprep.subr.bf16.mxu0 0
        %2104 = vmatpush1.bf16.xpose.msra.mxu0 0
        %2105 = vmatprep.subr.bf16.mxu0 0
        %2106 = vmatpush1.bf16.xpose.msra.mxu0 0
        %2107 = vmatprep.subr.bf16.mxu0 0
        %2108 = vmatpush1.bf16.xpose.msra.mxu0 0
        %2109 = vmatprep.subr.bf16.mxu0 0
        %2110 = vmatpush1.bf16.xpose.msra.mxu0 0
        %2111 = vmatprep.subr.bf16.mxu0 0
        %2112 = vmatpush1.bf16.xpose.msra.mxu0 0
        %2113 = vmatprep.subr.bf16.mxu0 0
        %2114 = vmatpush1.bf16.xpose.msra.mxu0 0
        %2115 = vmatprep.mubr.bf16.mxu0 0
        %2116 = vmatmul.mubr.bf16.gmra.mrb[0].mxu0 %v2078
        %v2117 = vpop.f32.mrb[0].mxu0
        %v2118 = vadd.f32 %v1694, %v2117
        %v2119 = vpop.f32.mrb[0].mxu0
        %v2120 = vpop.f32.mrb[0].mxu0
        %v2121 = vadd.f32 %v1694, %v2120
        %v2122 = vpop.f32.mrb[0].mxu0
        %2123 = vdwg.mxu0
        %v2124 = vsel %vm1744, %v2118, -inf
        %2125 = vmax.xlane.f32.xlu0 %v2124
        %v2126 = vpop.xlane.xlu0 %2125
        %v2127 = vsel %vm1744, %v2121, -inf
        %2128 = vmax.xlane.f32.xlu0 %v2127
        %v2129 = vpop.xlane.xlu0 %2128
        %v2130 = vsub.f32 %v2118, %v2126
        %v2131 = vsub.f32 %v2121, %v2129
        %v2132 = vmul.f32 %v2130, 1.442695
        %v2133 = vpow.pop %v2132
        %v2134 = vmul.f32 %v2131, 1.442695
        %v2135 = vpow.pop %v2134
        %v2136 = vsel %vm1744, %v2133, 0.0
        %2137 = vadd.xlane.f32.xlu0 %v2136
        %v2138 = vpop.xlane.xlu0 %2137
        %v2139 = vsel %vm1744, %v2135, 0.0
        %2140 = vadd.xlane.f32.xlu0 %v2139
        %v2141 = vpop.xlane.xlu0 %2140
        %v2142 = vrcp.pop %v2138
        %v2143 = vrcp.pop %v2141
        %v2144 = vmul.f32 %v2133, %v2142
        %v2145 = vmul.f32 %v2135, %v2143
        %v2146 = vpack.c.bf16 %v2145, %v2144
        %2147 = vrot.lane.b32.xlu0 %v1689, 32
        %v2148 = vpop.permute.xlu0 %2147
        %v2151 = vsel %vm1744, %v2146, 0
        %2153 = vmatprep.subr.bf16.mxu0 0
        %2154 = vmatpush1.bf16.msra.mxu0 %v2148
        %2155 = vmatprep.subr.bf16.mxu0 0
        %2156 = vmatpush1.bf16.msra.mxu0 0
        %2157 = vmatprep.subr.bf16.mxu0 0
        %2158 = vmatpush1.bf16.msra.mxu0 0
        %2159 = vmatprep.subr.bf16.mxu0 0
        %2160 = vmatpush1.bf16.msra.mxu0 0
        %2161 = vmatprep.subr.bf16.mxu0 0
        %2162 = vmatpush1.bf16.msra.mxu0 0
        %2163 = vmatprep.subr.bf16.mxu0 0
        %2164 = vmatpush1.bf16.msra.mxu0 0
        %2165 = vmatprep.subr.bf16.mxu0 0
        %2166 = vmatpush1.bf16.msra.mxu0 0
        %2167 = vmatprep.subr.bf16.mxu0 0
        %2168 = vmatpush1.bf16.msra.mxu0 0
        %2169 = vmatprep.subr.bf16.mxu0 0
        %2170 = vmatpush1.bf16.msra.mxu0 0
        %2171 = vmatprep.subr.bf16.mxu0 0
        %2172 = vmatpush1.bf16.msra.mxu0 0
        %2173 = vmatprep.subr.bf16.mxu0 0
        %2174 = vmatpush1.bf16.msra.mxu0 0
        %2175 = vmatprep.subr.bf16.mxu0 0
        %2176 = vmatpush1.bf16.msra.mxu0 0
        %2177 = vmatprep.subr.bf16.mxu0 0
        %2178 = vmatpush1.bf16.msra.mxu0 0
        %2179 = vmatprep.subr.bf16.mxu0 0
        %2180 = vmatpush1.bf16.msra.mxu0 0
        %2181 = vmatprep.subr.bf16.mxu0 0
        %2182 = vmatpush1.bf16.msra.mxu0 0
        %2183 = vmatprep.subr.bf16.mxu0 0
        %2184 = vmatpush1.bf16.msra.mxu0 0
        %2185 = vmatprep.mubr.bf16.mxu0 0
        %2186 = vmatmul.mubr.bf16.gmra.mrb[0].mxu0 %v2151
        %v2187 = vpop.f32.mrb[0].mxu0
        %v2188 = vadd.f32 0.0, %v2187
        %v2189 = vpop.f32.mrb[0].mxu0
        %v2190 = vpop.f32.mrb[0].mxu0
        %v2191 = vadd.f32 0.0, %v2190
        %v2192 = vpop.f32.mrb[0].mxu0
        %2193 = vdwg.mxu0
        %v2194 = vpack.c.bf16 %v2191, %v2188
        %2196 = vrot.lane.b32.xlu0 %v2194, 96
        %v2197 = vpop.permute.xlu0 %2196
        %vm2199 = vcmask 1048320
        %2200 = vst.msk [vmem:[#allocation3] sm:$0xff] %vm2199, %v2197
        %v2201 = vld [vmem:[#allocation3] sm:$0xff]
        %v2202 = vld [vmem:[%s1064] sm:$0xf]
        %v2203 = vld [vmem:[%s1064 + $0x4] sm:$0xf]
        %v2204 = vld [vmem:[%s1064 + $0x8] sm:$0xf]
        %v2205 = vld [vmem:[%s1064 + $0xc] sm:$0xf]
        %v2206 = vld [vmem:[%s1064 + $0x10] sm:$0xf]
        %v2207 = vld [vmem:[%s1064 + $0x14] sm:$0xf]
        %v2208 = vld [vmem:[%s1064 + $0x18] sm:$0xf]
        %v2209 = vld [vmem:[%s1064 + $0x1c] sm:$0xf]
        %v2210 = vld [vmem:[%s1064 + $0x20] sm:$0xf]
        %v2211 = vld [vmem:[%s1064 + $0x24] sm:$0xf]
        %v2212 = vld [vmem:[%s1064 + $0x28] sm:$0xf]
        %v2213 = vld [vmem:[%s1064 + $0x2c] sm:$0xf]
        %v2214 = vld [vmem:[%s1064 + $0x30] sm:$0xf]
        %v2215 = vld [vmem:[%s1064 + $0x34] sm:$0xf]
        %v2216 = vld [vmem:[%s1064 + $0x38] sm:$0xf]
        %v2217 = vld [vmem:[%s1064 + $0x3c] sm:$0xf]
        %v2218 = vld [vmem:[%s1072] sm:$0x1]
        %v2220 = vlaneseq
        %v2221 = vshrl.u32 %v2220, 7
        %v2222 = vsub.s32 0, %v2221
        %v2223 = vrot.slane %v2218, %v2222
        %v2241 = vunpack.c.l.b16 %v2202
        %v2242 = vunpack.c.l.b16 %v2203
        %v2243 = vunpack.c.l.b16 %v2204
        %v2244 = vunpack.c.l.b16 %v2205
        %v2245 = vunpack.c.l.b16 %v2206
        %v2246 = vunpack.c.l.b16 %v2207
        %v2247 = vunpack.c.l.b16 %v2208
        %v2248 = vunpack.c.l.b16 %v2209
        %v2249 = vunpack.c.l.b16 %v2210
        %v2250 = vunpack.c.l.b16 %v2211
        %v2251 = vunpack.c.l.b16 %v2212
        %v2252 = vunpack.c.l.b16 %v2213
        %v2253 = vunpack.c.l.b16 %v2214
        %v2254 = vunpack.c.l.b16 %v2215
        %v2255 = vunpack.c.l.b16 %v2216
        %v2256 = vunpack.c.l.b16 %v2217
        %v2257 = vpack.c.b16 %v2242, %v2241
        %v2258 = vpack.c.b16 %v2244, %v2243
        %v2259 = vpack.c.b16 %v2246, %v2245
        %v2260 = vpack.c.b16 %v2248, %v2247
        %v2261 = vpack.c.b16 %v2250, %v2249
        %v2262 = vpack.c.b16 %v2252, %v2251
        %v2263 = vpack.c.b16 %v2254, %v2253
        %v2264 = vpack.c.b16 %v2256, %v2255
        %2273 = vmatprep.subr.bf16.mxu0 0
        %2274 = vmatpush1.bf16.msra.mxu0 %v2257
        %2275 = vmatprep.subr.bf16.mxu0 0
        %2276 = vmatpush1.bf16.msra.mxu0 %v2258
        %2277 = vmatprep.subr.bf16.mxu0 0
        %2278 = vmatpush1.bf16.msra.mxu0 %v2259
        %2279 = vmatprep.subr.bf16.mxu0 0
        %2280 = vmatpush1.bf16.msra.mxu0 %v2260
        %2281 = vmatprep.subr.bf16.mxu0 0
        %2282 = vmatpush1.bf16.msra.mxu0 %v2261
        %2283 = vmatprep.subr.bf16.mxu0 0
        %2284 = vmatpush1.bf16.msra.mxu0 %v2262
        %2285 = vmatprep.subr.bf16.mxu0 0
        %2286 = vmatpush1.bf16.msra.mxu0 %v2263
        %2287 = vmatprep.subr.bf16.mxu0 0
        %2288 = vmatpush1.bf16.msra.mxu0 %v2264
        %2289 = vmatprep.subr.bf16.mxu0 0
        %2290 = vmatpush1.bf16.msra.mxu0 0
        %2291 = vmatprep.subr.bf16.mxu0 0
        %2292 = vmatpush1.bf16.msra.mxu0 0
        %2293 = vmatprep.subr.bf16.mxu0 0
        %2294 = vmatpush1.bf16.msra.mxu0 0
        %2295 = vmatprep.subr.bf16.mxu0 0
        %2296 = vmatpush1.bf16.msra.mxu0 0
        %2297 = vmatprep.subr.bf16.mxu0 0
        %2298 = vmatpush1.bf16.msra.mxu0 0
        %2299 = vmatprep.subr.bf16.mxu0 0
        %2300 = vmatpush1.bf16.msra.mxu0 0
        %2301 = vmatprep.subr.bf16.mxu0 0
        %2302 = vmatpush1.bf16.msra.mxu0 0
        %2303 = vmatprep.subr.bf16.mxu0 0
        %2304 = vmatpush1.bf16.msra.mxu0 0
        %2305 = vmatprep.mubr.bf16.mxu0 0
        %2306 = vmatmul.mubr.bf16.gmra.mrb[0].mxu0 %v2201
        %v2307 = vpop.f32.mrb[0].mxu0
        %v2308 = vadd.f32 %v2223, %v2307
        %v2309 = vpop.f32.mrb[0].mxu0
        %v2310 = vpop.f32.mrb[0].mxu0
        %v2311 = vadd.f32 %v2223, %v2310
        %v2312 = vpop.f32.mrb[0].mxu0
        %2313 = vdwg.mxu0
        %v2314 = vadd.f32 %v1288, %v2308
        %v2315 = vadd.f32 %v1289, %v2311
        %v2316 = vld [vmem:[%s1131] sm:$0x1]
        %v2317 = vld [vmem:[%s1139] sm:$0x1]
        %2318 = vadd.xlane.f32.xlu0 %v2314
        %v2319 = vpop.xlane.xlu0 %2318
        %2320 = vadd.xlane.f32.xlu0 %v2315
        %v2321 = vpop.xlane.xlu0 %2320
        %v2322 = vmul.f32 %v2319, %v1299
        %v2323 = vmul.f32 %v2321, %v1299
        %v2324 = vsub.f32 %v2314, %v2322
        %v2325 = vsub.f32 %v2315, %v2323
        %v2326 = vmul.f32 %v2324, %v2324
        %v2327 = vmul.f32 %v2325, %v2325
        %2328 = vadd.xlane.f32.xlu0 %v2326
        %v2329 = vpop.xlane.xlu0 %2328
        %2330 = vadd.xlane.f32.xlu0 %v2327
        %v2331 = vpop.xlane.xlu0 %2330
        %v2332 = vmul.f32 %v2329, 0.007874016
        %v2333 = vmul.f32 %v2331, 0.007874016
        %v2334 = vrsqrt.pop %v2332
        %v2335 = vmul.f32 %v2332, %v2334
        %vm2336 = vcmp.eq.f32.partialorder %v2332, inf
        %v2337 = vsel %vm2336, %v2332, %v2335
        %vm2338 = vcmp.eq.f32.partialorder %v2332, 0.0
        %v2339 = vand.u32 %v2332, 2147483648
        %v2340 = vsel %vm2338, %v2339, %v2337
        %v2341 = vrsqrt.pop %v2333
        %v2342 = vmul.f32 %v2333, %v2341
        %vm2343 = vcmp.eq.f32.partialorder %v2333, inf
        %v2344 = vsel %vm2343, %v2333, %v2342
        %vm2345 = vcmp.eq.f32.partialorder %v2333, 0.0
        %v2346 = vand.u32 %v2333, 2147483648
        %v2347 = vsel %vm2345, %v2346, %v2344
        %v2348 = vadd.f32 %v2340, 1e-06
        %v2349 = vadd.f32 %v2347, 1e-06
        %v2350 = vrcp.pop %v2348
        %v2351 = vrcp.pop %v2349
        %v2352 = vmul.f32 %v2324, %v2350
        %v2353 = vmul.f32 %v2325, %v2351
        %v2355 = vlaneseq
        %v2356 = vshrl.u32 %v2355, 7
        %v2357 = vsub.s32 0, %v2356
        %v2358 = vrot.slane %v2316, %v2357
        %v2360 = vmul.f32 %v2352, %v2358
        %v2361 = vmul.f32 %v2353, %v2358
        %v2363 = vlaneseq
        %v2364 = vshrl.u32 %v2363, 7
        %v2365 = vsub.s32 0, %v2364
        %v2366 = vrot.slane %v2317, %v2365
        %v2368 = vadd.f32 %v2360, %v2366
        %v2369 = vadd.f32 %v2361, %v2366
        %v2370 = vpack.c.bf16 %v2369, %v2368
        %v2371 = vld [vmem:[%s1081] sm:$0xff]
        %v2372 = vld [vmem:[%s1081 + $0x8] sm:$0xff]
        %v2373 = vld [vmem:[%s1081 + $0x10] sm:$0xff]
        %v2374 = vld [vmem:[%s1081 + $0x18] sm:$0xff]
        %v2375 = vld [vmem:[%s1081 + $0x20] sm:$0xff]
        %v2376 = vld [vmem:[%s1081 + $0x28] sm:$0xff]
        %v2377 = vld [vmem:[%s1081 + $0x30] sm:$0xff]
        %v2378 = vld [vmem:[%s1081 + $0x38] sm:$0xff]
        %v2379 = vld [vmem:[%s1081 + $0x40] sm:$0xff]
        %v2380 = vld [vmem:[%s1081 + $0x48] sm:$0xff]
        %v2381 = vld [vmem:[%s1081 + $0x50] sm:$0xff]
        %v2382 = vld [vmem:[%s1081 + $0x58] sm:$0xff]
        %v2383 = vld [vmem:[%s1081 + $0x60] sm:$0xff]
        %v2384 = vld [vmem:[%s1081 + $0x68] sm:$0xff]
        %v2385 = vld [vmem:[%s1081 + $0x70] sm:$0xff]
        %v2386 = vld [vmem:[%s1081 + $0x78] sm:$0xff]
        %v2387 = vld [vmem:[%s1090] sm:$0x3]
        %v2389 = vlaneseq
        %v2390 = vshrl.u32 %v2389, 7
        %v2391 = vsub.s32 0, %v2390
        %v2392 = vrot.slane %v2387, %v2391
        %v2393 = vlaneseq
        %v2394 = vshrl.u32 %v2393, 7
        %v2395 = vsub.s32 1, %v2394
        %v2396 = vrot.slane %v2387, %v2395
        %v2415 = vunpack.c.l.b16 %v2371
        %v2416 = vunpack.c.h.b16 %v2371
        %v2417 = vunpack.c.l.b16 %v2372
        %v2418 = vunpack.c.h.b16 %v2372
        %v2419 = vunpack.c.l.b16 %v2373
        %v2420 = vunpack.c.h.b16 %v2373
        %v2421 = vunpack.c.l.b16 %v2374
        %v2422 = vunpack.c.h.b16 %v2374
        %v2423 = vunpack.c.l.b16 %v2375
        %v2424 = vunpack.c.h.b16 %v2375
        %v2425 = vunpack.c.l.b16 %v2376
        %v2426 = vunpack.c.h.b16 %v2376
        %v2427 = vunpack.c.l.b16 %v2377
        %v2428 = vunpack.c.h.b16 %v2377
        %v2429 = vunpack.c.l.b16 %v2378
        %v2430 = vunpack.c.h.b16 %v2378
        %v2431 = vunpack.c.l.b16 %v2379
        %v2432 = vunpack.c.h.b16 %v2379
        %v2433 = vunpack.c.l.b16 %v2380
        %v2434 = vunpack.c.h.b16 %v2380
        %v2435 = vunpack.c.l.b16 %v2381
        %v2436 = vunpack.c.h.b16 %v2381
        %v2437 = vunpack.c.l.b16 %v2382
        %v2438 = vunpack.c.h.b16 %v2382
        %v2439 = vunpack.c.l.b16 %v2383
        %v2440 = vunpack.c.h.b16 %v2383
        %v2441 = vunpack.c.l.b16 %v2384
        %v2442 = vunpack.c.h.b16 %v2384
        %v2443 = vunpack.c.l.b16 %v2385
        %v2444 = vunpack.c.h.b16 %v2385
        %v2445 = vunpack.c.l.b16 %v2386
        %v2446 = vunpack.c.h.b16 %v2386
        %v2447 = vpack.c.b16 %v2417, %v2415
        %v2448 = vpack.c.b16 %v2418, %v2416
        %v2449 = vpack.c.b16 %v2421, %v2419
        %v2450 = vpack.c.b16 %v2422, %v2420
        %v2451 = vpack.c.b16 %v2425, %v2423
        %v2452 = vpack.c.b16 %v2426, %v2424
        %v2453 = vpack.c.b16 %v2429, %v2427
        %v2454 = vpack.c.b16 %v2430, %v2428
        %v2455 = vpack.c.b16 %v2433, %v2431
        %v2456 = vpack.c.b16 %v2434, %v2432
        %v2457 = vpack.c.b16 %v2437, %v2435
        %v2458 = vpack.c.b16 %v2438, %v2436
        %v2459 = vpack.c.b16 %v2441, %v2439
        %v2460 = vpack.c.b16 %v2442, %v2440
        %v2461 = vpack.c.b16 %v2445, %v2443
        %v2462 = vpack.c.b16 %v2446, %v2444
        %2479 = vmatprep.subr.bf16.mxu0 %v2448
        %2480 = vmatpush1.bf16.msra.mxu0 %v2447
        %2481 = vmatprep.subr.bf16.mxu0 %v2450
        %2482 = vmatpush1.bf16.msra.mxu0 %v2449
        %2483 = vmatprep.subr.bf16.mxu0 %v2452
        %2484 = vmatpush1.bf16.msra.mxu0 %v2451
        %2485 = vmatprep.subr.bf16.mxu0 %v2454
        %2486 = vmatpush1.bf16.msra.mxu0 %v2453
        %2487 = vmatprep.subr.bf16.mxu0 %v2456
        %2488 = vmatpush1.bf16.msra.mxu0 %v2455
        %2489 = vmatprep.subr.bf16.mxu0 %v2458
        %2490 = vmatpush1.bf16.msra.mxu0 %v2457
        %2491 = vmatprep.subr.bf16.mxu0 %v2460
        %2492 = vmatpush1.bf16.msra.mxu0 %v2459
        %2493 = vmatprep.subr.bf16.mxu0 %v2462
        %2494 = vmatpush1.bf16.msra.mxu0 %v2461
        %2495 = vmatprep.subr.bf16.mxu0 0
        %2496 = vmatpush1.bf16.msra.mxu0 0
        %2497 = vmatprep.subr.bf16.mxu0 0
        %2498 = vmatpush1.bf16.msra.mxu0 0
        %2499 = vmatprep.subr.bf16.mxu0 0
        %2500 = vmatpush1.bf16.msra.mxu0 0
        %2501 = vmatprep.subr.bf16.mxu0 0
        %2502 = vmatpush1.bf16.msra.mxu0 0
        %2503 = vmatprep.subr.bf16.mxu0 0
        %2504 = vmatpush1.bf16.msra.mxu0 0
        %2505 = vmatprep.subr.bf16.mxu0 0
        %2506 = vmatpush1.bf16.msra.mxu0 0
        %2507 = vmatprep.subr.bf16.mxu0 0
        %2508 = vmatpush1.bf16.msra.mxu0 0
        %2509 = vmatprep.subr.bf16.mxu0 0
        %2510 = vmatpush1.bf16.msra.mxu0 0
        %2511 = vmatprep.mubr.bf16.mxu0 0
        %2512 = vmatmul.mubr.bf16.gmra.mrb[0].mxu0 %v2370
        %v2513 = vpop.f32.mrb[0].mxu0
        %v2514 = vadd.f32 %v2392, %v2513
        %v2515 = vpop.f32.mrb[0].mxu0
        %v2516 = vadd.f32 %v2396, %v2515
        %v2517 = vpop.f32.mrb[0].mxu0
        %v2518 = vadd.f32 %v2392, %v2517
        %v2519 = vpop.f32.mrb[0].mxu0
        %v2520 = vadd.f32 %v2396, %v2519
        %2521 = vdwg.mxu0
        %v2522 = vmax.f32 %v2514, 0.0
        %v2523 = vmax.f32 %v2516, 0.0
        %v2524 = vmax.f32 %v2518, 0.0
        %v2525 = vmax.f32 %v2520, 0.0
        %v2526 = vpack.c.bf16 %v2524, %v2522
        %v2527 = vpack.c.bf16 %v2525, %v2523
        %v2528 = vld [vmem:[%s1099] sm:$0xf]
        %v2529 = vld [vmem:[%s1099 + $0x4] sm:$0xf]
        %v2530 = vld [vmem:[%s1099 + $0x8] sm:$0xf]
        %v2531 = vld [vmem:[%s1099 + $0xc] sm:$0xf]
        %v2532 = vld [vmem:[%s1099 + $0x10] sm:$0xf]
        %v2533 = vld [vmem:[%s1099 + $0x14] sm:$0xf]
        %v2534 = vld [vmem:[%s1099 + $0x18] sm:$0xf]
        %v2535 = vld [vmem:[%s1099 + $0x1c] sm:$0xf]
        %v2536 = vld [vmem:[%s1099 + $0x20] sm:$0xf]
        %v2537 = vld [vmem:[%s1099 + $0x24] sm:$0xf]
        %v2538 = vld [vmem:[%s1099 + $0x28] sm:$0xf]
        %v2539 = vld [vmem:[%s1099 + $0x2c] sm:$0xf]
        %v2540 = vld [vmem:[%s1099 + $0x30] sm:$0xf]
        %v2541 = vld [vmem:[%s1099 + $0x34] sm:$0xf]
        %v2542 = vld [vmem:[%s1099 + $0x38] sm:$0xf]
        %v2543 = vld [vmem:[%s1099 + $0x3c] sm:$0xf]
        %v2544 = vld [vmem:[%s1099 + $0x40] sm:$0xf]
        %v2545 = vld [vmem:[%s1099 + $0x44] sm:$0xf]
        %v2546 = vld [vmem:[%s1099 + $0x48] sm:$0xf]
        %v2547 = vld [vmem:[%s1099 + $0x4c] sm:$0xf]
        %v2548 = vld [vmem:[%s1099 + $0x50] sm:$0xf]
        %v2549 = vld [vmem:[%s1099 + $0x54] sm:$0xf]
        %v2550 = vld [vmem:[%s1099 + $0x58] sm:$0xf]
        %v2551 = vld [vmem:[%s1099 + $0x5c] sm:$0xf]
        %v2552 = vld [vmem:[%s1099 + $0x60] sm:$0xf]
        %v2553 = vld [vmem:[%s1099 + $0x64] sm:$0xf]
        %v2554 = vld [vmem:[%s1099 + $0x68] sm:$0xf]
        %v2555 = vld [vmem:[%s1099 + $0x6c] sm:$0xf]
        %v2556 = vld [vmem:[%s1099 + $0x70] sm:$0xf]
        %v2557 = vld [vmem:[%s1099 + $0x74] sm:$0xf]
        %v2558 = vld [vmem:[%s1099 + $0x78] sm:$0xf]
        %v2559 = vld [vmem:[%s1099 + $0x7c] sm:$0xf]
        %v2560 = vld [vmem:[%s1107] sm:$0x1]
        %v2562 = vlaneseq
        %v2563 = vshrl.u32 %v2562, 7
        %v2564 = vsub.s32 0, %v2563
        %v2565 = vrot.slane %v2560, %v2564
        %v2599 = vunpack.c.l.b16 %v2528
        %v2600 = vunpack.c.l.b16 %v2529
        %v2601 = vunpack.c.l.b16 %v2530
        %v2602 = vunpack.c.l.b16 %v2531
        %v2603 = vunpack.c.l.b16 %v2532
        %v2604 = vunpack.c.l.b16 %v2533
        %v2605 = vunpack.c.l.b16 %v2534
        %v2606 = vunpack.c.l.b16 %v2535
        %v2607 = vunpack.c.l.b16 %v2536
        %v2608 = vunpack.c.l.b16 %v2537
        %v2609 = vunpack.c.l.b16 %v2538
        %v2610 = vunpack.c.l.b16 %v2539
        %v2611 = vunpack.c.l.b16 %v2540
        %v2612 = vunpack.c.l.b16 %v2541
        %v2613 = vunpack.c.l.b16 %v2542
        %v2614 = vunpack.c.l.b16 %v2543
        %v2615 = vunpack.c.l.b16 %v2544
        %v2616 = vunpack.c.l.b16 %v2545
        %v2617 = vunpack.c.l.b16 %v2546
        %v2618 = vunpack.c.l.b16 %v2547
        %v2619 = vunpack.c.l.b16 %v2548
        %v2620 = vunpack.c.l.b16 %v2549
        %v2621 = vunpack.c.l.b16 %v2550
        %v2622 = vunpack.c.l.b16 %v2551
        %v2623 = vunpack.c.l.b16 %v2552
        %v2624 = vunpack.c.l.b16 %v2553
        %v2625 = vunpack.c.l.b16 %v2554
        %v2626 = vunpack.c.l.b16 %v2555
        %v2627 = vunpack.c.l.b16 %v2556
        %v2628 = vunpack.c.l.b16 %v2557
        %v2629 = vunpack.c.l.b16 %v2558
        %v2630 = vunpack.c.l.b16 %v2559
        %v2631 = vpack.c.b16 %v2600, %v2599
        %v2632 = vpack.c.b16 %v2602, %v2601
        %v2633 = vpack.c.b16 %v2604, %v2603
        %v2634 = vpack.c.b16 %v2606, %v2605
        %v2635 = vpack.c.b16 %v2608, %v2607
        %v2636 = vpack.c.b16 %v2610, %v2609
        %v2637 = vpack.c.b16 %v2612, %v2611
        %v2638 = vpack.c.b16 %v2614, %v2613
        %v2639 = vpack.c.b16 %v2616, %v2615
        %v2640 = vpack.c.b16 %v2618, %v2617
        %v2641 = vpack.c.b16 %v2620, %v2619
        %v2642 = vpack.c.b16 %v2622, %v2621
        %v2643 = vpack.c.b16 %v2624, %v2623
        %v2644 = vpack.c.b16 %v2626, %v2625
        %v2645 = vpack.c.b16 %v2628, %v2627
        %v2646 = vpack.c.b16 %v2630, %v2629
        %2663 = vmatprep.subr.bf16.mxu0 0
        %2664 = vmatpush1.bf16.msra.mxu0 %v2631
        %2665 = vmatprep.subr.bf16.mxu0 0
        %2666 = vmatpush1.bf16.msra.mxu0 %v2632
        %2667 = vmatprep.subr.bf16.mxu0 0
        %2668 = vmatpush1.bf16.msra.mxu0 %v2633
        %2669 = vmatprep.subr.bf16.mxu0 0
        %2670 = vmatpush1.bf16.msra.mxu0 %v2634
        %2671 = vmatprep.subr.bf16.mxu0 0
        %2672 = vmatpush1.bf16.msra.mxu0 %v2635
        %2673 = vmatprep.subr.bf16.mxu0 0
        %2674 = vmatpush1.bf16.msra.mxu0 %v2636
        %2675 = vmatprep.subr.bf16.mxu0 0
        %2676 = vmatpush1.bf16.msra.mxu0 %v2637
        %2677 = vmatprep.subr.bf16.mxu0 0
        %2678 = vmatpush1.bf16.msra.mxu0 %v2638
        %2679 = vmatprep.subr.bf16.mxu0 0
        %2680 = vmatpush1.bf16.msra.mxu0 %v2639
        %2681 = vmatprep.subr.bf16.mxu0 0
        %2682 = vmatpush1.bf16.msra.mxu0 %v2640
        %2683 = vmatprep.subr.bf16.mxu0 0
        %2684 = vmatpush1.bf16.msra.mxu0 %v2641
        %2685 = vmatprep.subr.bf16.mxu0 0
        %2686 = vmatpush1.bf16.msra.mxu0 %v2642
        %2687 = vmatprep.subr.bf16.mxu0 0
        %2688 = vmatpush1.bf16.msra.mxu0 %v2643
        %2689 = vmatprep.subr.bf16.mxu0 0
        %2690 = vmatpush1.bf16.msra.mxu0 %v2644
        %2691 = vmatprep.subr.bf16.mxu0 0
        %2692 = vmatpush1.bf16.msra.mxu0 %v2645
        %2693 = vmatprep.subr.bf16.mxu0 0
        %2694 = vmatpush1.bf16.msra.mxu0 %v2646
        %2695 = vmatprep.mubr.bf16.mxu0 %v2527
        %2696 = vmatmul.mubr.bf16.gmra.mrb[0].mxu0 %v2526
        %v2697 = vpop.f32.mrb[0].mxu0
        %v2698 = vadd.f32 %v2565, %v2697
        %v2699 = vpop.f32.mrb[0].mxu0
        %v2700 = vpop.f32.mrb[0].mxu0
        %v2701 = vadd.f32 %v2565, %v2700
        %v2702 = vpop.f32.mrb[0].mxu0
        %2703 = vdwg.mxu0
        %v2704 = vadd.f32 %v2314, %v2698
        %v2705 = vadd.f32 %v2315, %v2701
        %2706 = vst [vmem:[#allocation2] sm:$0xff] %v2704
        %2707 = vst [vmem:[#allocation2 + $0x8] sm:$0xff] %v2705
        %p2708 = scmp.eq.s32.totalorder %s70, 1
        // Predicated region
        $region185: #{tpu_custom_call.1} parent=99 // pred_check
          %p2709 = pneg %p2708
        $region186: #{tpu_custom_call.1} parent=99 // pred_check_branch
          %2711 = sbr.rel (%p2709) target = $region188
        $region187: #{tpu_custom_call.1} parent=99 // pred_region
          %v2712 = vld [vmem:[#allocation33] sm:$0x1]
          %v2713 = vld [vmem:[#allocation34] sm:$0x1]
          %2714 = vadd.xlane.f32.xlu0 %v2704
          %v2715 = vpop.xlane.xlu0 %2714
          %2716 = vadd.xlane.f32.xlu0 %v2705
          %v2717 = vpop.xlane.xlu0 %2716
          %v2718 = vmul.f32 %v2715, %v1299
          %v2719 = vmul.f32 %v2717, %v1299
          %v2720 = vsub.f32 %v2704, %v2718
          %v2721 = vsub.f32 %v2705, %v2719
          %v2722 = vmul.f32 %v2720, %v2720
          %v2723 = vmul.f32 %v2721, %v2721
          %2724 = vadd.xlane.f32.xlu0 %v2722
          %v2725 = vpop.xlane.xlu0 %2724
          %2726 = vadd.xlane.f32.xlu0 %v2723
          %v2727 = vpop.xlane.xlu0 %2726
          %v2728 = vmul.f32 %v2725, 0.007874016
          %v2729 = vmul.f32 %v2727, 0.007874016
          %v2730 = vrsqrt.pop %v2728
          %v2731 = vmul.f32 %v2728, %v2730
          %vm2732 = vcmp.eq.f32.partialorder %v2728, inf
          %v2733 = vsel %vm2732, %v2728, %v2731
          %vm2734 = vcmp.eq.f32.partialorder %v2728, 0.0
          %v2735 = vand.u32 %v2728, 2147483648
          %v2736 = vsel %vm2734, %v2735, %v2733
          %v2737 = vrsqrt.pop %v2729
          %v2738 = vmul.f32 %v2729, %v2737
          %vm2739 = vcmp.eq.f32.partialorder %v2729, inf
          %v2740 = vsel %vm2739, %v2729, %v2738
          %vm2741 = vcmp.eq.f32.partialorder %v2729, 0.0
          %v2742 = vand.u32 %v2729, 2147483648
          %v2743 = vsel %vm2741, %v2742, %v2740
          %v2744 = vadd.f32 %v2736, 1e-06
          %v2745 = vadd.f32 %v2743, 1e-06
          %v2746 = vrcp.pop %v2744
          %v2747 = vrcp.pop %v2745
          %v2748 = vmul.f32 %v2720, %v2746
          %v2749 = vmul.f32 %v2721, %v2747
          %v2751 = vlaneseq
          %v2752 = vshrl.u32 %v2751, 7
          %v2753 = vsub.s32 0, %v2752
          %v2754 = vrot.slane %v2712, %v2753
          %v2756 = vmul.f32 %v2748, %v2754
          %v2757 = vmul.f32 %v2749, %v2754
          %v2759 = vlaneseq
          %v2760 = vshrl.u32 %v2759, 7
          %v2761 = vsub.s32 0, %v2760
          %v2762 = vrot.slane %v2713, %v2761
          %v2764 = vadd.f32 %v2756, %v2762
          %v2765 = vadd.f32 %v2757, %v2762
          %2766 = vst [vmem:[%s1278] sm:$0xff] %v2764
          %2767 = vst [vmem:[%s1278 + $0x8] sm:$0xff] %v2765
        $region188: #{tpu_custom_call.1} parent=99 // pred_fallthru
          _
        %s2768 = sand.u32 %s595, 1
        %s2769 = scalar_lea.sflag [#allocation6], %s2768
        %s2770 = sand.u32 %s595, 1
        %s2771 = smul.addr %s2770, 16
        %s2772 = scalar_lea.vmem [#allocation36], %s2771
        // Predicated region
        $region189: #{tpu_custom_call.1} parent=99 // pred_check
          %p2773 = pneg %p605
        $region190: #{tpu_custom_call.1} parent=99 // pred_check_branch
          %2775 = sbr.rel (%p2773) target = $region192
        $region191: #{tpu_custom_call.1} parent=99 // pred_region
          %s2777 = ssub.s32 256, 256
          %2778 = vsyncadd %s2769, %s2777
          %s2779 = smul.addr %s69, 2
          %s2780 = smul.addr %s2779, 128
          %s2781 = scalar_lea.hbm %s20, %s2780
          %s2782 = sshll.u32 %s2772, 4
          %s2783 = int_to_ptr.vmem [resolvable:$true] %s2782
          %2788 = dma.vmem_to_hbm [thread:$0]  %s2783, 256, %s2781, %s2769, 128, 128, 8
        $region192: #{tpu_custom_call.1} parent=99 // pred_fallthru
          _
      $region100: #{tpu_custom_call.1} parent=5 // pred_fallthru
        _
      %p2789 = scmp.le.s32.totalorder 2, %s60
      // Predicated region
      $region193: #{tpu_custom_call.1} parent=5 // pred_check
        %p2790 = pneg %p2789
      $region194: #{tpu_custom_call.1} parent=5 // pred_check_branch
        %2792 = sbr.rel (%p2790) target = $region196
      $region195: #{tpu_custom_call.1} parent=5 // pred_region
        %s2793 = ssub.s32 %s60, 2
        // Predicated region
        $region197: #{tpu_custom_call.1} parent=195 // pred_check
          %p2794 = pneg %p611
        $region198: #{tpu_custom_call.1} parent=195 // pred_check_branch
          %2796 = sbr.rel (%p2794) target = $region200
        $region199: #{tpu_custom_call.1} parent=195 // pred_region
          %s2797 = sand.u32 %s596, 1
          %s2798 = scalar_lea.sflag [#allocation6], %s2797
          %s2799 = sand.u32 %s596, 1
          %s2800 = smul.addr %s2799, 16
          %s2801 = scalar_lea.vmem [#allocation36], %s2800
          %2802 = dma.done %s2798, 256
        $region200: #{tpu_custom_call.1} parent=195 // pred_fallthru
          _
      $region196: #{tpu_custom_call.1} parent=5 // pred_fallthru
        _
    $region6: #{tpu_custom_call.1} parent=1 // loop_footer
      %s64 = sadd.s32 1, %s60
    $region7: #{tpu_custom_call.1} parent=1 // loop_footer_branch
      %59 = sbr.rel target = $region3
    $region8: #{tpu_custom_call.1} parent=1 // loop_exit
      _
    %2803 = vsyncpa [#allocation5], 1
    %s2804 = scalar_lea.sflag [#allocation5], 1
    %2805 = vsyncpa %s2804, 1
    %2806 = vsyncpa [#allocation8], 1
    %s2807 = scalar_lea.sflag [#allocation8], 1
    %2808 = vsyncpa %s2807, 1
    %2809 = vsyncpa [#allocation11], 1
    %s2810 = scalar_lea.sflag [#allocation11], 1
    %2811 = vsyncpa %s2810, 1
    %2812 = vsyncpa [#allocation14], 1
    %s2813 = scalar_lea.sflag [#allocation14], 1
    %2814 = vsyncpa %s2813, 1
    %2815 = vsyncpa [#allocation17], 1
    %s2816 = scalar_lea.sflag [#allocation17], 1
    %2817 = vsyncpa %s2816, 1
    %2818 = vsyncpa [#allocation20], 1
    %s2819 = scalar_lea.sflag [#allocation20], 1
    %2820 = vsyncpa %s2819, 1
    %2821 = vsyncpa [#allocation23], 1
    %s2822 = scalar_lea.sflag [#allocation23], 1
    %2823 = vsyncpa %s2822, 1
    %2824 = vsyncpa [#allocation26], 1
    %s2825 = scalar_lea.sflag [#allocation26], 1
    %2826 = vsyncpa %s2825, 1
    %2827 = vsyncpa [#allocation29], 1
    %s2828 = scalar_lea.sflag [#allocation29], 1
    %2829 = vsyncpa %s2828, 1
    %2830 = vsyncpa [#allocation32], 1
    %s2831 = scalar_lea.sflag [#allocation32], 1
    %2832 = vsyncpa %s2831, 1
    %2833 = vsyncpa [#allocation35], 1
    %2834 = vsyncpa [#allocation6], 1
    %s2835 = scalar_lea.sflag [#allocation6], 1
    %2836 = vsyncpa %s2835, 1

</llo_original>
